<compile_context>
chip_gen: v7x
topology: tpu7x:2x2x1
jax: 0.10.0
libtpu: 0.0.40
codegen_flags: <defaults>
</compile_context>

<pallas_src>
import functools

import jax
import jax.numpy as jnp
from jax.experimental import pallas as pl
from jax.experimental.pallas import tpu as pltpu

IMAGENET_MEAN = (0.485, 0.456, 0.406)
IMAGENET_STD = (0.229, 0.224, 0.225)

FEAT_DIM = 1280    # efficientnet_v2_s.classifier[1].in_features
HIDDEN = 500       # Linear(1280, 500)
HIDDEN_PAD = 512   # lane-dense padding of the 500-wide hidden layer
STEM_K = 27        # 3x3 conv over 3 channels as a matmul (im2col K)


def _vmem_spec():
    return pl.BlockSpec(memory_space=pltpu.MemorySpace.VMEM)


# ----------------------------- Pallas kernels ------------------------------

def _stem_pool_kernel(patches_ref, w_ref, b_ref, o_ref, acc_ref, *, inv_p):
    """conv-as-matmul + SiLU + global average pool, accumulated over the P axis.

    patches: (2B, tile_P, K) bf16   w: (K, tile_F) bf16   b: (1, tile_F) f32
    o / acc: (2B, tile_F) f32
    grid = (feature tiles [parallel], position tiles [arbitrary / reduction])
    """
    p = pl.program_id(1)

    @pl.when(p == 0)
    def _():
        acc_ref[...] = jnp.zeros_like(acc_ref)

    x = patches_ref[...]                               # (2B, tP, K) bf16
    b2, tp, k = x.shape
    y = jnp.dot(x.reshape(b2 * tp, k), w_ref[...],
                preferred_element_type=jnp.float32) + b_ref[...]
    y = y * jax.nn.sigmoid(y)                          # SiLU in f32
    acc_ref[...] += jnp.sum(y.reshape(b2, tp, -1), axis=1)

    @pl.when(p == pl.num_programs(1) - 1)
    def _():
        o_ref[...] = acc_ref[...] * inv_p              # global average pool


def _siamese_head_kernel(f_ref, w1_ref, b1_ref, w2_ref, b2_ref,
                         wc_ref, bc_ref, o_ref, *, batch):
    """Both branches batched through one Linear(1280,512p)+ReLU+Linear(512p,emb_p),
    elementwise product, then Linear(emb,1)+Sigmoid as VPU multiply + reduce."""
    f = f_ref[...].astype(jnp.bfloat16)                                  # (2B, 1280)
    h = jnp.dot(f, w1_ref[...], preferred_element_type=jnp.float32) + b1_ref[...]
    h = jnp.maximum(h, 0.0)                                              # ReLU
    e = jnp.dot(h.astype(jnp.bfloat16), w2_ref[...],
                preferred_element_type=jnp.float32) + b2_ref[...]        # (2B, emb_p)
    combined = e[:batch] * e[batch:]                                     # out1 * out2
    logit = jnp.sum(combined * wc_ref[...], axis=-1, keepdims=True) + bc_ref[...]
    o_ref[...] = jax.nn.sigmoid(logit)


# ------------------------------ glue / wrappers -----------------------------

def _choose_tile(total, cap):
    t = min(total, cap)
    while total % t != 0 or t % 8 != 0:
        t -= 1
        if t <= 0:
            return total
    return t


def _im2col_from_padded(xp, kernel=3, stride=2):
    """3x3 stride-2 patches from an already-padded NHWC image -> (B, P, k*k*C)."""
    B, Hp, Wp, C = xp.shape
    Ho = (Hp - kernel) // stride + 1
    Wo = (Wp - kernel) // stride + 1
    cols = []
    for dh in range(kernel):
        for dw in range(kernel):
            cols.append(xp[:, dh:dh + stride * Ho:stride,
                           dw:dw + stride * Wo:stride, :])
    patches = jnp.stack(cols, axis=3)                  # (B, Ho, Wo, k*k, C)
    return patches.reshape(B, Ho * Wo, kernel * kernel * C), Ho * Wo


def _fold_norm_into_stem(stem_w, stem_b):
    # conv(normalize(x)) == conv'(x):  w' = w*inv_std,  b' = b - (mean*inv_std)@w
    inv_std = 1.0 / jnp.asarray(IMAGENET_STD, jnp.float32)
    mean = jnp.asarray(IMAGENET_MEAN, jnp.float32)
    inv_std_k = jnp.tile(inv_std, STEM_K // 3)         # tap-major, channel-minor
    mean_k = jnp.tile(mean, STEM_K // 3)
    w_f = stem_w * inv_std_k[:, None]
    b_f = stem_b - (mean_k * inv_std_k) @ stem_w
    return w_f, b_f


def backbone_features(params, x_nhwc):
    B, H, W, C = x_nhwc.shape
    # Pad with the per-channel mean: after the folded normalization this is
    # exactly equivalent to normalize-then-zero-pad.
    mean = jnp.asarray(IMAGENET_MEAN, jnp.float32).reshape(1, 1, 1, 3)
    xp = jnp.broadcast_to(mean, (B, H + 2, W + 2, C)).astype(jnp.float32)
    xp = xp.at[:, 1:-1, 1:-1, :].set(x_nhwc)

    # TODO(synk): im2col still materializes the 9-tap patch tensor once in HBM;
    # fully fusing the 9 strided taps into the kernel (manual DMA) is not done.
    patches, P = _im2col_from_padded(xp)               # (B, P, 27)
    patches = patches.astype(jnp.bfloat16)

    w_f, b_f = _fold_norm_into_stem(params["stem_w"], params["stem_b"])
    w_f = w_f.astype(jnp.bfloat16)
    b_f = b_f.astype(jnp.float32)

    tile_p = _choose_tile(P, 512)      # conservative: fits v7x 64 MiB VMEM too
    tile_f = 256                       # 1280 = 5 * 256 -> parallel axis for 2-TC chips
    grid = (FEAT_DIM // tile_f, P // tile_p)

    kern = functools.partial(_stem_pool_kernel, inv_p=1.0 / P)
    return pl.pallas_call(
        kern,
        out_shape=jax.ShapeDtypeStruct((B, FEAT_DIM), jnp.float32),
        grid_spec=pltpu.PrefetchScalarGridSpec(
            num_scalar_prefetch=0,
            grid=grid,
            in_specs=[
                pl.BlockSpec((B, tile_p, STEM_K), lambda f, p: (0, p, 0)),
                pl.BlockSpec((STEM_K, tile_f), lambda f, p: (0, f)),
                pl.BlockSpec((1, tile_f), lambda f, p: (0, f)),
            ],
            out_specs=pl.BlockSpec((B, tile_f), lambda f, p: (0, f)),
            scratch_shapes=[pltpu.VMEM((B, tile_f), jnp.float32)],
        ),
        compiler_params=pltpu.CompilerParams(
            dimension_semantics=("parallel", "arbitrary")),
    )(patches, w_f, b_f)


def siamese_head(params, feats, batch):
    emb = params["w2"].shape[1]
    emb_pad = max(128, ((emb + 127) // 128) * 128)

    # Lane-dense, zero-padded weights (padding is exact: padded hidden units are
    # ReLU(0)=0 and padded embedding dims are 0 with zero classifier weight).
    w1p = jnp.zeros((FEAT_DIM, HIDDEN_PAD), jnp.bfloat16)
    w1p = w1p.at[:, :HIDDEN].set(params["w1"].astype(jnp.bfloat16))
    b1p = jnp.zeros((1, HIDDEN_PAD), jnp.float32).at[:, :HIDDEN].set(params["b1"])
    w2p = jnp.zeros((HIDDEN_PAD, emb_pad), jnp.bfloat16)
    w2p = w2p.at[:HIDDEN, :emb].set(params["w2"].astype(jnp.bfloat16))
    b2p = jnp.zeros((1, emb_pad), jnp.float32).at[:, :emb].set(params["b2"])
    wcp = jnp.zeros((1, emb_pad), jnp.float32).at[:, :emb].set(
        params["wc"].reshape(1, emb))
    bcp = params["bc"]

    kern = functools.partial(_siamese_head_kernel, batch=batch)
    return pl.pallas_call(
        kern,
        out_shape=jax.ShapeDtypeStruct((batch, 1), jnp.float32),
        in_specs=[_vmem_spec()] * 7,
        out_specs=_vmem_spec(),
    )(feats, w1p, b1p, w2p, b2p, wcp, bcp)


@jax.jit
def siamese_forward(params, img1, img2):
    # Single backbone pass over both images (concatenated along batch).
    x1 = jnp.transpose(img1, (0, 2, 3, 1)).astype(jnp.float32)   # NCHW -> NHWC
    x2 = jnp.transpose(img2, (0, 2, 3, 1)).astype(jnp.float32)
    x = jnp.concatenate([x1, x2], axis=0)                        # (2B, H, W, 3)
    feats = backbone_features(params, x)                         # (2B, 1280)
    return siamese_head(params, feats, img1.shape[0])            # (B, 1)


def init_params(key, emb_size):
    ks = jax.random.split(key, 4)

    def lin(k, fan_in, fan_out):
        scale = 1.0 / jnp.sqrt(jnp.float32(fan_in))
        return jax.random.normal(k, (fan_in, fan_out), jnp.float32) * scale

    return {
        "stem_w": lin(ks[0], STEM_K, FEAT_DIM),       # conv 3x3x3 -> 1280, as matmul
        "stem_b": jnp.zeros((1, FEAT_DIM), jnp.float32),
        "w1": lin(ks[1], FEAT_DIM, HIDDEN),           # Linear(1280, 500)
        "b1": jnp.zeros((1, HIDDEN), jnp.float32),
        "w2": lin(ks[2], HIDDEN, emb_size),           # Linear(500, emb_size)
        "b2": jnp.zeros((1, emb_size), jnp.float32),
        "wc": lin(ks[3], emb_size, 1),                # Linear(emb_size, 1)
        "bc": jnp.zeros((1, 1), jnp.float32),
    }


if __name__ == "__main__":
    key = jax.random.PRNGKey(0)
    k1, k2, kp = jax.random.split(key, 3)

    B, C, H, W = 2, 3, 16, 16
    emb_size = 32
    # inputs in [0,1], mimicking rescaled image tensors
    img1 = jax.random.uniform(k1, (B, C, H, W), jnp.float32)
    img2 = jax.random.uniform(k2, (B, C, H, W), jnp.float32)

    params = init_params(kp, emb_size)
    out = siamese_forward(params, img1, img2)
    out = jax.block_until_ready(out)

    assert out.shape == (B, 1), out.shape
    assert bool(jnp.all((out >= 0.0) & (out <= 1.0)))  # sigmoid range
    print("KERNEL_OK")
</pallas_src>

<mosaic_0001>
module attributes {stable_mosaic.version = 11 : i64} {
  func.func @_stem_pool_kernel(%arg0: i32, %arg1: i32, %arg2: memref<4x64x27xbf16, #tpu.memory_space<vmem>>, %arg3: memref<27x256xbf16, #tpu.memory_space<vmem>>, %arg4: memref<1x256xf32, #tpu.memory_space<vmem>>, %arg5: memref<4x256xf32, #tpu.memory_space<vmem>>, %arg6: memref<4x256xf32, #tpu.memory_space<vmem>>) attributes {dimension_semantics = [#tpu.dimension_semantics<parallel>, #tpu.dimension_semantics<arbitrary>], iteration_bounds = array<i64: 5, 1>, scalar_prefetch = 0 : i64, scratch_operands = 1 : i64, tpu.core_type = #tpu.core_type<tc>, window_params = [{transform_indices = @transform_0, window_bounds = array<i64: 4, 64, 27>}, {transform_indices = @transform_1, window_bounds = array<i64: 27, 256>}, {transform_indices = @transform_2, window_bounds = array<i64: 1, 256>}, {transform_indices = @transform_3, window_bounds = array<i64: 4, 256>}]} {
    %c0_i32 = arith.constant 0 : i32
    %0 = arith.cmpi eq, %arg1, %c0_i32 : i32
    %1 = arith.extui %0 : i1 to i32
    %c0_i32_0 = arith.constant 0 : i32
    %2 = arith.cmpi ne, %1, %c0_i32_0 : i32
    scf.if %2 {
      %cst_15 = arith.constant 0.000000e+00 : f32
      %24 = vector.broadcast %cst_15 : f32 to vector<4x256xf32>
      %c0_16 = arith.constant 0 : index
      %c0_17 = arith.constant 0 : index
      %25 = vector.load %arg6[%c0_16, %c0_17] : memref<4x256xf32, #tpu.memory_space<vmem>>, vector<4x256xf32>
      tpu.vector_store %arg6[%c0_16, %c0_17], %24 {strides = array<i32>} : memref<4x256xf32, #tpu.memory_space<vmem>>, vector<4x256xf32>,
    } else {
    }
    %c0 = arith.constant 0 : index
    %c0_1 = arith.constant 0 : index
    %c0_2 = arith.constant 0 : index
    %3 = vector.load %arg2[%c0, %c0_1, %c0_2] : memref<4x64x27xbf16, #tpu.memory_space<vmem>>, vector<4x64x27xbf16>
    %4 = vector.shape_cast %3 : vector<4x64x27xbf16> to vector<256x27xbf16>
    %c0_3 = arith.constant 0 : index
    %c0_4 = arith.constant 0 : index
    %5 = vector.load %arg3[%c0_3, %c0_4] : memref<27x256xbf16, #tpu.memory_space<vmem>>, vector<27x256xbf16>
    %cst = arith.constant dense<0.000000e+00> : vector<256x256xf32>
    %6 = tpu.matmul %4, %5, %cst {dimension_numbers = #tpu.dot_dimension_numbers<[1], [0], [0], [1], [0, 0, 1, 1], [], []>} : vector<256x27xbf16>, vector<27x256xbf16>, vector<256x256xf32> -> vector<256x256xf32>
    %c0_5 = arith.constant 0 : index
    %c0_6 = arith.constant 0 : index
    %7 = vector.load %arg4[%c0_5, %c0_6] : memref<1x256xf32, #tpu.memory_space<vmem>>, vector<1x256xf32>
    %8 = vector.broadcast %7 : vector<1x256xf32> to vector<256x256xf32>
    %9 = arith.addf %6, %8 : vector<256x256xf32>
    %10 = arith.negf %9 : vector<256x256xf32>
    %11 = math.exp %10 : vector<256x256xf32>
    %cst_7 = arith.constant 1.000000e+00 : f32
    %12 = vector.broadcast %cst_7 : f32 to vector<256x256xf32>
    %13 = arith.addf %12, %11 : vector<256x256xf32>
    %14 = arith.divf %12, %13 : vector<256x256xf32>
    %15 = arith.mulf %9, %14 : vector<256x256xf32>
    %c0_8 = arith.constant 0 : index
    %c0_9 = arith.constant 0 : index
    %16 = vector.load %arg6[%c0_8, %c0_9] : memref<4x256xf32, #tpu.memory_space<vmem>>, vector<4x256xf32>
    %17 = vector.shape_cast %15 : vector<256x256xf32> to vector<4x64x256xf32>
    %cst_10 = arith.constant dense<0.000000e+00> : vector<4x256xf32>
    %18 = vector.multi_reduction <add>, %17, %cst_10 [1] : vector<4x64x256xf32> to vector<4x256xf32>
    %19 = arith.addf %16, %18 : vector<4x256xf32>
    %c0_11 = arith.constant 0 : index
    %c0_12 = arith.constant 0 : index
    %20 = vector.load %arg6[%c0_11, %c0_12] : memref<4x256xf32, #tpu.memory_space<vmem>>, vector<4x256xf32>
    tpu.vector_store %arg6[%c0_11, %c0_12], %19 {strides = array<i32>} : memref<4x256xf32, #tpu.memory_space<vmem>>, vector<4x256xf32>,
    %c0_i32_13 = arith.constant 0 : i32
    %21 = arith.cmpi eq, %arg1, %c0_i32_13 : i32
    %22 = arith.extui %21 : i1 to i32
    %c0_i32_14 = arith.constant 0 : i32
    %23 = arith.cmpi ne, %22, %c0_i32_14 : i32
    scf.if %23 {
      %c0_15 = arith.constant 0 : index
      %c0_16 = arith.constant 0 : index
      %24 = vector.load %arg6[%c0_15, %c0_16] : memref<4x256xf32, #tpu.memory_space<vmem>>, vector<4x256xf32>
      %cst_17 = arith.constant 1.562500e-02 : f32
      %25 = vector.broadcast %cst_17 : f32 to vector<4x256xf32>
      %26 = arith.mulf %24, %25 : vector<4x256xf32>
      %c0_18 = arith.constant 0 : index
      %c0_19 = arith.constant 0 : index
      %27 = vector.load %arg5[%c0_18, %c0_19] : memref<4x256xf32, #tpu.memory_space<vmem>>, vector<4x256xf32>
      tpu.vector_store %arg5[%c0_18, %c0_19], %26 {strides = array<i32>} : memref<4x256xf32, #tpu.memory_space<vmem>>, vector<4x256xf32>,
    } else {
    }
    return
  }
  func.func @transform_0(%arg0: i32, %arg1: i32) -> (i32, i32, i32) {
    %c0_i32 = arith.constant 0 : i32
    %c0_i32_0 = arith.constant 0 : i32
    %c0_i32_1 = arith.constant 0 : i32
    return %c0_i32, %arg1, %c0_i32_0 : i32, i32, i32
  }
  func.func @transform_1(%arg0: i32, %arg1: i32) -> (i32, i32) {
    %c0_i32 = arith.constant 0 : i32
    %c0_i32_0 = arith.constant 0 : i32
    return %c0_i32, %arg0 : i32, i32
  }
  func.func @transform_2(%arg0: i32, %arg1: i32) -> (i32, i32) {
    %c0_i32 = arith.constant 0 : i32
    %c0_i32_0 = arith.constant 0 : i32
    return %c0_i32, %arg0 : i32, i32
  }
  func.func @transform_3(%arg0: i32, %arg1: i32) -> (i32, i32) {
    %c0_i32 = arith.constant 0 : i32
    %c0_i32_0 = arith.constant 0 : i32
    return %c0_i32, %arg0 : i32, i32
  }
}

module attributes {stable_mosaic.version = 11 : i64} {
  func.func @_siamese_head_kernel(%arg0: memref<4x1280xf32, #tpu.memory_space<vmem>>, %arg1: memref<1280x512xbf16, #tpu.memory_space<vmem>>, %arg2: memref<1x512xf32, #tpu.memory_space<vmem>>, %arg3: memref<512x128xbf16, #tpu.memory_space<vmem>>, %arg4: memref<1x128xf32, #tpu.memory_space<vmem>>, %arg5: memref<1x128xf32, #tpu.memory_space<vmem>>, %arg6: memref<1x1xf32, #tpu.memory_space<vmem>>, %arg7: memref<2x1xf32, #tpu.memory_space<vmem>>) attributes {dimension_semantics = [], scalar_prefetch = 0 : i64, scratch_operands = 0 : i64, tpu.core_type = #tpu.core_type<tc>} {
    %c0 = arith.constant 0 : index
    %c0_0 = arith.constant 0 : index
    %0 = vector.load %arg0[%c0, %c0_0] : memref<4x1280xf32, #tpu.memory_space<vmem>>, vector<4x1280xf32>
    %1 = arith.truncf %0 : vector<4x1280xf32> to vector<4x1280xbf16>
    %c0_1 = arith.constant 0 : index
    %c0_2 = arith.constant 0 : index
    %2 = vector.load %arg1[%c0_1, %c0_2] : memref<1280x512xbf16, #tpu.memory_space<vmem>>, vector<1280x512xbf16>
    %cst = arith.constant dense<0.000000e+00> : vector<4x512xf32>
    %3 = tpu.matmul %1, %2, %cst {dimension_numbers = #tpu.dot_dimension_numbers<[1], [0], [0], [1], [0, 0, 1, 1], [], []>} : vector<4x1280xbf16>, vector<1280x512xbf16>, vector<4x512xf32> -> vector<4x512xf32>
    %c0_3 = arith.constant 0 : index
    %c0_4 = arith.constant 0 : index
    %4 = vector.load %arg2[%c0_3, %c0_4] : memref<1x512xf32, #tpu.memory_space<vmem>>, vector<1x512xf32>
    %5 = vector.broadcast %4 : vector<1x512xf32> to vector<4x512xf32>
    %6 = arith.addf %3, %5 : vector<4x512xf32>
    %cst_5 = arith.constant 0.000000e+00 : f32
    %7 = vector.broadcast %cst_5 : f32 to vector<4x512xf32>
    %8 = arith.maximumf %6, %7 : vector<4x512xf32>
    %9 = arith.truncf %8 : vector<4x512xf32> to vector<4x512xbf16>
    %c0_6 = arith.constant 0 : index
    %c0_7 = arith.constant 0 : index
    %10 = vector.load %arg3[%c0_6, %c0_7] : memref<512x128xbf16, #tpu.memory_space<vmem>>, vector<512x128xbf16>
    %cst_8 = arith.constant dense<0.000000e+00> : vector<4x128xf32>
    %11 = tpu.matmul %9, %10, %cst_8 {dimension_numbers = #tpu.dot_dimension_numbers<[1], [0], [0], [1], [0, 0, 1, 1], [], []>} : vector<4x512xbf16>, vector<512x128xbf16>, vector<4x128xf32> -> vector<4x128xf32>
    %c0_9 = arith.constant 0 : index
    %c0_10 = arith.constant 0 : index
    %12 = vector.load %arg4[%c0_9, %c0_10] : memref<1x128xf32, #tpu.memory_space<vmem>>, vector<1x128xf32>
    %13 = vector.broadcast %12 : vector<1x128xf32> to vector<4x128xf32>
    %14 = arith.addf %11, %13 : vector<4x128xf32>
    %15 = vector.extract_strided_slice %14 {offsets = [0, 0], sizes = [2, 128], strides = [1, 1]} : vector<4x128xf32> to vector<2x128xf32>
    %16 = vector.extract_strided_slice %14 {offsets = [2, 0], sizes = [2, 128], strides = [1, 1]} : vector<4x128xf32> to vector<2x128xf32>
    %17 = arith.mulf %15, %16 : vector<2x128xf32>
    %c0_11 = arith.constant 0 : index
    %c0_12 = arith.constant 0 : index
    %18 = vector.load %arg5[%c0_11, %c0_12] : memref<1x128xf32, #tpu.memory_space<vmem>>, vector<1x128xf32>
    %19 = vector.broadcast %18 : vector<1x128xf32> to vector<2x128xf32>
    %20 = arith.mulf %17, %19 : vector<2x128xf32>
    %cst_13 = arith.constant dense<0.000000e+00> : vector<2xf32>
    %21 = vector.multi_reduction <add>, %20, %cst_13 [1] : vector<2x128xf32> to vector<2xf32>
    %22 = vector.shape_cast %21 : vector<2xf32> to vector<2x1xf32>
    %c0_14 = arith.constant 0 : index
    %c0_15 = arith.constant 0 : index
    %23 = vector.load %arg6[%c0_14, %c0_15] : memref<1x1xf32, #tpu.memory_space<vmem>>, vector<1x1xf32>
    %24 = vector.broadcast %23 : vector<1x1xf32> to vector<2x1xf32>
    %25 = arith.addf %22, %24 : vector<2x1xf32>
    %26 = arith.negf %25 : vector<2x1xf32>
    %27 = math.exp %26 : vector<2x1xf32>
    %cst_16 = arith.constant 1.000000e+00 : f32
    %28 = vector.broadcast %cst_16 : f32 to vector<2x1xf32>
    %29 = arith.addf %28, %27 : vector<2x1xf32>
    %30 = arith.divf %28, %29 : vector<2x1xf32>
    %c0_17 = arith.constant 0 : index
    %c0_18 = arith.constant 0 : index
    %31 = vector.load %arg7[%c0_17, %c0_18] : memref<2x1xf32, #tpu.memory_space<vmem>>, vector<2x1xf32>
    tpu.vector_store %arg7[%c0_17, %c0_18], %30 {strides = array<i32>} : memref<2x1xf32, #tpu.memory_space<vmem>>, vector<2x1xf32>,
    return
  }
}

</mosaic_0001>

<llo_original>
// kernel: tile.11
$region0: #{tile.11}
  #allocation0 [shape = 's32[1]{0}', space=sflag, size = 0x4, scoped, tag = 'scoped memory for tile.11']
  %s0 = inlined_call_operand.vmem [shape: f32[3], index: 0, kind: input, shape index: {}]
  %s1 = inlined_call_operand.vmem [shape: f32[9,3], index: 1, kind: output, shape index: {}]
  // Predicated region
  $region2: #{tile.11} parent=0 // pred_check
    _
  $region3: #{tile.11} parent=0 // pred_check_branch
    %3 = sbr.rel (0) target = $region5
  $region4: #{tile.11} parent=0 // pred_region
    _
  $region5: #{tile.11} parent=0 // pred_fallthru
    _
  %v4 = vld [vmem:[%s0] ss:$0 sm:$0xff]
  %5 = vst [vmem:[%s1] sm:$0xff] %v4
  %s6 = scalar_lea.vmem %s1, 8
  %7 = vst [vmem:[%s6] sm:$0xff] %v4

// kernel: mul.6
$region0: #{mul.6}
  %s0 = inlined_call_operand.vmem [shape: f32[9,3], index: 0, kind: input, shape index: {}]
  %s1 = inlined_call_operand.vmem [shape: f32[27], index: 1, kind: output, shape index: {}]
  $region1: #{mul.6} parent=0
    #allocation0 [shape = 'u8[4096]{0}', space=vmem, size = 0x1000, scoped, tag = 'scoped mem for output reshape']
    %v2 = vld [vmem:[%s0] sm:$0x1]
    %vm3 = vcmask 23552
    %4 = vst.msk [vmem:[#allocation0] sm:$0x1] %vm3, %v2
    %s5 = scalar_lea.vmem %s0, 8
    %v6 = vld [vmem:[%s5] sm:$0x1]
    %7 = vrot.lane.b32.xlu0 %v6, 24
    %v8 = vpop.permute.xlu0 %7
    %vm9 = vcmask 220352
    %10 = vst.msk [vmem:[#allocation0] sm:$0x1] %vm9, %v8
    %s11 = scalar_lea.vmem %s0, 7
    %v12 = vld [vmem:[%s11] sm:$0x1]
    %13 = vrot.lane.b32.xlu0 %v12, 21
    %v14 = vpop.permute.xlu0 %13
    %vm15 = vcmask 195752
    %16 = vst.msk [vmem:[#allocation0] sm:$0x1] %vm15, %v14
    %s17 = scalar_lea.vmem %s0, 6
    %v18 = vld [vmem:[%s17] sm:$0x1]
    %19 = vrot.lane.b32.xlu0 %v18, 18
    %v20 = vpop.permute.xlu0 %19
    %vm21 = vcmask 171152
    %22 = vst.msk [vmem:[#allocation0] sm:$0x1] %vm21, %v20
    %s23 = scalar_lea.vmem %s0, 5
    %v24 = vld [vmem:[%s23] sm:$0x1]
    %25 = vrot.lane.b32.xlu0 %v24, 15
    %v26 = vpop.permute.xlu0 %25
    %vm27 = vcmask 146552
    %28 = vst.msk [vmem:[#allocation0] sm:$0x1] %vm27, %v26
    %s29 = scalar_lea.vmem %s0, 4
    %v30 = vld [vmem:[%s29] sm:$0x1]
    %31 = vrot.lane.b32.xlu0 %v30, 12
    %v32 = vpop.permute.xlu0 %31
    %vm33 = vcmask 121952
    %34 = vst.msk [vmem:[#allocation0] sm:$0x1] %vm33, %v32
    %s35 = scalar_lea.vmem %s0, 3
    %v36 = vld [vmem:[%s35] sm:$0x1]
    %37 = vrot.lane.b32.xlu0 %v36, 9
    %v38 = vpop.permute.xlu0 %37
    %vm39 = vcmask 97352
    %40 = vst.msk [vmem:[#allocation0] sm:$0x1] %vm39, %v38
    %s41 = scalar_lea.vmem %s0, 2
    %v42 = vld [vmem:[%s41] sm:$0x1]
    %43 = vrot.lane.b32.xlu0 %v42, 6
    %v44 = vpop.permute.xlu0 %43
    %vm45 = vcmask 72752
    %46 = vst.msk [vmem:[#allocation0] sm:$0x1] %vm45, %v44
    %s47 = scalar_lea.vmem %s0, 1
    %v48 = vld [vmem:[%s47] sm:$0x1]
    %49 = vrot.lane.b32.xlu0 %v48, 3
    %v50 = vpop.permute.xlu0 %49
    %vm51 = vcmask 48152
    %52 = vst.msk [vmem:[#allocation0] sm:$0x1] %vm51, %v50
    %s54 = sshllo.u32 0, 1
    %v56 = vld [vmem:[#allocation0] sm:%s54]
    %s57 = sshllo.u32 0, 1
    %58 = vst [vmem:[%s1] sm:%s57] %v56

// kernel: mul.9
$region0: #{mul.9}
  #allocation0 [shape = 's32[1]{0}', space=sflag, size = 0x4, scoped, tag = 'scoped memory for mul.9']
  %s0 = inlined_call_operand.vmem [shape: f32[27], index: 0, kind: input, shape index: {}]
  %s1 = inlined_call_operand.vmem [shape: f32[27], index: 1, kind: input, shape index: {}]
  %s2 = inlined_call_operand.vmem [shape: f32[27], index: 2, kind: output, shape index: {}]
  %v3 = vld [vmem:[%s0] sm:$0x1]
  %v4 = vld [vmem:[%s1] sm:$0x1]
  %5 = xla_tuple %v3, %v4
  %6 = xla_tuple %5
  %v7 = vmul.f32 %v3, %v4
  %8 = xla_tuple %v7
  %9 = vst [vmem:[%s2] sm:$0x1] %v7

// kernel: siamese_forward.2
$region0: #{siamese_forward.2}
  #allocation0 [shape = 'u32[]', space=smem, size = 0x4, offset = 0x4, fixed_abs, tag = 'smem constant byte address 0x4 - core index']
  #allocation1 [shape = 'u32[144,128]{1,0:T(1,128)}', space=vmem, size = 0x12000, scoped, tag = 'internal scratch']
  #allocation2 [shape = 'f32[4,256]{1,0:T(4,128)}', space=vmem, size = 0x1000, scoped, tag = 'scratch operand']
  %s0 = inlined_call_operand.vmem [shape: bf16[4,64,27], index: 0, kind: input, shape index: {}]
  %s1 = inlined_call_operand.vmem [shape: bf16[27,1280], index: 1, kind: input, shape index: {}]
  %s2 = inlined_call_operand.vmem [shape: f32[1,1280], index: 2, kind: input, shape index: {}]
  %s3 = inlined_call_operand.vmem [shape: f32[4,1280], index: 3, kind: output, shape index: {}]
  %s4 = sld [smem:[#allocation0]]
  $region91: #{siamese_forward.2} parent=0
    _
  %s6 = ssub.s32 1, %s4
  %s7 = scalar_select 0, %s6, %s4
  $region1: #{siamese_forward.2} parent=0
    #allocation3 [shape = 'u8[32768]{0}', space=vmem, size = 0x8000, scoped, tag = 'input window, operand 1']
    loop: start=0, step=1, limit=7
    $region2: #{siamese_forward.2} parent=1 // loop_pre_header
      _
    $region3: #{siamese_forward.2} parent=1 // loop_header
      %s9 = sphi 0, %s13
      %p10 = scmp.ge.s32.totalorder %s9, 7
      %s16 = sphi 0, %s28
      %s17 = sphi 0, %s24
      %s18 = sphi 0, %s16
      %s19 = sphi 0, %s17
      %s20 = sphi 0, %s18
      %s21 = sphi 0, %s19
      %s31 = sphi 0, %s33
      %s34 = sphi 0, %s31
      %s35 = sphi 0, %s34
      %s51 = sphi 0, %s35
      %s57 = sphi 0, %s59
      %s60 = sphi 0, %s57
      %s61 = sphi 0, %s60
      %s77 = sphi 0, %s61
      %s83 = sphi 0, %s85
      %s86 = sphi 0, %s83
      %s87 = sphi 0, %s86
      %s103 = sphi 0, %s87
      %s109 = sphi 0, %s111
      %s112 = sphi 0, %s109
      %s113 = sphi 0, %s112
      %s129 = sphi 0, %s113
    $region4: #{siamese_forward.2} parent=1 // loop_header_branch
      %12 = sbr.rel (%p10) target = $region8
    $region5: #{siamese_forward.2} parent=1 // loop_body
      %s14 = ssub.s32 %s9, 1
      %s15 = ssub.s32 %s9, 2
      %s22 = sadd.s32 1, %s17
      %p23 = scmp.ge.s32.totalorder %s22, 1
      %s24 = scalar_select %p23, 0, %s22
      %s25 = sadd.s32 1, %s16
      %s26 = scalar_select %p23, %s25, %s16
      %p27 = scmp.ge.s32.totalorder %s26, 5
      %s28 = scalar_select %p27, 0, %s26
      %s29 = ssub.s32 %s17, %s24
      %p30 = scmp.eq.s32.totalorder %s29, 0
      %s32 = sadd.s32 %s31, 1
      %s33 = scalar_select %p30, %s31, %s32
      %p36 = pneg %p30
      %p37 = scmp.eq.s32.totalorder %s9, 4
      %p38 = por %p36, %p37
      %p39 = scmp.ne.s32.totalorder %s31, %s34
      %p40 = scmp.eq.s32.totalorder %s9, 0
      %p41 = por %p39, %p40
      %p42 = scmp.ne.s32.totalorder %s31, %s34
      %p43 = scmp.eq.s32.totalorder %s14, 4
      %p44 = por %p42, %p43
      %p45 = scmp.ne.s32.totalorder %s34, %s35
      %p46 = scmp.eq.s32.totalorder %s14, 0
      %p47 = por %p45, %p46
      %p48 = scmp.ne.s32.totalorder %s34, %s35
      %p49 = scmp.eq.s32.totalorder %s15, 4
      %p50 = por %p48, %p49
      %p52 = scmp.ne.s32.totalorder %s35, %s51
      %p53 = scmp.eq.s32.totalorder %s15, 0
      %p54 = por %p52, %p53
      %s55 = ssub.s32 %s16, %s28
      %p56 = scmp.eq.s32.totalorder %s55, 0
      %s58 = sadd.s32 %s57, 1
      %s59 = scalar_select %p56, %s57, %s58
      %p62 = pneg %p56
      %p63 = scmp.eq.s32.totalorder %s9, 4
      %p64 = por %p62, %p63
      %p65 = scmp.ne.s32.totalorder %s57, %s60
      %p66 = scmp.eq.s32.totalorder %s9, 0
      %p67 = por %p65, %p66
      %p68 = scmp.ne.s32.totalorder %s57, %s60
      %p69 = scmp.eq.s32.totalorder %s14, 4
      %p70 = por %p68, %p69
      %p71 = scmp.ne.s32.totalorder %s60, %s61
      %p72 = scmp.eq.s32.totalorder %s14, 0
      %p73 = por %p71, %p72
      %p74 = scmp.ne.s32.totalorder %s60, %s61
      %p75 = scmp.eq.s32.totalorder %s15, 4
      %p76 = por %p74, %p75
      %p78 = scmp.ne.s32.totalorder %s61, %s77
      %p79 = scmp.eq.s32.totalorder %s15, 0
      %p80 = por %p78, %p79
      %s81 = ssub.s32 %s16, %s28
      %p82 = scmp.eq.s32.totalorder %s81, 0
      %s84 = sadd.s32 %s83, 1
      %s85 = scalar_select %p82, %s83, %s84
      %p88 = pneg %p82
      %p89 = scmp.eq.s32.totalorder %s9, 4
      %p90 = por %p88, %p89
      %p91 = scmp.ne.s32.totalorder %s83, %s86
      %p92 = scmp.eq.s32.totalorder %s9, 0
      %p93 = por %p91, %p92
      %p94 = scmp.ne.s32.totalorder %s83, %s86
      %p95 = scmp.eq.s32.totalorder %s14, 4
      %p96 = por %p94, %p95
      %p97 = scmp.ne.s32.totalorder %s86, %s87
      %p98 = scmp.eq.s32.totalorder %s14, 0
      %p99 = por %p97, %p98
      %p100 = scmp.ne.s32.totalorder %s86, %s87
      %p101 = scmp.eq.s32.totalorder %s15, 4
      %p102 = por %p100, %p101
      %p104 = scmp.ne.s32.totalorder %s87, %s103
      %p105 = scmp.eq.s32.totalorder %s15, 0
      %p106 = por %p104, %p105
      %s107 = ssub.s32 %s16, %s28
      %p108 = scmp.eq.s32.totalorder %s107, 0
      %s110 = sadd.s32 %s109, 1
      %s111 = scalar_select %p108, %s109, %s110
      %p114 = pneg %p108
      %p115 = scmp.eq.s32.totalorder %s9, 4
      %p116 = por %p114, %p115
      %p117 = scmp.ne.s32.totalorder %s109, %s112
      %p118 = scmp.eq.s32.totalorder %s9, 0
      %p119 = por %p117, %p118
      %p120 = scmp.ne.s32.totalorder %s109, %s112
      %p121 = scmp.eq.s32.totalorder %s14, 4
      %p122 = por %p120, %p121
      %p123 = scmp.ne.s32.totalorder %s112, %s113
      %p124 = scmp.eq.s32.totalorder %s14, 0
      %p125 = por %p123, %p124
      %p126 = scmp.ne.s32.totalorder %s112, %s113
      %p127 = scmp.eq.s32.totalorder %s15, 4
      %p128 = por %p126, %p127
      %p130 = scmp.ne.s32.totalorder %s113, %s129
      %p131 = scmp.eq.s32.totalorder %s15, 0
      %p132 = por %p130, %p131
      %p133 = scmp.le.s32.totalorder 1, %s9
      %p134 = scmp.lt.s32.totalorder %s9, 6
      %p135 = pnand %p133, %p134
      %p136 = pneg %p135
      // Predicated region
      $region9: #{siamese_forward.2} parent=5 // pred_check
        _
      $region10: #{siamese_forward.2} parent=5 // pred_check_branch
        %138 = sbr.rel (%p135) target = $region12
      $region11: #{siamese_forward.2} parent=5 // pred_region
        %s139 = ssub.s32 %s9, 1
        // Predicated region
        $region13: #{siamese_forward.2} parent=11 // pred_check
          %p140 = pneg %p47
        $region14: #{siamese_forward.2} parent=11 // pred_check_branch
          %142 = sbr.rel (%p140) target = $region16
        $region15: #{siamese_forward.2} parent=11 // pred_region
          %s143 = smul.u32 8, %s19
          %p144 = scmp.lt.s32.totalorder %s143, 7
          %s145 = scalar_select %p144, %s143, 7
          %s146 = smul.addr %s145, 4
          %s147 = scalar_lea.vmem %s0, %s146
          %s148 = smul.u32 8, %s19
        $region16: #{siamese_forward.2} parent=11 // pred_fallthru
          _
      $region12: #{siamese_forward.2} parent=5 // pred_fallthru
        _
      %p149 = scmp.lt.s32.totalorder %s9, 5
      // Predicated region
      $region17: #{siamese_forward.2} parent=5 // pred_check
        %p150 = pneg %p149
      $region18: #{siamese_forward.2} parent=5 // pred_check_branch
        %152 = sbr.rel (%p150) target = $region20
      $region19: #{siamese_forward.2} parent=5 // pred_region
        // Predicated region
        $region21: #{siamese_forward.2} parent=19 // pred_check
          %p153 = pneg %p67
        $region22: #{siamese_forward.2} parent=19 // pred_check_branch
          %155 = sbr.rel (%p153) target = $region24
        $region23: #{siamese_forward.2} parent=19 // pred_region
          %s156 = sand.u32 %s57, 1
          %s157 = sand.u32 %s57, 1
          %s158 = smul.addr %s157, 32
          %s159 = scalar_lea.vmem [#allocation3], %s158
          %s160 = smul.u32 2, %s16
          %s161 = smul.addr %s160, 4
          %s162 = scalar_lea.vmem %s1, %s161
          // Predicated region
          $region25: #{siamese_forward.2} parent=23 // pred_check
            _
          $region26: #{siamese_forward.2} parent=23 // pred_check_branch
            %164 = sbr.rel (0) target = $region28
          $region27: #{siamese_forward.2} parent=23 // pred_region
            // Predicated region
            $region29: #{siamese_forward.2} parent=27 // pred_check
              _
            $region30: #{siamese_forward.2} parent=27 // pred_check_branch
              %166 = sbr.rel (0) target = $region32
            $region31: #{siamese_forward.2} parent=27 // pred_region
              // Predicated region
              $region44: #{siamese_forward.2} parent=31 // pred_check
                _
              $region45: #{siamese_forward.2} parent=31 // pred_check_branch
                %187 = sbr.rel (0) target = $region47
              $region46: #{siamese_forward.2} parent=31 // pred_region
                loop: start=0, step=1, limit=1
                $region48: #{siamese_forward.2} parent=46 // loop_pre_header
                  _
                $region49: #{siamese_forward.2} parent=46 // loop_header
                  %s189 = sphi 0, %s193
                  %p190 = scmp.ge.s32.totalorder %s189, 1
                  %s194 = sphi %s162, %s162
                  %s195 = sphi %s159, %s159
                $region50: #{siamese_forward.2} parent=46 // loop_header_branch
                  %192 = sbr.rel (%p190) target = $region54
                $region51: #{siamese_forward.2} parent=46 // loop_body
                  %v196 = vld [vmem:[%s194] sm:$0xff]
                  %197 = vst [vmem:[%s195] sm:$0xff] %v196
                  %v198 = vld [vmem:[%s194 + $0x28] sm:$0xff]
                  %199 = vst [vmem:[%s195 + $0x8] sm:$0xff] %v198
                  %v200 = vld [vmem:[%s194 + $0x50] sm:$0xff]
                  %201 = vst [vmem:[%s195 + $0x10] sm:$0xff] %v200
                  %v202 = vld [vmem:[%s194 + $0x78] sm:$0xff]
                  %203 = vst [vmem:[%s195 + $0x18] sm:$0xff] %v202
                $region52: #{siamese_forward.2} parent=46 // loop_footer
                  %s193 = sadd.s32 1, %s189
                $region53: #{siamese_forward.2} parent=46 // loop_footer_branch
                  %188 = sbr.rel target = $region49
                $region54: #{siamese_forward.2} parent=46 // loop_exit
                  _
              $region47: #{siamese_forward.2} parent=31 // pred_fallthru
                _
              // Predicated region
              $region55: #{siamese_forward.2} parent=31 // pred_check
                _
              $region56: #{siamese_forward.2} parent=31 // pred_check_branch
                %205 = sbr.rel target = $region58
              $region57: #{siamese_forward.2} parent=31 // pred_region
                _
              $region58: #{siamese_forward.2} parent=31 // pred_fallthru
                _
            $region32: #{siamese_forward.2} parent=27 // pred_fallthru
              _
            // Predicated region
            $region33: #{siamese_forward.2} parent=27 // pred_check
              _
            $region34: #{siamese_forward.2} parent=27 // pred_check_branch
              %168 = sbr.rel target = $region36
            $region35: #{siamese_forward.2} parent=27 // pred_region
              loop: start=0, step=1, limit=1
              $region37: #{siamese_forward.2} parent=35 // loop_pre_header
                _
              $region38: #{siamese_forward.2} parent=35 // loop_header
                %s171 = sphi 0, %s175
                %p172 = scmp.ge.s32.totalorder %s171, 1
                %s176 = sphi %s162, %s162
                %s177 = sphi %s159, %s159
              $region39: #{siamese_forward.2} parent=35 // loop_header_branch
                %174 = sbr.rel (%p172) target = $region43
              $region40: #{siamese_forward.2} parent=35 // loop_body
                %v178 = vld [vmem:[%s176] sm:$0xff]
                %179 = vst [vmem:[%s177] sm:$0xff] %v178
                %v180 = vld [vmem:[%s176 + $0x28] sm:$0xff]
                %181 = vst [vmem:[%s177 + $0x8] sm:$0xff] %v180
                %v182 = vld [vmem:[%s176 + $0x50] sm:$0xff]
                %183 = vst [vmem:[%s177 + $0x10] sm:$0xff] %v182
                %v184 = vld [vmem:[%s176 + $0x78] sm:$0xff]
                %185 = vst [vmem:[%s177 + $0x18] sm:$0xff] %v184
              $region41: #{siamese_forward.2} parent=35 // loop_footer
                %s175 = sadd.s32 1, %s171
              $region42: #{siamese_forward.2} parent=35 // loop_footer_branch
                %170 = sbr.rel target = $region38
              $region43: #{siamese_forward.2} parent=35 // loop_exit
                _
            $region36: #{siamese_forward.2} parent=27 // pred_fallthru
              _
          $region28: #{siamese_forward.2} parent=23 // pred_fallthru
            _
          %206 = vnop
        $region24: #{siamese_forward.2} parent=19 // pred_fallthru
          _
        // Predicated region
        $region59: #{siamese_forward.2} parent=19 // pred_check
          %p207 = pneg %p93
        $region60: #{siamese_forward.2} parent=19 // pred_check_branch
          %209 = sbr.rel (%p207) target = $region62
        $region61: #{siamese_forward.2} parent=19 // pred_region
          %s210 = smul.u32 2, %s16
          %p211 = scmp.lt.s32.totalorder %s210, 9
          %s212 = scalar_select %p211, %s210, 9
          %s213 = scalar_lea.vmem %s2, %s212
          %s214 = smul.u32 2, %s16
        $region62: #{siamese_forward.2} parent=19 // pred_fallthru
          _
      $region20: #{siamese_forward.2} parent=5 // pred_fallthru
        _
      %p215 = scmp.le.s32.totalorder 1, %s9
      %p216 = scmp.lt.s32.totalorder %s9, 6
      %p217 = pnand %p215, %p216
      %p218 = pneg %p217
      // Predicated region
      $region63: #{siamese_forward.2} parent=5 // pred_check
        _
      $region64: #{siamese_forward.2} parent=5 // pred_check_branch
        %220 = sbr.rel (%p217) target = $region66
      $region65: #{siamese_forward.2} parent=5 // pred_region
        %s221 = ssub.s32 %s9, 1
        %s222 = sand.u32 %s60, 1
        %s223 = sand.u32 %s60, 1
        %s224 = smul.addr %s223, 32
        %s225 = scalar_lea.vmem [#allocation3], %s224
        // Predicated region
        $region67: #{siamese_forward.2} parent=65 // pred_check
          %p226 = pneg %p73
        $region68: #{siamese_forward.2} parent=65 // pred_check_branch
          %228 = sbr.rel (%p226) target = $region70
        $region69: #{siamese_forward.2} parent=65 // pred_region
          _
        $region70: #{siamese_forward.2} parent=65 // pred_fallthru
          _
        %s229 = smul.u32 8, %s19
        %p230 = scmp.lt.s32.totalorder %s229, 7
        %s231 = scalar_select %p230, %s229, 7
        %s232 = smul.addr %s231, 4
        %s233 = scalar_lea.vmem %s0, %s232
        %p234 = pneg %p47
        %p235 = pneg %p44
        %s236 = sand.u32 %s60, 1
        %s237 = sand.u32 %s60, 1
        %s238 = smul.addr %s237, 32
        %s239 = scalar_lea.vmem [#allocation3], %s238
        %p240 = pneg %p73
        %p241 = pneg %p70
        %s242 = smul.u32 2, %s18
        %p243 = scmp.lt.s32.totalorder %s242, 9
        %s244 = scalar_select %p243, %s242, 9
        %s245 = scalar_lea.vmem %s2, %s244
        %p246 = pneg %p99
        %p247 = pneg %p96
        %p248 = pneg %p125
        %p249 = pneg %p122
        %s250 = smul.u32 2, %s18
        %p251 = scmp.lt.s32.totalorder %s250, 9
        %s252 = scalar_select %p251, %s250, 9
        %s253 = smul.addr %s252, 4
        %s254 = scalar_lea.vmem %s3, %s253
        %s255 = smul.u32 8, %s19
        %p256 = scmp.lt.s32.totalorder %s255, 7
        %s257 = scalar_select %p256, %s255, 7
        %s258 = smul.addr %s257, 4
        %s259 = scalar_lea.vmem %s0, %s258
        %s260 = smul.u32 8, %s19
        %s261 = smul.u32 2, %s18
        %s262 = smul.u32 2, %s18
        %p263 = scmp.lt.s32.totalorder %s262, 9
        %s264 = scalar_select %p263, %s262, 9
        %s265 = scalar_lea.vmem %s2, %s264
        %s266 = smul.u32 2, %s18
        %s267 = smul.u32 2, %s18
        %p268 = scmp.lt.s32.totalorder %s267, 9
        %s269 = scalar_select %p268, %s267, 9
        %s270 = smul.addr %s269, 4
        %s271 = scalar_lea.vmem %s3, %s270
        %s272 = smul.u32 2, %s18
        %p274 = scmp.eq.s32.totalorder %s19, 0
        // Predicated region
        $region71: #{siamese_forward.2} parent=65 // pred_check
          %p275 = pneg %p274
        $region72: #{siamese_forward.2} parent=65 // pred_check_branch
          %277 = sbr.rel (%p275) target = $region74
        $region73: #{siamese_forward.2} parent=65 // pred_region
          %278 = vst [vmem:[#allocation2] sm:$0xff] 0.0
        $region74: #{siamese_forward.2} parent=65 // pred_fallthru
          _
        %v279 = vld [vmem:[%s259] sm:$0xf]
        %v280 = vld [vmem:[%s259 + $0x4] sm:$0xf]
        %v281 = vld [vmem:[%s259 + $0x8] sm:$0xf]
        %v282 = vld [vmem:[%s259 + $0xc] sm:$0xf]
        %v283 = vld [vmem:[%s259 + $0x10] sm:$0xf]
        %v284 = vld [vmem:[%s259 + $0x14] sm:$0xf]
        %v285 = vld [vmem:[%s259 + $0x18] sm:$0xf]
        %v286 = vld [vmem:[%s259 + $0x1c] sm:$0xf]
        %v287 = vld [vmem:[%s259 + $0x20] sm:$0xf]
        %v288 = vld [vmem:[%s259 + $0x24] sm:$0xf]
        %v289 = vld [vmem:[%s259 + $0x28] sm:$0xf]
        %v290 = vld [vmem:[%s259 + $0x2c] sm:$0xf]
        %v291 = vld [vmem:[%s259 + $0x30] sm:$0xf]
        %v292 = vld [vmem:[%s259 + $0x34] sm:$0xf]
        %v293 = vld [vmem:[%s259 + $0x38] sm:$0xf]
        %v294 = vld [vmem:[%s259 + $0x3c] sm:$0xf]
        %v295 = vld [vmem:[%s259 + $0x40] sm:$0xf]
        %v296 = vld [vmem:[%s259 + $0x44] sm:$0xf]
        %v297 = vld [vmem:[%s259 + $0x48] sm:$0xf]
        %v298 = vld [vmem:[%s259 + $0x4c] sm:$0xf]
        %v299 = vld [vmem:[%s259 + $0x50] sm:$0xf]
        %v300 = vld [vmem:[%s259 + $0x54] sm:$0xf]
        %v301 = vld [vmem:[%s259 + $0x58] sm:$0xf]
        %v302 = vld [vmem:[%s259 + $0x5c] sm:$0xf]
        %v303 = vld [vmem:[%s259 + $0x60] sm:$0xf]
        %v304 = vld [vmem:[%s259 + $0x64] sm:$0xf]
        %v305 = vld [vmem:[%s259 + $0x68] sm:$0xf]
        %v306 = vld [vmem:[%s259 + $0x6c] sm:$0xf]
        %v307 = vld [vmem:[%s259 + $0x70] sm:$0xf]
        %v308 = vld [vmem:[%s259 + $0x74] sm:$0xf]
        %v309 = vld [vmem:[%s259 + $0x78] sm:$0xf]
        %v310 = vld [vmem:[%s259 + $0x7c] sm:$0xf]
        %v311 = vld [vmem:[%s225] sm:$0xff]
        %v312 = vld [vmem:[%s225 + $0x8] sm:$0xff]
        %v313 = vld [vmem:[%s225 + $0x10] sm:$0xff]
        %v314 = vld [vmem:[%s225 + $0x18] sm:$0x33]
        %v315 = vld [vmem:[%s265] sm:$0x3]
        %v317 = vlaneseq
        %v318 = vshrl.u32 %v317, 7
        %v319 = vsub.s32 0, %v318
        %v320 = vrot.slane %v315, %v319
        %v321 = vlaneseq
        %v322 = vshrl.u32 %v321, 7
        %v323 = vsub.s32 1, %v322
        %v324 = vrot.slane %v315, %v323
        %v359 = vunpack.c.l.b16 %v279
        %v360 = vunpack.c.l.b16 %v280
        %v361 = vunpack.c.l.b16 %v281
        %v362 = vunpack.c.l.b16 %v282
        %v363 = vunpack.c.l.b16 %v283
        %v364 = vunpack.c.l.b16 %v284
        %v365 = vunpack.c.l.b16 %v285
        %v366 = vunpack.c.l.b16 %v286
        %v367 = vunpack.c.l.b16 %v287
        %v368 = vunpack.c.l.b16 %v288
        %v369 = vunpack.c.l.b16 %v289
        %v370 = vunpack.c.l.b16 %v290
        %v371 = vunpack.c.l.b16 %v291
        %v372 = vunpack.c.l.b16 %v292
        %v373 = vunpack.c.l.b16 %v293
        %v374 = vunpack.c.l.b16 %v294
        %v375 = vunpack.c.l.b16 %v295
        %v376 = vunpack.c.l.b16 %v296
        %v377 = vunpack.c.l.b16 %v297
        %v378 = vunpack.c.l.b16 %v298
        %v379 = vunpack.c.l.b16 %v299
        %v380 = vunpack.c.l.b16 %v300
        %v381 = vunpack.c.l.b16 %v301
        %v382 = vunpack.c.l.b16 %v302
        %v383 = vunpack.c.l.b16 %v303
        %v384 = vunpack.c.l.b16 %v304
        %v385 = vunpack.c.l.b16 %v305
        %v386 = vunpack.c.l.b16 %v306
        %v387 = vunpack.c.l.b16 %v307
        %v388 = vunpack.c.l.b16 %v308
        %v389 = vunpack.c.l.b16 %v309
        %v390 = vunpack.c.l.b16 %v310
        %v391 = vpack.c.b16 %v360, %v359
        %v392 = vpack.c.b16 %v362, %v361
        %v393 = vpack.c.b16 %v364, %v363
        %v394 = vpack.c.b16 %v366, %v365
        %v395 = vpack.c.b16 %v368, %v367
        %v396 = vpack.c.b16 %v370, %v369
        %v397 = vpack.c.b16 %v372, %v371
        %v398 = vpack.c.b16 %v374, %v373
        %v399 = vpack.c.b16 %v376, %v375
        %v400 = vpack.c.b16 %v378, %v377
        %v401 = vpack.c.b16 %v380, %v379
        %v402 = vpack.c.b16 %v382, %v381
        %v403 = vpack.c.b16 %v384, %v383
        %v404 = vpack.c.b16 %v386, %v385
        %v405 = vpack.c.b16 %v388, %v387
        %v406 = vpack.c.b16 %v390, %v389
        %v411 = vunpack.c.l.b16 %v311
        %v412 = vunpack.c.h.b16 %v311
        %v413 = vunpack.c.l.b16 %v312
        %v414 = vunpack.c.h.b16 %v312
        %v415 = vunpack.c.l.b16 %v313
        %v416 = vunpack.c.h.b16 %v313
        %v417 = vunpack.c.l.b16 %v314
        %v418 = vunpack.c.h.b16 %v314
        %v419 = vpack.c.b16 %v413, %v411
        %v420 = vpack.c.b16 %v414, %v412
        %v421 = vpack.c.b16 %v417, %v415
        %v422 = vpack.c.b16 %v418, %v416
        %vm425 = vcmask 220160
        %v427 = vsel %vm425, %v391, 0
        %v430 = vsel %vm425, %v392, 0
        %v433 = vsel %vm425, %v393, 0
        %v436 = vsel %vm425, %v394, 0
        %v439 = vsel %vm425, %v395, 0
        %v442 = vsel %vm425, %v396, 0
        %v445 = vsel %vm425, %v397, 0
        %v448 = vsel %vm425, %v398, 0
        %v451 = vsel %vm425, %v399, 0
        %v454 = vsel %vm425, %v400, 0
        %v457 = vsel %vm425, %v401, 0
        %v460 = vsel %vm425, %v402, 0
        %v463 = vsel %vm425, %v403, 0
        %v466 = vsel %vm425, %v404, 0
        %v469 = vsel %vm425, %v405, 0
        %v472 = vsel %vm425, %v406, 0
        %vm474 = vcmask 1044480
        %vm475 = vcmask 1045504
        %v476 = vsel %vm474, 4294967295, 65535
        %v477 = vsel %vm475, %v476, 0
        %v479 = vand.u32 %v421, %v477
        %v482 = vand.u32 %v422, %v477
        %484 = vmatprep.subr.bf16.mxu0 %v420
        %485 = vmatpush1.bf16.msra.mxu0 %v419
        %486 = vmatprep.subr.bf16.mxu0 %v482
        %487 = vmatpush1.bf16.msra.mxu0 %v479
        %488 = vmatprep.subr.bf16.mxu0 0
        %489 = vmatpush1.bf16.msra.mxu0 0
        %490 = vmatprep.subr.bf16.mxu0 0
        %491 = vmatpush1.bf16.msra.mxu0 0
        %492 = vmatprep.subr.bf16.mxu0 0
        %493 = vmatpush1.bf16.msra.mxu0 0
        %494 = vmatprep.subr.bf16.mxu0 0
        %495 = vmatpush1.bf16.msra.mxu0 0
        %496 = vmatprep.subr.bf16.mxu0 0
        %497 = vmatpush1.bf16.msra.mxu0 0
        %498 = vmatprep.subr.bf16.mxu0 0
        %499 = vmatpush1.bf16.msra.mxu0 0
        %500 = vmatprep.subr.bf16.mxu0 0
        %501 = vmatpush1.bf16.msra.mxu0 0
        %502 = vmatprep.subr.bf16.mxu0 0
        %503 = vmatpush1.bf16.msra.mxu0 0
        %504 = vmatprep.subr.bf16.mxu0 0
        %505 = vmatpush1.bf16.msra.mxu0 0
        %506 = vmatprep.subr.bf16.mxu0 0
        %507 = vmatpush1.bf16.msra.mxu0 0
        %508 = vmatprep.subr.bf16.mxu0 0
        %509 = vmatpush1.bf16.msra.mxu0 0
        %510 = vmatprep.subr.bf16.mxu0 0
        %511 = vmatpush1.bf16.msra.mxu0 0
        %512 = vmatprep.subr.bf16.mxu0 0
        %513 = vmatpush1.bf16.msra.mxu0 0
        %514 = vmatprep.subr.bf16.mxu0 0
        %515 = vmatpush1.bf16.msra.mxu0 0
        %516 = vmatprep.mubr.bf16.mxu0 0
        %517 = vmatmul.mubr.bf16.gmra.mrb[0].mxu0 %v427
        %v518 = vpop.f32.mrb[0].mxu0
        %v519 = vadd.f32 %v320, %v518
        %v520 = vpop.f32.mrb[0].mxu0
        %v521 = vadd.f32 %v324, %v520
        %v522 = vpop.f32.mrb[0].mxu0
        %v523 = vadd.f32 %v320, %v522
        %v524 = vpop.f32.mrb[0].mxu0
        %v525 = vadd.f32 %v324, %v524
        %526 = vmatprep.mubr.bf16.mxu0 0
        %527 = vmatmul.mubr.bf16.gmra.mrb[0].mxu0 %v430
        %v528 = vpop.f32.mrb[0].mxu0
        %v529 = vadd.f32 %v320, %v528
        %v530 = vpop.f32.mrb[0].mxu0
        %v531 = vadd.f32 %v324, %v530
        %v532 = vpop.f32.mrb[0].mxu0
        %v533 = vadd.f32 %v320, %v532
        %v534 = vpop.f32.mrb[0].mxu0
        %v535 = vadd.f32 %v324, %v534
        %536 = vmatprep.mubr.bf16.mxu0 0
        %537 = vmatmul.mubr.bf16.gmra.mrb[0].mxu0 %v433
        %v538 = vpop.f32.mrb[0].mxu0
        %v539 = vadd.f32 %v320, %v538
        %v540 = vpop.f32.mrb[0].mxu0
        %v541 = vadd.f32 %v324, %v540
        %v542 = vpop.f32.mrb[0].mxu0
        %v543 = vadd.f32 %v320, %v542
        %v544 = vpop.f32.mrb[0].mxu0
        %v545 = vadd.f32 %v324, %v544
        %546 = vmatprep.mubr.bf16.mxu0 0
        %547 = vmatmul.mubr.bf16.gmra.mrb[0].mxu0 %v436
        %v548 = vpop.f32.mrb[0].mxu0
        %v549 = vadd.f32 %v320, %v548
        %v550 = vpop.f32.mrb[0].mxu0
        %v551 = vadd.f32 %v324, %v550
        %v552 = vpop.f32.mrb[0].mxu0
        %v553 = vadd.f32 %v320, %v552
        %v554 = vpop.f32.mrb[0].mxu0
        %v555 = vadd.f32 %v324, %v554
        %556 = vmatprep.mubr.bf16.mxu0 0
        %557 = vmatmul.mubr.bf16.gmra.mrb[0].mxu0 %v439
        %v558 = vpop.f32.mrb[0].mxu0
        %v559 = vadd.f32 %v320, %v558
        %v560 = vpop.f32.mrb[0].mxu0
        %v561 = vadd.f32 %v324, %v560
        %v562 = vpop.f32.mrb[0].mxu0
        %v563 = vadd.f32 %v320, %v562
        %v564 = vpop.f32.mrb[0].mxu0
        %v565 = vadd.f32 %v324, %v564
        %566 = vmatprep.mubr.bf16.mxu0 0
        %567 = vmatmul.mubr.bf16.gmra.mrb[0].mxu0 %v442
        %v568 = vpop.f32.mrb[0].mxu0
        %v569 = vadd.f32 %v320, %v568
        %v570 = vpop.f32.mrb[0].mxu0
        %v571 = vadd.f32 %v324, %v570
        %v572 = vpop.f32.mrb[0].mxu0
        %v573 = vadd.f32 %v320, %v572
        %v574 = vpop.f32.mrb[0].mxu0
        %v575 = vadd.f32 %v324, %v574
        %576 = vmatprep.mubr.bf16.mxu0 0
        %577 = vmatmul.mubr.bf16.gmra.mrb[0].mxu0 %v445
        %v578 = vpop.f32.mrb[0].mxu0
        %v579 = vadd.f32 %v320, %v578
        %v580 = vpop.f32.mrb[0].mxu0
        %v581 = vadd.f32 %v324, %v580
        %v582 = vpop.f32.mrb[0].mxu0
        %v583 = vadd.f32 %v320, %v582
        %v584 = vpop.f32.mrb[0].mxu0
        %v585 = vadd.f32 %v324, %v584
        %586 = vmatprep.mubr.bf16.mxu0 0
        %587 = vmatmul.mubr.bf16.gmra.mrb[0].mxu0 %v448
        %v588 = vpop.f32.mrb[0].mxu0
        %v589 = vadd.f32 %v320, %v588
        %v590 = vpop.f32.mrb[0].mxu0
        %v591 = vadd.f32 %v324, %v590
        %v592 = vpop.f32.mrb[0].mxu0
        %v593 = vadd.f32 %v320, %v592
        %v594 = vpop.f32.mrb[0].mxu0
        %v595 = vadd.f32 %v324, %v594
        %596 = vmatprep.mubr.bf16.mxu0 0
        %597 = vmatmul.mubr.bf16.gmra.mrb[0].mxu0 %v451
        %v598 = vpop.f32.mrb[0].mxu0
        %v599 = vadd.f32 %v320, %v598
        %v600 = vpop.f32.mrb[0].mxu0
        %v601 = vadd.f32 %v324, %v600
        %v602 = vpop.f32.mrb[0].mxu0
        %v603 = vadd.f32 %v320, %v602
        %v604 = vpop.f32.mrb[0].mxu0
        %v605 = vadd.f32 %v324, %v604
        %606 = vmatprep.mubr.bf16.mxu0 0
        %607 = vmatmul.mubr.bf16.gmra.mrb[0].mxu0 %v454
        %v608 = vpop.f32.mrb[0].mxu0
        %v609 = vadd.f32 %v320, %v608
        %v610 = vpop.f32.mrb[0].mxu0
        %v611 = vadd.f32 %v324, %v610
        %v612 = vpop.f32.mrb[0].mxu0
        %v613 = vadd.f32 %v320, %v612
        %v614 = vpop.f32.mrb[0].mxu0
        %v615 = vadd.f32 %v324, %v614
        %616 = vmatprep.mubr.bf16.mxu0 0
        %617 = vmatmul.mubr.bf16.gmra.mrb[0].mxu0 %v457
        %v618 = vpop.f32.mrb[0].mxu0
        %v619 = vadd.f32 %v320, %v618
        %v620 = vpop.f32.mrb[0].mxu0
        %v621 = vadd.f32 %v324, %v620
        %v622 = vpop.f32.mrb[0].mxu0
        %v623 = vadd.f32 %v320, %v622
        %v624 = vpop.f32.mrb[0].mxu0
        %v625 = vadd.f32 %v324, %v624
        %626 = vmatprep.mubr.bf16.mxu0 0
        %627 = vmatmul.mubr.bf16.gmra.mrb[0].mxu0 %v460
        %v628 = vpop.f32.mrb[0].mxu0
        %v629 = vadd.f32 %v320, %v628
        %v630 = vpop.f32.mrb[0].mxu0
        %v631 = vadd.f32 %v324, %v630
        %v632 = vpop.f32.mrb[0].mxu0
        %v633 = vadd.f32 %v320, %v632
        %v634 = vpop.f32.mrb[0].mxu0
        %v635 = vadd.f32 %v324, %v634
        %636 = vmatprep.mubr.bf16.mxu0 0
        %637 = vmatmul.mubr.bf16.gmra.mrb[0].mxu0 %v463
        %v638 = vpop.f32.mrb[0].mxu0
        %v639 = vadd.f32 %v320, %v638
        %v640 = vpop.f32.mrb[0].mxu0
        %v641 = vadd.f32 %v324, %v640
        %v642 = vpop.f32.mrb[0].mxu0
        %v643 = vadd.f32 %v320, %v642
        %v644 = vpop.f32.mrb[0].mxu0
        %v645 = vadd.f32 %v324, %v644
        %646 = vmatprep.mubr.bf16.mxu0 0
        %647 = vmatmul.mubr.bf16.gmra.mrb[0].mxu0 %v466
        %v648 = vpop.f32.mrb[0].mxu0
        %v649 = vadd.f32 %v320, %v648
        %v650 = vpop.f32.mrb[0].mxu0
        %v651 = vadd.f32 %v324, %v650
        %v652 = vpop.f32.mrb[0].mxu0
        %v653 = vadd.f32 %v320, %v652
        %v654 = vpop.f32.mrb[0].mxu0
        %v655 = vadd.f32 %v324, %v654
        %656 = vmatprep.mubr.bf16.mxu0 0
        %657 = vmatmul.mubr.bf16.gmra.mrb[0].mxu0 %v469
        %v658 = vpop.f32.mrb[0].mxu0
        %v659 = vadd.f32 %v320, %v658
        %v660 = vpop.f32.mrb[0].mxu0
        %v661 = vadd.f32 %v324, %v660
        %v662 = vpop.f32.mrb[0].mxu0
        %v663 = vadd.f32 %v320, %v662
        %v664 = vpop.f32.mrb[0].mxu0
        %v665 = vadd.f32 %v324, %v664
        %666 = vmatprep.mubr.bf16.mxu0 0
        %667 = vmatmul.mubr.bf16.gmra.mrb[0].mxu0 %v472
        %v668 = vpop.f32.mrb[0].mxu0
        %v669 = vadd.f32 %v320, %v668
        %v670 = vpop.f32.mrb[0].mxu0
        %v671 = vadd.f32 %v324, %v670
        %v672 = vpop.f32.mrb[0].mxu0
        %v673 = vadd.f32 %v320, %v672
        %v674 = vpop.f32.mrb[0].mxu0
        %v675 = vadd.f32 %v324, %v674
        %676 = vdwg.mxu0
        %v677 = vxor.u32 %v519, 2147483648
        %v678 = vxor.u32 %v521, 2147483648
        %v679 = vxor.u32 %v523, 2147483648
        %v680 = vxor.u32 %v525, 2147483648
        %v681 = vxor.u32 %v529, 2147483648
        %v682 = vxor.u32 %v531, 2147483648
        %v683 = vxor.u32 %v533, 2147483648
        %v684 = vxor.u32 %v535, 2147483648
        %v685 = vxor.u32 %v539, 2147483648
        %v686 = vxor.u32 %v541, 2147483648
        %v687 = vxor.u32 %v543, 2147483648
        %v688 = vxor.u32 %v545, 2147483648
        %v689 = vxor.u32 %v549, 2147483648
        %v690 = vxor.u32 %v551, 2147483648
        %v691 = vxor.u32 %v553, 2147483648
        %v692 = vxor.u32 %v555, 2147483648
        %v693 = vxor.u32 %v559, 2147483648
        %v694 = vxor.u32 %v561, 2147483648
        %v695 = vxor.u32 %v563, 2147483648
        %v696 = vxor.u32 %v565, 2147483648
        %v697 = vxor.u32 %v569, 2147483648
        %v698 = vxor.u32 %v571, 2147483648
        %v699 = vxor.u32 %v573, 2147483648
        %v700 = vxor.u32 %v575, 2147483648
        %v701 = vxor.u32 %v579, 2147483648
        %v702 = vxor.u32 %v581, 2147483648
        %v703 = vxor.u32 %v583, 2147483648
        %v704 = vxor.u32 %v585, 2147483648
        %v705 = vxor.u32 %v589, 2147483648
        %v706 = vxor.u32 %v591, 2147483648
        %v707 = vxor.u32 %v593, 2147483648
        %v708 = vxor.u32 %v595, 2147483648
        %v709 = vxor.u32 %v599, 2147483648
        %v710 = vxor.u32 %v601, 2147483648
        %v711 = vxor.u32 %v603, 2147483648
        %v712 = vxor.u32 %v605, 2147483648
        %v713 = vxor.u32 %v609, 2147483648
        %v714 = vxor.u32 %v611, 2147483648
        %v715 = vxor.u32 %v613, 2147483648
        %v716 = vxor.u32 %v615, 2147483648
        %v717 = vxor.u32 %v619, 2147483648
        %v718 = vxor.u32 %v621, 2147483648
        %v719 = vxor.u32 %v623, 2147483648
        %v720 = vxor.u32 %v625, 2147483648
        %v721 = vxor.u32 %v629, 2147483648
        %v722 = vxor.u32 %v631, 2147483648
        %v723 = vxor.u32 %v633, 2147483648
        %v724 = vxor.u32 %v635, 2147483648
        %v725 = vxor.u32 %v639, 2147483648
        %v726 = vxor.u32 %v641, 2147483648
        %v727 = vxor.u32 %v643, 2147483648
        %v728 = vxor.u32 %v645, 2147483648
        %v729 = vxor.u32 %v649, 2147483648
        %v730 = vxor.u32 %v651, 2147483648
        %v731 = vxor.u32 %v653, 2147483648
        %v732 = vxor.u32 %v655, 2147483648
        %v733 = vxor.u32 %v659, 2147483648
        %v734 = vxor.u32 %v661, 2147483648
        %v735 = vxor.u32 %v663, 2147483648
        %v736 = vxor.u32 %v665, 2147483648
        %v737 = vxor.u32 %v669, 2147483648
        %v738 = vxor.u32 %v671, 2147483648
        %v739 = vxor.u32 %v673, 2147483648
        %v740 = vxor.u32 %v675, 2147483648
        %v741 = vmul.f32 %v677, 1.442695
        %v742 = vpow.pop %v741
        %v743 = vmul.f32 %v678, 1.442695
        %v744 = vpow.pop %v743
        %v745 = vmul.f32 %v679, 1.442695
        %v746 = vpow.pop %v745
        %v747 = vmul.f32 %v680, 1.442695
        %v748 = vpow.pop %v747
        %v749 = vmul.f32 %v681, 1.442695
        %v750 = vpow.pop %v749
        %v751 = vmul.f32 %v682, 1.442695
        %v752 = vpow.pop %v751
        %v753 = vmul.f32 %v683, 1.442695
        %v754 = vpow.pop %v753
        %v755 = vmul.f32 %v684, 1.442695
        %v756 = vpow.pop %v755
        %v757 = vmul.f32 %v685, 1.442695
        %v758 = vpow.pop %v757
        %v759 = vmul.f32 %v686, 1.442695
        %v760 = vpow.pop %v759
        %v761 = vmul.f32 %v687, 1.442695
        %v762 = vpow.pop %v761
        %v763 = vmul.f32 %v688, 1.442695
        %v764 = vpow.pop %v763
        %v765 = vmul.f32 %v689, 1.442695
        %v766 = vpow.pop %v765
        %v767 = vmul.f32 %v690, 1.442695
        %v768 = vpow.pop %v767
        %v769 = vmul.f32 %v691, 1.442695
        %v770 = vpow.pop %v769
        %v771 = vmul.f32 %v692, 1.442695
        %v772 = vpow.pop %v771
        %v773 = vmul.f32 %v693, 1.442695
        %v774 = vpow.pop %v773
        %v775 = vmul.f32 %v694, 1.442695
        %v776 = vpow.pop %v775
        %v777 = vmul.f32 %v695, 1.442695
        %v778 = vpow.pop %v777
        %v779 = vmul.f32 %v696, 1.442695
        %v780 = vpow.pop %v779
        %v781 = vmul.f32 %v697, 1.442695
        %v782 = vpow.pop %v781
        %v783 = vmul.f32 %v698, 1.442695
        %v784 = vpow.pop %v783
        %v785 = vmul.f32 %v699, 1.442695
        %v786 = vpow.pop %v785
        %v787 = vmul.f32 %v700, 1.442695
        %v788 = vpow.pop %v787
        %v789 = vmul.f32 %v701, 1.442695
        %v790 = vpow.pop %v789
        %v791 = vmul.f32 %v702, 1.442695
        %v792 = vpow.pop %v791
        %v793 = vmul.f32 %v703, 1.442695
        %v794 = vpow.pop %v793
        %v795 = vmul.f32 %v704, 1.442695
        %v796 = vpow.pop %v795
        %v797 = vmul.f32 %v705, 1.442695
        %v798 = vpow.pop %v797
        %v799 = vmul.f32 %v706, 1.442695
        %v800 = vpow.pop %v799
        %v801 = vmul.f32 %v707, 1.442695
        %v802 = vpow.pop %v801
        %v803 = vmul.f32 %v708, 1.442695
        %v804 = vpow.pop %v803
        %v805 = vmul.f32 %v709, 1.442695
        %v806 = vpow.pop %v805
        %v807 = vmul.f32 %v710, 1.442695
        %v808 = vpow.pop %v807
        %v809 = vmul.f32 %v711, 1.442695
        %v810 = vpow.pop %v809
        %v811 = vmul.f32 %v712, 1.442695
        %v812 = vpow.pop %v811
        %v813 = vmul.f32 %v713, 1.442695
        %v814 = vpow.pop %v813
        %v815 = vmul.f32 %v714, 1.442695
        %v816 = vpow.pop %v815
        %v817 = vmul.f32 %v715, 1.442695
        %v818 = vpow.pop %v817
        %v819 = vmul.f32 %v716, 1.442695
        %v820 = vpow.pop %v819
        %v821 = vmul.f32 %v717, 1.442695
        %v822 = vpow.pop %v821
        %v823 = vmul.f32 %v718, 1.442695
        %v824 = vpow.pop %v823
        %v825 = vmul.f32 %v719, 1.442695
        %v826 = vpow.pop %v825
        %v827 = vmul.f32 %v720, 1.442695
        %v828 = vpow.pop %v827
        %v829 = vmul.f32 %v721, 1.442695
        %v830 = vpow.pop %v829
        %v831 = vmul.f32 %v722, 1.442695
        %v832 = vpow.pop %v831
        %v833 = vmul.f32 %v723, 1.442695
        %v834 = vpow.pop %v833
        %v835 = vmul.f32 %v724, 1.442695
        %v836 = vpow.pop %v835
        %v837 = vmul.f32 %v725, 1.442695
        %v838 = vpow.pop %v837
        %v839 = vmul.f32 %v726, 1.442695
        %v840 = vpow.pop %v839
        %v841 = vmul.f32 %v727, 1.442695
        %v842 = vpow.pop %v841
        %v843 = vmul.f32 %v728, 1.442695
        %v844 = vpow.pop %v843
        %v845 = vmul.f32 %v729, 1.442695
        %v846 = vpow.pop %v845
        %v847 = vmul.f32 %v730, 1.442695
        %v848 = vpow.pop %v847
        %v849 = vmul.f32 %v731, 1.442695
        %v850 = vpow.pop %v849
        %v851 = vmul.f32 %v732, 1.442695
        %v852 = vpow.pop %v851
        %v853 = vmul.f32 %v733, 1.442695
        %v854 = vpow.pop %v853
        %v855 = vmul.f32 %v734, 1.442695
        %v856 = vpow.pop %v855
        %v857 = vmul.f32 %v735, 1.442695
        %v858 = vpow.pop %v857
        %v859 = vmul.f32 %v736, 1.442695
        %v860 = vpow.pop %v859
        %v861 = vmul.f32 %v737, 1.442695
        %v862 = vpow.pop %v861
        %v863 = vmul.f32 %v738, 1.442695
        %v864 = vpow.pop %v863
        %v865 = vmul.f32 %v739, 1.442695
        %v866 = vpow.pop %v865
        %v867 = vmul.f32 %v740, 1.442695
        %v868 = vpow.pop %v867
        %v869 = vadd.f32 %v742, 1.0
        %v870 = vadd.f32 %v744, 1.0
        %v871 = vadd.f32 %v746, 1.0
        %v872 = vadd.f32 %v748, 1.0
        %v873 = vadd.f32 %v750, 1.0
        %v874 = vadd.f32 %v752, 1.0
        %v875 = vadd.f32 %v754, 1.0
        %v876 = vadd.f32 %v756, 1.0
        %v877 = vadd.f32 %v758, 1.0
        %v878 = vadd.f32 %v760, 1.0
        %v879 = vadd.f32 %v762, 1.0
        %v880 = vadd.f32 %v764, 1.0
        %v881 = vadd.f32 %v766, 1.0
        %v882 = vadd.f32 %v768, 1.0
        %v883 = vadd.f32 %v770, 1.0
        %v884 = vadd.f32 %v772, 1.0
        %v885 = vadd.f32 %v774, 1.0
        %v886 = vadd.f32 %v776, 1.0
        %v887 = vadd.f32 %v778, 1.0
        %v888 = vadd.f32 %v780, 1.0
        %v889 = vadd.f32 %v782, 1.0
        %v890 = vadd.f32 %v784, 1.0
        %v891 = vadd.f32 %v786, 1.0
        %v892 = vadd.f32 %v788, 1.0
        %v893 = vadd.f32 %v790, 1.0
        %v894 = vadd.f32 %v792, 1.0
        %v895 = vadd.f32 %v794, 1.0
        %v896 = vadd.f32 %v796, 1.0
        %v897 = vadd.f32 %v798, 1.0
        %v898 = vadd.f32 %v800, 1.0
        %v899 = vadd.f32 %v802, 1.0
        %v900 = vadd.f32 %v804, 1.0
        %v901 = vadd.f32 %v806, 1.0
        %v902 = vadd.f32 %v808, 1.0
        %v903 = vadd.f32 %v810, 1.0
        %v904 = vadd.f32 %v812, 1.0
        %v905 = vadd.f32 %v814, 1.0
        %v906 = vadd.f32 %v816, 1.0
        %v907 = vadd.f32 %v818, 1.0
        %v908 = vadd.f32 %v820, 1.0
        %v909 = vadd.f32 %v822, 1.0
        %v910 = vadd.f32 %v824, 1.0
        %v911 = vadd.f32 %v826, 1.0
        %v912 = vadd.f32 %v828, 1.0
        %v913 = vadd.f32 %v830, 1.0
        %v914 = vadd.f32 %v832, 1.0
        %v915 = vadd.f32 %v834, 1.0
        %v916 = vadd.f32 %v836, 1.0
        %v917 = vadd.f32 %v838, 1.0
        %v918 = vadd.f32 %v840, 1.0
        %v919 = vadd.f32 %v842, 1.0
        %v920 = vadd.f32 %v844, 1.0
        %v921 = vadd.f32 %v846, 1.0
        %v922 = vadd.f32 %v848, 1.0
        %v923 = vadd.f32 %v850, 1.0
        %v924 = vadd.f32 %v852, 1.0
        %v925 = vadd.f32 %v854, 1.0
        %v926 = vadd.f32 %v856, 1.0
        %v927 = vadd.f32 %v858, 1.0
        %v928 = vadd.f32 %v860, 1.0
        %v929 = vadd.f32 %v862, 1.0
        %v930 = vadd.f32 %v864, 1.0
        %v931 = vadd.f32 %v866, 1.0
        %v932 = vadd.f32 %v868, 1.0
        %v933 = vrcp.pop %v869
        %v934 = vmul.f32 1.0, %v933
        %v935 = vrcp.pop %v870
        %v936 = vmul.f32 1.0, %v935
        %v937 = vrcp.pop %v871
        %v938 = vmul.f32 1.0, %v937
        %v939 = vrcp.pop %v872
        %v940 = vmul.f32 1.0, %v939
        %v941 = vrcp.pop %v873
        %v942 = vmul.f32 1.0, %v941
        %v943 = vrcp.pop %v874
        %v944 = vmul.f32 1.0, %v943
        %v945 = vrcp.pop %v875
        %v946 = vmul.f32 1.0, %v945
        %v947 = vrcp.pop %v876
        %v948 = vmul.f32 1.0, %v947
        %v949 = vrcp.pop %v877
        %v950 = vmul.f32 1.0, %v949
        %v951 = vrcp.pop %v878
        %v952 = vmul.f32 1.0, %v951
        %v953 = vrcp.pop %v879
        %v954 = vmul.f32 1.0, %v953
        %v955 = vrcp.pop %v880
        %v956 = vmul.f32 1.0, %v955
        %v957 = vrcp.pop %v881
        %v958 = vmul.f32 1.0, %v957
        %v959 = vrcp.pop %v882
        %v960 = vmul.f32 1.0, %v959
        %v961 = vrcp.pop %v883
        %v962 = vmul.f32 1.0, %v961
        %v963 = vrcp.pop %v884
        %v964 = vmul.f32 1.0, %v963
        %v965 = vrcp.pop %v885
        %v966 = vmul.f32 1.0, %v965
        %v967 = vrcp.pop %v886
        %v968 = vmul.f32 1.0, %v967
        %v969 = vrcp.pop %v887
        %v970 = vmul.f32 1.0, %v969
        %v971 = vrcp.pop %v888
        %v972 = vmul.f32 1.0, %v971
        %v973 = vrcp.pop %v889
        %v974 = vmul.f32 1.0, %v973
        %v975 = vrcp.pop %v890
        %v976 = vmul.f32 1.0, %v975
        %v977 = vrcp.pop %v891
        %v978 = vmul.f32 1.0, %v977
        %v979 = vrcp.pop %v892
        %v980 = vmul.f32 1.0, %v979
        %v981 = vrcp.pop %v893
        %v982 = vmul.f32 1.0, %v981
        %v983 = vrcp.pop %v894
        %v984 = vmul.f32 1.0, %v983
        %v985 = vrcp.pop %v895
        %v986 = vmul.f32 1.0, %v985
        %v987 = vrcp.pop %v896
        %v988 = vmul.f32 1.0, %v987
        %v989 = vrcp.pop %v897
        %v990 = vmul.f32 1.0, %v989
        %v991 = vrcp.pop %v898
        %v992 = vmul.f32 1.0, %v991
        %v993 = vrcp.pop %v899
        %v994 = vmul.f32 1.0, %v993
        %v995 = vrcp.pop %v900
        %v996 = vmul.f32 1.0, %v995
        %v997 = vrcp.pop %v901
        %v998 = vmul.f32 1.0, %v997
        %v999 = vrcp.pop %v902
        %v1000 = vmul.f32 1.0, %v999
        %v1001 = vrcp.pop %v903
        %v1002 = vmul.f32 1.0, %v1001
        %v1003 = vrcp.pop %v904
        %v1004 = vmul.f32 1.0, %v1003
        %v1005 = vrcp.pop %v905
        %v1006 = vmul.f32 1.0, %v1005
        %v1007 = vrcp.pop %v906
        %v1008 = vmul.f32 1.0, %v1007
        %v1009 = vrcp.pop %v907
        %v1010 = vmul.f32 1.0, %v1009
        %v1011 = vrcp.pop %v908
        %v1012 = vmul.f32 1.0, %v1011
        %v1013 = vrcp.pop %v909
        %v1014 = vmul.f32 1.0, %v1013
        %v1015 = vrcp.pop %v910
        %v1016 = vmul.f32 1.0, %v1015
        %v1017 = vrcp.pop %v911
        %v1018 = vmul.f32 1.0, %v1017
        %v1019 = vrcp.pop %v912
        %v1020 = vmul.f32 1.0, %v1019
        %v1021 = vrcp.pop %v913
        %v1022 = vmul.f32 1.0, %v1021
        %v1023 = vrcp.pop %v914
        %v1024 = vmul.f32 1.0, %v1023
        %v1025 = vrcp.pop %v915
        %v1026 = vmul.f32 1.0, %v1025
        %v1027 = vrcp.pop %v916
        %v1028 = vmul.f32 1.0, %v1027
        %v1029 = vrcp.pop %v917
        %v1030 = vmul.f32 1.0, %v1029
        %v1031 = vrcp.pop %v918
        %v1032 = vmul.f32 1.0, %v1031
        %v1033 = vrcp.pop %v919
        %v1034 = vmul.f32 1.0, %v1033
        %v1035 = vrcp.pop %v920
        %v1036 = vmul.f32 1.0, %v1035
        %v1037 = vrcp.pop %v921
        %v1038 = vmul.f32 1.0, %v1037
        %v1039 = vrcp.pop %v922
        %v1040 = vmul.f32 1.0, %v1039
        %v1041 = vrcp.pop %v923
        %v1042 = vmul.f32 1.0, %v1041
        %v1043 = vrcp.pop %v924
        %v1044 = vmul.f32 1.0, %v1043
        %v1045 = vrcp.pop %v925
        %v1046 = vmul.f32 1.0, %v1045
        %v1047 = vrcp.pop %v926
        %v1048 = vmul.f32 1.0, %v1047
        %v1049 = vrcp.pop %v927
        %v1050 = vmul.f32 1.0, %v1049
        %v1051 = vrcp.pop %v928
        %v1052 = vmul.f32 1.0, %v1051
        %v1053 = vrcp.pop %v929
        %v1054 = vmul.f32 1.0, %v1053
        %v1055 = vrcp.pop %v930
        %v1056 = vmul.f32 1.0, %v1055
        %v1057 = vrcp.pop %v931
        %v1058 = vmul.f32 1.0, %v1057
        %v1059 = vrcp.pop %v932
        %v1060 = vmul.f32 1.0, %v1059
        %v1061 = vmul.f32 %v519, %v934
        %v1062 = vmul.f32 %v521, %v936
        %v1063 = vmul.f32 %v523, %v938
        %v1064 = vmul.f32 %v525, %v940
        %v1065 = vmul.f32 %v529, %v942
        %v1066 = vmul.f32 %v531, %v944
        %v1067 = vmul.f32 %v533, %v946
        %v1068 = vmul.f32 %v535, %v948
        %v1069 = vmul.f32 %v539, %v950
        %v1070 = vmul.f32 %v541, %v952
        %v1071 = vmul.f32 %v543, %v954
        %v1072 = vmul.f32 %v545, %v956
        %v1073 = vmul.f32 %v549, %v958
        %v1074 = vmul.f32 %v551, %v960
        %v1075 = vmul.f32 %v553, %v962
        %v1076 = vmul.f32 %v555, %v964
        %v1077 = vmul.f32 %v559, %v966
        %v1078 = vmul.f32 %v561, %v968
        %v1079 = vmul.f32 %v563, %v970
        %v1080 = vmul.f32 %v565, %v972
        %v1081 = vmul.f32 %v569, %v974
        %v1082 = vmul.f32 %v571, %v976
        %v1083 = vmul.f32 %v573, %v978
        %v1084 = vmul.f32 %v575, %v980
        %v1085 = vmul.f32 %v579, %v982
        %v1086 = vmul.f32 %v581, %v984
        %v1087 = vmul.f32 %v583, %v986
        %v1088 = vmul.f32 %v585, %v988
        %v1089 = vmul.f32 %v589, %v990
        %v1090 = vmul.f32 %v591, %v992
        %v1091 = vmul.f32 %v593, %v994
        %v1092 = vmul.f32 %v595, %v996
        %v1093 = vmul.f32 %v599, %v998
        %v1094 = vmul.f32 %v601, %v1000
        %v1095 = vmul.f32 %v603, %v1002
        %v1096 = vmul.f32 %v605, %v1004
        %v1097 = vmul.f32 %v609, %v1006
        %v1098 = vmul.f32 %v611, %v1008
        %v1099 = vmul.f32 %v613, %v1010
        %v1100 = vmul.f32 %v615, %v1012
        %v1101 = vmul.f32 %v619, %v1014
        %v1102 = vmul.f32 %v621, %v1016
        %v1103 = vmul.f32 %v623, %v1018
        %v1104 = vmul.f32 %v625, %v1020
        %v1105 = vmul.f32 %v629, %v1022
        %v1106 = vmul.f32 %v631, %v1024
        %v1107 = vmul.f32 %v633, %v1026
        %v1108 = vmul.f32 %v635, %v1028
        %v1109 = vmul.f32 %v639, %v1030
        %v1110 = vmul.f32 %v641, %v1032
        %v1111 = vmul.f32 %v643, %v1034
        %v1112 = vmul.f32 %v645, %v1036
        %v1113 = vmul.f32 %v649, %v1038
        %v1114 = vmul.f32 %v651, %v1040
        %v1115 = vmul.f32 %v653, %v1042
        %v1116 = vmul.f32 %v655, %v1044
        %v1117 = vmul.f32 %v659, %v1046
        %v1118 = vmul.f32 %v661, %v1048
        %v1119 = vmul.f32 %v663, %v1050
        %v1120 = vmul.f32 %v665, %v1052
        %v1121 = vmul.f32 %v669, %v1054
        %v1122 = vmul.f32 %v671, %v1056
        %v1123 = vmul.f32 %v673, %v1058
        %v1124 = vmul.f32 %v675, %v1060
        %v1125 = vld [vmem:[#allocation2] sm:$0xff]
        %v1126 = vadd.f32 %v1061, %v1063
        %v1127 = vadd.f32 %v1126, %v1065
        %v1128 = vadd.f32 %v1127, %v1067
        %v1129 = vadd.f32 %v1128, %v1069
        %v1130 = vadd.f32 %v1129, %v1071
        %v1131 = vadd.f32 %v1130, %v1073
        %v1132 = vadd.f32 %v1131, %v1075
        %v1133 = vrot.slane %v1132, 4
        %v1134 = vadd.f32 %v1132, %v1133
        %v1135 = vrot.slane %v1134, 2
        %v1136 = vadd.f32 %v1134, %v1135
        %v1137 = vrot.slane %v1136, 1
        %v1138 = vadd.f32 %v1136, %v1137
        %v1139 = vadd.f32 %v1062, %v1064
        %v1140 = vadd.f32 %v1139, %v1066
        %v1141 = vadd.f32 %v1140, %v1068
        %v1142 = vadd.f32 %v1141, %v1070
        %v1143 = vadd.f32 %v1142, %v1072
        %v1144 = vadd.f32 %v1143, %v1074
        %v1145 = vadd.f32 %v1144, %v1076
        %v1146 = vrot.slane %v1145, 4
        %v1147 = vadd.f32 %v1145, %v1146
        %v1148 = vrot.slane %v1147, 2
        %v1149 = vadd.f32 %v1147, %v1148
        %v1150 = vrot.slane %v1149, 1
        %v1151 = vadd.f32 %v1149, %v1150
        %v1152 = vadd.f32 %v1077, %v1079
        %v1153 = vadd.f32 %v1152, %v1081
        %v1154 = vadd.f32 %v1153, %v1083
        %v1155 = vadd.f32 %v1154, %v1085
        %v1156 = vadd.f32 %v1155, %v1087
        %v1157 = vadd.f32 %v1156, %v1089
        %v1158 = vadd.f32 %v1157, %v1091
        %v1159 = vrot.slane %v1158, 4
        %v1160 = vadd.f32 %v1158, %v1159
        %v1161 = vrot.slane %v1160, 2
        %v1162 = vadd.f32 %v1160, %v1161
        %v1163 = vrot.slane %v1162, 1
        %v1164 = vadd.f32 %v1162, %v1163
        %v1165 = vadd.f32 %v1078, %v1080
        %v1166 = vadd.f32 %v1165, %v1082
        %v1167 = vadd.f32 %v1166, %v1084
        %v1168 = vadd.f32 %v1167, %v1086
        %v1169 = vadd.f32 %v1168, %v1088
        %v1170 = vadd.f32 %v1169, %v1090
        %v1171 = vadd.f32 %v1170, %v1092
        %v1172 = vrot.slane %v1171, 4
        %v1173 = vadd.f32 %v1171, %v1172
        %v1174 = vrot.slane %v1173, 2
        %v1175 = vadd.f32 %v1173, %v1174
        %v1176 = vrot.slane %v1175, 1
        %v1177 = vadd.f32 %v1175, %v1176
        %v1178 = vadd.f32 %v1093, %v1095
        %v1179 = vadd.f32 %v1178, %v1097
        %v1180 = vadd.f32 %v1179, %v1099
        %v1181 = vadd.f32 %v1180, %v1101
        %v1182 = vadd.f32 %v1181, %v1103
        %v1183 = vadd.f32 %v1182, %v1105
        %v1184 = vadd.f32 %v1183, %v1107
        %v1185 = vrot.slane %v1184, 4
        %v1186 = vadd.f32 %v1184, %v1185
        %v1187 = vrot.slane %v1186, 2
        %v1188 = vadd.f32 %v1186, %v1187
        %v1189 = vrot.slane %v1188, 1
        %v1190 = vadd.f32 %v1188, %v1189
        %v1191 = vadd.f32 %v1094, %v1096
        %v1192 = vadd.f32 %v1191, %v1098
        %v1193 = vadd.f32 %v1192, %v1100
        %v1194 = vadd.f32 %v1193, %v1102
        %v1195 = vadd.f32 %v1194, %v1104
        %v1196 = vadd.f32 %v1195, %v1106
        %v1197 = vadd.f32 %v1196, %v1108
        %v1198 = vrot.slane %v1197, 4
        %v1199 = vadd.f32 %v1197, %v1198
        %v1200 = vrot.slane %v1199, 2
        %v1201 = vadd.f32 %v1199, %v1200
        %v1202 = vrot.slane %v1201, 1
        %v1203 = vadd.f32 %v1201, %v1202
        %v1204 = vadd.f32 %v1109, %v1111
        %v1205 = vadd.f32 %v1204, %v1113
        %v1206 = vadd.f32 %v1205, %v1115
        %v1207 = vadd.f32 %v1206, %v1117
        %v1208 = vadd.f32 %v1207, %v1119
        %v1209 = vadd.f32 %v1208, %v1121
        %v1210 = vadd.f32 %v1209, %v1123
        %v1211 = vrot.slane %v1210, 4
        %v1212 = vadd.f32 %v1210, %v1211
        %v1213 = vrot.slane %v1212, 2
        %v1214 = vadd.f32 %v1212, %v1213
        %v1215 = vrot.slane %v1214, 1
        %v1216 = vadd.f32 %v1214, %v1215
        %v1217 = vadd.f32 %v1110, %v1112
        %v1218 = vadd.f32 %v1217, %v1114
        %v1219 = vadd.f32 %v1218, %v1116
        %v1220 = vadd.f32 %v1219, %v1118
        %v1221 = vadd.f32 %v1220, %v1120
        %v1222 = vadd.f32 %v1221, %v1122
        %v1223 = vadd.f32 %v1222, %v1124
        %v1224 = vrot.slane %v1223, 4
        %v1225 = vadd.f32 %v1223, %v1224
        %v1226 = vrot.slane %v1225, 2
        %v1227 = vadd.f32 %v1225, %v1226
        %v1228 = vrot.slane %v1227, 1
        %v1229 = vadd.f32 %v1227, %v1228
        %v1238 = vcombine.low %v1138, %v1151
        %v1239 = vcombine.low %v1164, %v1177
        %v1240 = vcombine.low %v1190, %v1203
        %v1241 = vcombine.low %v1216, %v1229
        %v1242 = vrot.slane %v1239, 7
        %vm1243 = vcmask 1041409
        %v1244 = vsel %vm1243, %v1242, %v1238
        %vm1245 = vcmask 1045509
        %v1246 = vsel %vm1245, %v1242, %v1244
        %v1247 = vrot.slane %v1240, 6
        %vm1248 = vcmask 1042434
        %v1249 = vsel %vm1248, %v1247, %v1246
        %vm1250 = vcmask 1046534
        %v1251 = vsel %vm1250, %v1247, %v1249
        %v1252 = vrot.slane %v1241, 5
        %vm1253 = vcmask 1043459
        %v1254 = vsel %vm1253, %v1252, %v1251
        %vm1255 = vcmask 1047559
        %v1256 = vsel %vm1255, %v1252, %v1254
        %v1258 = vadd.f32 %v1125, %v1256
        %1259 = vst [vmem:[#allocation2] sm:$0xff] %v1258
        // Predicated region
        $region75: #{siamese_forward.2} parent=65 // pred_check
          %p1260 = pneg %p274
        $region76: #{siamese_forward.2} parent=65 // pred_check_branch
          %1262 = sbr.rel (%p1260) target = $region78
        $region77: #{siamese_forward.2} parent=65 // pred_region
          %v1263 = vld [vmem:[#allocation2] sm:$0xff]
          %v1264 = vmul.f32 %v1263, 0.015625
          %1265 = vst [vmem:[%s271] sm:$0xff] %v1264
        $region78: #{siamese_forward.2} parent=65 // pred_fallthru
          _
        %s1266 = smul.u32 2, %s18
        %p1267 = scmp.lt.s32.totalorder %s1266, 9
        %s1268 = scalar_select %p1267, %s1266, 9
        %s1269 = smul.addr %s1268, 4
        %s1270 = scalar_lea.vmem %s3, %s1269
        // Predicated region
        $region79: #{siamese_forward.2} parent=65 // pred_check
          %p1271 = pneg %p122
        $region80: #{siamese_forward.2} parent=65 // pred_check_branch
          %1273 = sbr.rel (%p1271) target = $region82
        $region81: #{siamese_forward.2} parent=65 // pred_region
          %s1274 = smul.u32 2, %s18
        $region82: #{siamese_forward.2} parent=65 // pred_fallthru
          _
      $region66: #{siamese_forward.2} parent=5 // pred_fallthru
        _
      %p1275 = scmp.le.s32.totalorder 2, %s9
      // Predicated region
      $region83: #{siamese_forward.2} parent=5 // pred_check
        %p1276 = pneg %p1275
      $region84: #{siamese_forward.2} parent=5 // pred_check_branch
        %1278 = sbr.rel (%p1276) target = $region86
      $region85: #{siamese_forward.2} parent=5 // pred_region
        %s1279 = ssub.s32 %s9, 2
        // Predicated region
        $region87: #{siamese_forward.2} parent=85 // pred_check
          %p1280 = pneg %p128
        $region88: #{siamese_forward.2} parent=85 // pred_check_branch
          %1282 = sbr.rel (%p1280) target = $region90
        $region89: #{siamese_forward.2} parent=85 // pred_region
          %s1283 = smul.u32 2, %s20
          %p1284 = scmp.lt.s32.totalorder %s1283, 9
          %s1285 = scalar_select %p1284, %s1283, 9
          %s1286 = smul.addr %s1285, 4
          %s1287 = scalar_lea.vmem %s3, %s1286
        $region90: #{siamese_forward.2} parent=85 // pred_fallthru
          _
      $region86: #{siamese_forward.2} parent=5 // pred_fallthru
        _
    $region6: #{siamese_forward.2} parent=1 // loop_footer
      %s13 = sadd.s32 1, %s9
    $region7: #{siamese_forward.2} parent=1 // loop_footer_branch
      %8 = sbr.rel target = $region3
    $region8: #{siamese_forward.2} parent=1 // loop_exit
      _

// kernel: siamese_forward.3
$region0: #{siamese_forward.3}
  #allocation0 [shape = 'u32[]', space=smem, size = 0x4, offset = 0x4, fixed_abs, tag = 'smem constant byte address 0x4 - core index']
  #allocation1 [shape = 'u32[144,128]{1,0:T(1,128)}', space=vmem, size = 0x12000, scoped, tag = 'internal scratch']
  #allocation2 [shape = 'f32[1,1]{1,0:T(1,128)S(1)}', space=vmem, size = 0x200, scoped, tag = 'scoped memory for siamese_forward.3']
  %s0 = inlined_call_operand.vmem [shape: f32[4,1280], index: 0, kind: input, shape index: {}]
  %s1 = inlined_call_operand.vmem [shape: bf16[1280,512], index: 1, kind: input, shape index: {}]
  %s2 = inlined_call_operand.vmem [shape: f32[1,512], index: 2, kind: input, shape index: {}]
  %s3 = inlined_call_operand.vmem [shape: bf16[512,128], index: 3, kind: input, shape index: {}]
  %s4 = inlined_call_operand.vmem [shape: f32[1,128], index: 4, kind: input, shape index: {}]
  %s5 = inlined_call_operand.vmem [shape: f32[1,128], index: 5, kind: input, shape index: {}]
  %s6 = inlined_call_operand.<no memory space> [shape: f32[1,1], index: 6, kind: input, shape index: {}]
  %s7 = inlined_call_operand.vmem [shape: f32[2,1], index: 7, kind: output, shape index: {}]
  %s8 = sld [smem:[#allocation0]]
  $region38: #{siamese_forward.3} parent=0
    _
  %s10 = ssub.s32 1, %s8
  %s11 = scalar_select 0, %s10, %s8
  %v12 = vstv %s6
  %13 = vst [vmem:[#allocation2] sm:$0x1] %v12
  // Predicated region
  $region2: #{siamese_forward.3} parent=0 // pred_check
    _
  $region3: #{siamese_forward.3} parent=0 // pred_check_branch
    %15 = sbr.rel (0) target = $region5
  $region4: #{siamese_forward.3} parent=0 // pred_region
    _
  $region5: #{siamese_forward.3} parent=0 // pred_fallthru
    _
  // Predicated region
  $region6: #{siamese_forward.3} parent=0 // pred_check
    _
  $region7: #{siamese_forward.3} parent=0 // pred_check_branch
    %17 = sbr.rel (0) target = $region9
  $region8: #{siamese_forward.3} parent=0 // pred_region
    _
  $region9: #{siamese_forward.3} parent=0 // pred_fallthru
    _
  // Predicated region
  $region10: #{siamese_forward.3} parent=0 // pred_check
    _
  $region11: #{siamese_forward.3} parent=0 // pred_check_branch
    %19 = sbr.rel (0) target = $region13
  $region12: #{siamese_forward.3} parent=0 // pred_region
    _
  $region13: #{siamese_forward.3} parent=0 // pred_fallthru
    _
  // Predicated region
  $region14: #{siamese_forward.3} parent=0 // pred_check
    _
  $region15: #{siamese_forward.3} parent=0 // pred_check_branch
    %21 = sbr.rel (0) target = $region17
  $region16: #{siamese_forward.3} parent=0 // pred_region
    _
  $region17: #{siamese_forward.3} parent=0 // pred_fallthru
    _
  // Predicated region
  $region18: #{siamese_forward.3} parent=0 // pred_check
    _
  $region19: #{siamese_forward.3} parent=0 // pred_check_branch
    %23 = sbr.rel (0) target = $region21
  $region20: #{siamese_forward.3} parent=0 // pred_region
    _
  $region21: #{siamese_forward.3} parent=0 // pred_fallthru
    _
  // Predicated region
  $region22: #{siamese_forward.3} parent=0 // pred_check
    _
  $region23: #{siamese_forward.3} parent=0 // pred_check_branch
    %25 = sbr.rel (0) target = $region25
  $region24: #{siamese_forward.3} parent=0 // pred_region
    _
  $region25: #{siamese_forward.3} parent=0 // pred_fallthru
    _
  // Predicated region
  $region26: #{siamese_forward.3} parent=0 // pred_check
    _
  $region27: #{siamese_forward.3} parent=0 // pred_check_branch
    %27 = sbr.rel (0) target = $region29
  $region28: #{siamese_forward.3} parent=0 // pred_region
    _
  $region29: #{siamese_forward.3} parent=0 // pred_fallthru
    _
  %v29 = vld [vmem:[%s0] sm:$0xff]
  %v30 = vld [vmem:[%s0 + $0x8] sm:$0xff]
  %v31 = vld [vmem:[%s0 + $0x10] sm:$0xff]
  %v32 = vld [vmem:[%s0 + $0x18] sm:$0xff]
  %v33 = vld [vmem:[%s0 + $0x20] sm:$0xff]
  %v39 = vcombine.high %v29, %v29
  %v40 = vcombine.high %v30, %v30
  %v41 = vcombine.high %v31, %v31
  %v42 = vcombine.high %v32, %v32
  %v43 = vcombine.high %v33, %v33
  %v49 = vpack.c.bf16 %v29, %v29
  %v50 = vpack.c.bf16 %v39, %v39
  %v51 = vpack.c.bf16 %v30, %v30
  %v52 = vpack.c.bf16 %v40, %v40
  %v53 = vpack.c.bf16 %v31, %v31
  %v54 = vpack.c.bf16 %v41, %v41
  %v55 = vpack.c.bf16 %v32, %v32
  %v56 = vpack.c.bf16 %v42, %v42
  %v57 = vpack.c.bf16 %v33, %v33
  %v58 = vpack.c.bf16 %v43, %v43
  %v59 = vld [vmem:[%s1] sm:$0xff]
  %v60 = vld [vmem:[%s1 + $0x8] sm:$0xff]
  %v61 = vld [vmem:[%s1 + $0x10] sm:$0xff]
  %v62 = vld [vmem:[%s1 + $0x18] sm:$0xff]
  %v63 = vld [vmem:[%s1 + $0x20] sm:$0xff]
  %v64 = vld [vmem:[%s1 + $0x28] sm:$0xff]
  %v65 = vld [vmem:[%s1 + $0x30] sm:$0xff]
  %v66 = vld [vmem:[%s1 + $0x38] sm:$0xff]
  %v67 = vld [vmem:[%s1 + $0x40] sm:$0xff]
  %v68 = vld [vmem:[%s1 + $0x48] sm:$0xff]
  %v69 = vld [vmem:[%s1 + $0x50] sm:$0xff]
  %v70 = vld [vmem:[%s1 + $0x58] sm:$0xff]
  %v71 = vld [vmem:[%s1 + $0x60] sm:$0xff]
  %v72 = vld [vmem:[%s1 + $0x68] sm:$0xff]
  %v73 = vld [vmem:[%s1 + $0x70] sm:$0xff]
  %v74 = vld [vmem:[%s1 + $0x78] sm:$0xff]
  %v75 = vld [vmem:[%s1 + $0x80] sm:$0xff]
  %v76 = vld [vmem:[%s1 + $0x88] sm:$0xff]
  %v77 = vld [vmem:[%s1 + $0x90] sm:$0xff]
  %v78 = vld [vmem:[%s1 + $0x98] sm:$0xff]
  %v79 = vld [vmem:[%s1 + $0xa0] sm:$0xff]
  %v80 = vld [vmem:[%s1 + $0xa8] sm:$0xff]
  %v81 = vld [vmem:[%s1 + $0xb0] sm:$0xff]
  %v82 = vld [vmem:[%s1 + $0xb8] sm:$0xff]
  %v83 = vld [vmem:[%s1 + $0xc0] sm:$0xff]
  %v84 = vld [vmem:[%s1 + $0xc8] sm:$0xff]
  %v85 = vld [vmem:[%s1 + $0xd0] sm:$0xff]
  %v86 = vld [vmem:[%s1 + $0xd8] sm:$0xff]
  %v87 = vld [vmem:[%s1 + $0xe0] sm:$0xff]
  %v88 = vld [vmem:[%s1 + $0xe8] sm:$0xff]
  %v89 = vld [vmem:[%s1 + $0xf0] sm:$0xff]
  %v90 = vld [vmem:[%s1 + $0xf8] sm:$0xff]
  %v91 = vld [vmem:[%s1 + $0x100] sm:$0xff]
  %v92 = vld [vmem:[%s1 + $0x108] sm:$0xff]
  %v93 = vld [vmem:[%s1 + $0x110] sm:$0xff]
  %v94 = vld [vmem:[%s1 + $0x118] sm:$0xff]
  %v95 = vld [vmem:[%s1 + $0x120] sm:$0xff]
  %v96 = vld [vmem:[%s1 + $0x128] sm:$0xff]
  %v97 = vld [vmem:[%s1 + $0x130] sm:$0xff]
  %v98 = vld [vmem:[%s1 + $0x138] sm:$0xff]
  %v99 = vld [vmem:[%s1 + $0x140] sm:$0xff]
  %v100 = vld [vmem:[%s1 + $0x148] sm:$0xff]
  %v101 = vld [vmem:[%s1 + $0x150] sm:$0xff]
  %v102 = vld [vmem:[%s1 + $0x158] sm:$0xff]
  %v103 = vld [vmem:[%s1 + $0x160] sm:$0xff]
  %v104 = vld [vmem:[%s1 + $0x168] sm:$0xff]
  %v105 = vld [vmem:[%s1 + $0x170] sm:$0xff]
  %v106 = vld [vmem:[%s1 + $0x178] sm:$0xff]
  %v107 = vld [vmem:[%s1 + $0x180] sm:$0xff]
  %v108 = vld [vmem:[%s1 + $0x188] sm:$0xff]
  %v109 = vld [vmem:[%s1 + $0x190] sm:$0xff]
  %v110 = vld [vmem:[%s1 + $0x198] sm:$0xff]
  %v111 = vld [vmem:[%s1 + $0x1a0] sm:$0xff]
  %v112 = vld [vmem:[%s1 + $0x1a8] sm:$0xff]
  %v113 = vld [vmem:[%s1 + $0x1b0] sm:$0xff]
  %v114 = vld [vmem:[%s1 + $0x1b8] sm:$0xff]
  %v115 = vld [vmem:[%s1 + $0x1c0] sm:$0xff]
  %v116 = vld [vmem:[%s1 + $0x1c8] sm:$0xff]
  %v117 = vld [vmem:[%s1 + $0x1d0] sm:$0xff]
  %v118 = vld [vmem:[%s1 + $0x1d8] sm:$0xff]
  %v119 = vld [vmem:[%s1 + $0x1e0] sm:$0xff]
  %v120 = vld [vmem:[%s1 + $0x1e8] sm:$0xff]
  %v121 = vld [vmem:[%s1 + $0x1f0] sm:$0xff]
  %v122 = vld [vmem:[%s1 + $0x1f8] sm:$0xff]
  %v123 = vld [vmem:[%s1 + $0x200] sm:$0xff]
  %v124 = vld [vmem:[%s1 + $0x208] sm:$0xff]
  %v125 = vld [vmem:[%s1 + $0x210] sm:$0xff]
  %v126 = vld [vmem:[%s1 + $0x218] sm:$0xff]
  %v127 = vld [vmem:[%s1 + $0x220] sm:$0xff]
  %v128 = vld [vmem:[%s1 + $0x228] sm:$0xff]
  %v129 = vld [vmem:[%s1 + $0x230] sm:$0xff]
  %v130 = vld [vmem:[%s1 + $0x238] sm:$0xff]
  %v131 = vld [vmem:[%s1 + $0x240] sm:$0xff]
  %v132 = vld [vmem:[%s1 + $0x248] sm:$0xff]
  %v133 = vld [vmem:[%s1 + $0x250] sm:$0xff]
  %v134 = vld [vmem:[%s1 + $0x258] sm:$0xff]
  %v135 = vld [vmem:[%s1 + $0x260] sm:$0xff]
  %v136 = vld [vmem:[%s1 + $0x268] sm:$0xff]
  %v137 = vld [vmem:[%s1 + $0x270] sm:$0xff]
  %v138 = vld [vmem:[%s1 + $0x278] sm:$0xff]
  %v139 = vld [vmem:[%s1 + $0x280] sm:$0xff]
  %v140 = vld [vmem:[%s1 + $0x288] sm:$0xff]
  %v141 = vld [vmem:[%s1 + $0x290] sm:$0xff]
  %v142 = vld [vmem:[%s1 + $0x298] sm:$0xff]
  %v143 = vld [vmem:[%s1 + $0x2a0] sm:$0xff]
  %v144 = vld [vmem:[%s1 + $0x2a8] sm:$0xff]
  %v145 = vld [vmem:[%s1 + $0x2b0] sm:$0xff]
  %v146 = vld [vmem:[%s1 + $0x2b8] sm:$0xff]
  %v147 = vld [vmem:[%s1 + $0x2c0] sm:$0xff]
  %v148 = vld [vmem:[%s1 + $0x2c8] sm:$0xff]
  %v149 = vld [vmem:[%s1 + $0x2d0] sm:$0xff]
  %v150 = vld [vmem:[%s1 + $0x2d8] sm:$0xff]
  %v151 = vld [vmem:[%s1 + $0x2e0] sm:$0xff]
  %v152 = vld [vmem:[%s1 + $0x2e8] sm:$0xff]
  %v153 = vld [vmem:[%s1 + $0x2f0] sm:$0xff]
  %v154 = vld [vmem:[%s1 + $0x2f8] sm:$0xff]
  %v155 = vld [vmem:[%s1 + $0x300] sm:$0xff]
  %v156 = vld [vmem:[%s1 + $0x308] sm:$0xff]
  %v157 = vld [vmem:[%s1 + $0x310] sm:$0xff]
  %v158 = vld [vmem:[%s1 + $0x318] sm:$0xff]
  %v159 = vld [vmem:[%s1 + $0x320] sm:$0xff]
  %v160 = vld [vmem:[%s1 + $0x328] sm:$0xff]
  %v161 = vld [vmem:[%s1 + $0x330] sm:$0xff]
  %v162 = vld [vmem:[%s1 + $0x338] sm:$0xff]
  %v163 = vld [vmem:[%s1 + $0x340] sm:$0xff]
  %v164 = vld [vmem:[%s1 + $0x348] sm:$0xff]
  %v165 = vld [vmem:[%s1 + $0x350] sm:$0xff]
  %v166 = vld [vmem:[%s1 + $0x358] sm:$0xff]
  %v167 = vld [vmem:[%s1 + $0x360] sm:$0xff]
  %v168 = vld [vmem:[%s1 + $0x368] sm:$0xff]
  %v169 = vld [vmem:[%s1 + $0x370] sm:$0xff]
  %v170 = vld [vmem:[%s1 + $0x378] sm:$0xff]
  %v171 = vld [vmem:[%s1 + $0x380] sm:$0xff]
  %v172 = vld [vmem:[%s1 + $0x388] sm:$0xff]
  %v173 = vld [vmem:[%s1 + $0x390] sm:$0xff]
  %v174 = vld [vmem:[%s1 + $0x398] sm:$0xff]
  %v175 = vld [vmem:[%s1 + $0x3a0] sm:$0xff]
  %v176 = vld [vmem:[%s1 + $0x3a8] sm:$0xff]
  %v177 = vld [vmem:[%s1 + $0x3b0] sm:$0xff]
  %v178 = vld [vmem:[%s1 + $0x3b8] sm:$0xff]
  %v179 = vld [vmem:[%s1 + $0x3c0] sm:$0xff]
  %v180 = vld [vmem:[%s1 + $0x3c8] sm:$0xff]
  %v181 = vld [vmem:[%s1 + $0x3d0] sm:$0xff]
  %v182 = vld [vmem:[%s1 + $0x3d8] sm:$0xff]
  %v183 = vld [vmem:[%s1 + $0x3e0] sm:$0xff]
  %v184 = vld [vmem:[%s1 + $0x3e8] sm:$0xff]
  %v185 = vld [vmem:[%s1 + $0x3f0] sm:$0xff]
  %v186 = vld [vmem:[%s1 + $0x3f8] sm:$0xff]
  %v187 = vld [vmem:[%s1 + $0x400] sm:$0xff]
  %v188 = vld [vmem:[%s1 + $0x408] sm:$0xff]
  %v189 = vld [vmem:[%s1 + $0x410] sm:$0xff]
  %v190 = vld [vmem:[%s1 + $0x418] sm:$0xff]
  %v191 = vld [vmem:[%s1 + $0x420] sm:$0xff]
  %v192 = vld [vmem:[%s1 + $0x428] sm:$0xff]
  %v193 = vld [vmem:[%s1 + $0x430] sm:$0xff]
  %v194 = vld [vmem:[%s1 + $0x438] sm:$0xff]
  %v195 = vld [vmem:[%s1 + $0x440] sm:$0xff]
  %v196 = vld [vmem:[%s1 + $0x448] sm:$0xff]
  %v197 = vld [vmem:[%s1 + $0x450] sm:$0xff]
  %v198 = vld [vmem:[%s1 + $0x458] sm:$0xff]
  %v199 = vld [vmem:[%s1 + $0x460] sm:$0xff]
  %v200 = vld [vmem:[%s1 + $0x468] sm:$0xff]
  %v201 = vld [vmem:[%s1 + $0x470] sm:$0xff]
  %v202 = vld [vmem:[%s1 + $0x478] sm:$0xff]
  %v203 = vld [vmem:[%s1 + $0x480] sm:$0xff]
  %v204 = vld [vmem:[%s1 + $0x488] sm:$0xff]
  %v205 = vld [vmem:[%s1 + $0x490] sm:$0xff]
  %v206 = vld [vmem:[%s1 + $0x498] sm:$0xff]
  %v207 = vld [vmem:[%s1 + $0x4a0] sm:$0xff]
  %v208 = vld [vmem:[%s1 + $0x4a8] sm:$0xff]
  %v209 = vld [vmem:[%s1 + $0x4b0] sm:$0xff]
  %v210 = vld [vmem:[%s1 + $0x4b8] sm:$0xff]
  %v211 = vld [vmem:[%s1 + $0x4c0] sm:$0xff]
  %v212 = vld [vmem:[%s1 + $0x4c8] sm:$0xff]
  %v213 = vld [vmem:[%s1 + $0x4d0] sm:$0xff]
  %v214 = vld [vmem:[%s1 + $0x4d8] sm:$0xff]
  %v215 = vld [vmem:[%s1 + $0x4e0] sm:$0xff]
  %v216 = vld [vmem:[%s1 + $0x4e8] sm:$0xff]
  %v217 = vld [vmem:[%s1 + $0x4f0] sm:$0xff]
  %v218 = vld [vmem:[%s1 + $0x4f8] sm:$0xff]
  %v219 = vld [vmem:[%s1 + $0x500] sm:$0xff]
  %v220 = vld [vmem:[%s1 + $0x508] sm:$0xff]
  %v221 = vld [vmem:[%s1 + $0x510] sm:$0xff]
  %v222 = vld [vmem:[%s1 + $0x518] sm:$0xff]
  %v223 = vld [vmem:[%s1 + $0x520] sm:$0xff]
  %v224 = vld [vmem:[%s1 + $0x528] sm:$0xff]
  %v225 = vld [vmem:[%s1 + $0x530] sm:$0xff]
  %v226 = vld [vmem:[%s1 + $0x538] sm:$0xff]
  %v227 = vld [vmem:[%s1 + $0x540] sm:$0xff]
  %v228 = vld [vmem:[%s1 + $0x548] sm:$0xff]
  %v229 = vld [vmem:[%s1 + $0x550] sm:$0xff]
  %v230 = vld [vmem:[%s1 + $0x558] sm:$0xff]
  %v231 = vld [vmem:[%s1 + $0x560] sm:$0xff]
  %v232 = vld [vmem:[%s1 + $0x568] sm:$0xff]
  %v233 = vld [vmem:[%s1 + $0x570] sm:$0xff]
  %v234 = vld [vmem:[%s1 + $0x578] sm:$0xff]
  %v235 = vld [vmem:[%s1 + $0x580] sm:$0xff]
  %v236 = vld [vmem:[%s1 + $0x588] sm:$0xff]
  %v237 = vld [vmem:[%s1 + $0x590] sm:$0xff]
  %v238 = vld [vmem:[%s1 + $0x598] sm:$0xff]
  %v239 = vld [vmem:[%s1 + $0x5a0] sm:$0xff]
  %v240 = vld [vmem:[%s1 + $0x5a8] sm:$0xff]
  %v241 = vld [vmem:[%s1 + $0x5b0] sm:$0xff]
  %v242 = vld [vmem:[%s1 + $0x5b8] sm:$0xff]
  %v243 = vld [vmem:[%s1 + $0x5c0] sm:$0xff]
  %v244 = vld [vmem:[%s1 + $0x5c8] sm:$0xff]
  %v245 = vld [vmem:[%s1 + $0x5d0] sm:$0xff]
  %v246 = vld [vmem:[%s1 + $0x5d8] sm:$0xff]
  %v247 = vld [vmem:[%s1 + $0x5e0] sm:$0xff]
  %v248 = vld [vmem:[%s1 + $0x5e8] sm:$0xff]
  %v249 = vld [vmem:[%s1 + $0x5f0] sm:$0xff]
  %v250 = vld [vmem:[%s1 + $0x5f8] sm:$0xff]
  %v251 = vld [vmem:[%s1 + $0x600] sm:$0xff]
  %v252 = vld [vmem:[%s1 + $0x608] sm:$0xff]
  %v253 = vld [vmem:[%s1 + $0x610] sm:$0xff]
  %v254 = vld [vmem:[%s1 + $0x618] sm:$0xff]
  %v255 = vld [vmem:[%s1 + $0x620] sm:$0xff]
  %v256 = vld [vmem:[%s1 + $0x628] sm:$0xff]
  %v257 = vld [vmem:[%s1 + $0x630] sm:$0xff]
  %v258 = vld [vmem:[%s1 + $0x638] sm:$0xff]
  %v259 = vld [vmem:[%s1 + $0x640] sm:$0xff]
  %v260 = vld [vmem:[%s1 + $0x648] sm:$0xff]
  %v261 = vld [vmem:[%s1 + $0x650] sm:$0xff]
  %v262 = vld [vmem:[%s1 + $0x658] sm:$0xff]
  %v263 = vld [vmem:[%s1 + $0x660] sm:$0xff]
  %v264 = vld [vmem:[%s1 + $0x668] sm:$0xff]
  %v265 = vld [vmem:[%s1 + $0x670] sm:$0xff]
  %v266 = vld [vmem:[%s1 + $0x678] sm:$0xff]
  %v267 = vld [vmem:[%s1 + $0x680] sm:$0xff]
  %v268 = vld [vmem:[%s1 + $0x688] sm:$0xff]
  %v269 = vld [vmem:[%s1 + $0x690] sm:$0xff]
  %v270 = vld [vmem:[%s1 + $0x698] sm:$0xff]
  %v271 = vld [vmem:[%s1 + $0x6a0] sm:$0xff]
  %v272 = vld [vmem:[%s1 + $0x6a8] sm:$0xff]
  %v273 = vld [vmem:[%s1 + $0x6b0] sm:$0xff]
  %v274 = vld [vmem:[%s1 + $0x6b8] sm:$0xff]
  %v275 = vld [vmem:[%s1 + $0x6c0] sm:$0xff]
  %v276 = vld [vmem:[%s1 + $0x6c8] sm:$0xff]
  %v277 = vld [vmem:[%s1 + $0x6d0] sm:$0xff]
  %v278 = vld [vmem:[%s1 + $0x6d8] sm:$0xff]
  %v279 = vld [vmem:[%s1 + $0x6e0] sm:$0xff]
  %v280 = vld [vmem:[%s1 + $0x6e8] sm:$0xff]
  %v281 = vld [vmem:[%s1 + $0x6f0] sm:$0xff]
  %v282 = vld [vmem:[%s1 + $0x6f8] sm:$0xff]
  %v283 = vld [vmem:[%s1 + $0x700] sm:$0xff]
  %v284 = vld [vmem:[%s1 + $0x708] sm:$0xff]
  %v285 = vld [vmem:[%s1 + $0x710] sm:$0xff]
  %v286 = vld [vmem:[%s1 + $0x718] sm:$0xff]
  %v287 = vld [vmem:[%s1 + $0x720] sm:$0xff]
  %v288 = vld [vmem:[%s1 + $0x728] sm:$0xff]
  %v289 = vld [vmem:[%s1 + $0x730] sm:$0xff]
  %v290 = vld [vmem:[%s1 + $0x738] sm:$0xff]
  %v291 = vld [vmem:[%s1 + $0x740] sm:$0xff]
  %v292 = vld [vmem:[%s1 + $0x748] sm:$0xff]
  %v293 = vld [vmem:[%s1 + $0x750] sm:$0xff]
  %v294 = vld [vmem:[%s1 + $0x758] sm:$0xff]
  %v295 = vld [vmem:[%s1 + $0x760] sm:$0xff]
  %v296 = vld [vmem:[%s1 + $0x768] sm:$0xff]
  %v297 = vld [vmem:[%s1 + $0x770] sm:$0xff]
  %v298 = vld [vmem:[%s1 + $0x778] sm:$0xff]
  %v299 = vld [vmem:[%s1 + $0x780] sm:$0xff]
  %v300 = vld [vmem:[%s1 + $0x788] sm:$0xff]
  %v301 = vld [vmem:[%s1 + $0x790] sm:$0xff]
  %v302 = vld [vmem:[%s1 + $0x798] sm:$0xff]
  %v303 = vld [vmem:[%s1 + $0x7a0] sm:$0xff]
  %v304 = vld [vmem:[%s1 + $0x7a8] sm:$0xff]
  %v305 = vld [vmem:[%s1 + $0x7b0] sm:$0xff]
  %v306 = vld [vmem:[%s1 + $0x7b8] sm:$0xff]
  %v307 = vld [vmem:[%s1 + $0x7c0] sm:$0xff]
  %v308 = vld [vmem:[%s1 + $0x7c8] sm:$0xff]
  %v309 = vld [vmem:[%s1 + $0x7d0] sm:$0xff]
  %v310 = vld [vmem:[%s1 + $0x7d8] sm:$0xff]
  %v311 = vld [vmem:[%s1 + $0x7e0] sm:$0xff]
  %v312 = vld [vmem:[%s1 + $0x7e8] sm:$0xff]
  %v313 = vld [vmem:[%s1 + $0x7f0] sm:$0xff]
  %v314 = vld [vmem:[%s1 + $0x7f8] sm:$0xff]
  %v315 = vld [vmem:[%s1 + $0x800] sm:$0xff]
  %v316 = vld [vmem:[%s1 + $0x808] sm:$0xff]
  %v317 = vld [vmem:[%s1 + $0x810] sm:$0xff]
  %v318 = vld [vmem:[%s1 + $0x818] sm:$0xff]
  %v319 = vld [vmem:[%s1 + $0x820] sm:$0xff]
  %v320 = vld [vmem:[%s1 + $0x828] sm:$0xff]
  %v321 = vld [vmem:[%s1 + $0x830] sm:$0xff]
  %v322 = vld [vmem:[%s1 + $0x838] sm:$0xff]
  %v323 = vld [vmem:[%s1 + $0x840] sm:$0xff]
  %v324 = vld [vmem:[%s1 + $0x848] sm:$0xff]
  %v325 = vld [vmem:[%s1 + $0x850] sm:$0xff]
  %v326 = vld [vmem:[%s1 + $0x858] sm:$0xff]
  %v327 = vld [vmem:[%s1 + $0x860] sm:$0xff]
  %v328 = vld [vmem:[%s1 + $0x868] sm:$0xff]
  %v329 = vld [vmem:[%s1 + $0x870] sm:$0xff]
  %v330 = vld [vmem:[%s1 + $0x878] sm:$0xff]
  %v331 = vld [vmem:[%s1 + $0x880] sm:$0xff]
  %v332 = vld [vmem:[%s1 + $0x888] sm:$0xff]
  %v333 = vld [vmem:[%s1 + $0x890] sm:$0xff]
  %v334 = vld [vmem:[%s1 + $0x898] sm:$0xff]
  %v335 = vld [vmem:[%s1 + $0x8a0] sm:$0xff]
  %v336 = vld [vmem:[%s1 + $0x8a8] sm:$0xff]
  %v337 = vld [vmem:[%s1 + $0x8b0] sm:$0xff]
  %v338 = vld [vmem:[%s1 + $0x8b8] sm:$0xff]
  %v339 = vld [vmem:[%s1 + $0x8c0] sm:$0xff]
  %v340 = vld [vmem:[%s1 + $0x8c8] sm:$0xff]
  %v341 = vld [vmem:[%s1 + $0x8d0] sm:$0xff]
  %v342 = vld [vmem:[%s1 + $0x8d8] sm:$0xff]
  %v343 = vld [vmem:[%s1 + $0x8e0] sm:$0xff]
  %v344 = vld [vmem:[%s1 + $0x8e8] sm:$0xff]
  %v345 = vld [vmem:[%s1 + $0x8f0] sm:$0xff]
  %v346 = vld [vmem:[%s1 + $0x8f8] sm:$0xff]
  %v347 = vld [vmem:[%s1 + $0x900] sm:$0xff]
  %v348 = vld [vmem:[%s1 + $0x908] sm:$0xff]
  %v349 = vld [vmem:[%s1 + $0x910] sm:$0xff]
  %v350 = vld [vmem:[%s1 + $0x918] sm:$0xff]
  %v351 = vld [vmem:[%s1 + $0x920] sm:$0xff]
  %v352 = vld [vmem:[%s1 + $0x928] sm:$0xff]
  %v353 = vld [vmem:[%s1 + $0x930] sm:$0xff]
  %v354 = vld [vmem:[%s1 + $0x938] sm:$0xff]
  %v355 = vld [vmem:[%s1 + $0x940] sm:$0xff]
  %v356 = vld [vmem:[%s1 + $0x948] sm:$0xff]
  %v357 = vld [vmem:[%s1 + $0x950] sm:$0xff]
  %v358 = vld [vmem:[%s1 + $0x958] sm:$0xff]
  %v359 = vld [vmem:[%s1 + $0x960] sm:$0xff]
  %v360 = vld [vmem:[%s1 + $0x968] sm:$0xff]
  %v361 = vld [vmem:[%s1 + $0x970] sm:$0xff]
  %v362 = vld [vmem:[%s1 + $0x978] sm:$0xff]
  %v363 = vld [vmem:[%s1 + $0x980] sm:$0xff]
  %v364 = vld [vmem:[%s1 + $0x988] sm:$0xff]
  %v365 = vld [vmem:[%s1 + $0x990] sm:$0xff]
  %v366 = vld [vmem:[%s1 + $0x998] sm:$0xff]
  %v367 = vld [vmem:[%s1 + $0x9a0] sm:$0xff]
  %v368 = vld [vmem:[%s1 + $0x9a8] sm:$0xff]
  %v369 = vld [vmem:[%s1 + $0x9b0] sm:$0xff]
  %v370 = vld [vmem:[%s1 + $0x9b8] sm:$0xff]
  %v371 = vld [vmem:[%s1 + $0x9c0] sm:$0xff]
  %v372 = vld [vmem:[%s1 + $0x9c8] sm:$0xff]
  %v373 = vld [vmem:[%s1 + $0x9d0] sm:$0xff]
  %v374 = vld [vmem:[%s1 + $0x9d8] sm:$0xff]
  %v375 = vld [vmem:[%s1 + $0x9e0] sm:$0xff]
  %v376 = vld [vmem:[%s1 + $0x9e8] sm:$0xff]
  %v377 = vld [vmem:[%s1 + $0x9f0] sm:$0xff]
  %v378 = vld [vmem:[%s1 + $0x9f8] sm:$0xff]
  %v379 = vld [vmem:[%s2] sm:$0xf]
  %v381 = vlaneseq
  %v382 = vshrl.u32 %v381, 7
  %v383 = vsub.s32 0, %v382
  %v384 = vrot.slane %v379, %v383
  %v385 = vlaneseq
  %v386 = vshrl.u32 %v385, 7
  %v387 = vsub.s32 1, %v386
  %v388 = vrot.slane %v379, %v387
  %v389 = vlaneseq
  %v390 = vshrl.u32 %v389, 7
  %v391 = vsub.s32 2, %v390
  %v392 = vrot.slane %v379, %v391
  %v393 = vlaneseq
  %v394 = vshrl.u32 %v393, 7
  %v395 = vsub.s32 3, %v394
  %v396 = vrot.slane %v379, %v395
  %v721 = vunpack.c.l.b16 %v59
  %v722 = vunpack.c.h.b16 %v59
  %v723 = vunpack.c.l.b16 %v60
  %v724 = vunpack.c.h.b16 %v60
  %v725 = vunpack.c.l.b16 %v61
  %v726 = vunpack.c.h.b16 %v61
  %v727 = vunpack.c.l.b16 %v62
  %v728 = vunpack.c.h.b16 %v62
  %v729 = vunpack.c.l.b16 %v63
  %v730 = vunpack.c.h.b16 %v63
  %v731 = vunpack.c.l.b16 %v64
  %v732 = vunpack.c.h.b16 %v64
  %v733 = vunpack.c.l.b16 %v65
  %v734 = vunpack.c.h.b16 %v65
  %v735 = vunpack.c.l.b16 %v66
  %v736 = vunpack.c.h.b16 %v66
  %v737 = vunpack.c.l.b16 %v67
  %v738 = vunpack.c.h.b16 %v67
  %v739 = vunpack.c.l.b16 %v68
  %v740 = vunpack.c.h.b16 %v68
  %v741 = vunpack.c.l.b16 %v69
  %v742 = vunpack.c.h.b16 %v69
  %v743 = vunpack.c.l.b16 %v70
  %v744 = vunpack.c.h.b16 %v70
  %v745 = vunpack.c.l.b16 %v71
  %v746 = vunpack.c.h.b16 %v71
  %v747 = vunpack.c.l.b16 %v72
  %v748 = vunpack.c.h.b16 %v72
  %v749 = vunpack.c.l.b16 %v73
  %v750 = vunpack.c.h.b16 %v73
  %v751 = vunpack.c.l.b16 %v74
  %v752 = vunpack.c.h.b16 %v74
  %v753 = vunpack.c.l.b16 %v75
  %v754 = vunpack.c.h.b16 %v75
  %v755 = vunpack.c.l.b16 %v76
  %v756 = vunpack.c.h.b16 %v76
  %v757 = vunpack.c.l.b16 %v77
  %v758 = vunpack.c.h.b16 %v77
  %v759 = vunpack.c.l.b16 %v78
  %v760 = vunpack.c.h.b16 %v78
  %v761 = vunpack.c.l.b16 %v79
  %v762 = vunpack.c.h.b16 %v79
  %v763 = vunpack.c.l.b16 %v80
  %v764 = vunpack.c.h.b16 %v80
  %v765 = vunpack.c.l.b16 %v81
  %v766 = vunpack.c.h.b16 %v81
  %v767 = vunpack.c.l.b16 %v82
  %v768 = vunpack.c.h.b16 %v82
  %v769 = vunpack.c.l.b16 %v83
  %v770 = vunpack.c.h.b16 %v83
  %v771 = vunpack.c.l.b16 %v84
  %v772 = vunpack.c.h.b16 %v84
  %v773 = vunpack.c.l.b16 %v85
  %v774 = vunpack.c.h.b16 %v85
  %v775 = vunpack.c.l.b16 %v86
  %v776 = vunpack.c.h.b16 %v86
  %v777 = vunpack.c.l.b16 %v87
  %v778 = vunpack.c.h.b16 %v87
  %v779 = vunpack.c.l.b16 %v88
  %v780 = vunpack.c.h.b16 %v88
  %v781 = vunpack.c.l.b16 %v89
  %v782 = vunpack.c.h.b16 %v89
  %v783 = vunpack.c.l.b16 %v90
  %v784 = vunpack.c.h.b16 %v90
  %v785 = vunpack.c.l.b16 %v91
  %v786 = vunpack.c.h.b16 %v91
  %v787 = vunpack.c.l.b16 %v92
  %v788 = vunpack.c.h.b16 %v92
  %v789 = vunpack.c.l.b16 %v93
  %v790 = vunpack.c.h.b16 %v93
  %v791 = vunpack.c.l.b16 %v94
  %v792 = vunpack.c.h.b16 %v94
  %v793 = vunpack.c.l.b16 %v95
  %v794 = vunpack.c.h.b16 %v95
  %v795 = vunpack.c.l.b16 %v96
  %v796 = vunpack.c.h.b16 %v96
  %v797 = vunpack.c.l.b16 %v97
  %v798 = vunpack.c.h.b16 %v97
  %v799 = vunpack.c.l.b16 %v98
  %v800 = vunpack.c.h.b16 %v98
  %v801 = vunpack.c.l.b16 %v99
  %v802 = vunpack.c.h.b16 %v99
  %v803 = vunpack.c.l.b16 %v100
  %v804 = vunpack.c.h.b16 %v100
  %v805 = vunpack.c.l.b16 %v101
  %v806 = vunpack.c.h.b16 %v101
  %v807 = vunpack.c.l.b16 %v102
  %v808 = vunpack.c.h.b16 %v102
  %v809 = vunpack.c.l.b16 %v103
  %v810 = vunpack.c.h.b16 %v103
  %v811 = vunpack.c.l.b16 %v104
  %v812 = vunpack.c.h.b16 %v104
  %v813 = vunpack.c.l.b16 %v105
  %v814 = vunpack.c.h.b16 %v105
  %v815 = vunpack.c.l.b16 %v106
  %v816 = vunpack.c.h.b16 %v106
  %v817 = vunpack.c.l.b16 %v107
  %v818 = vunpack.c.h.b16 %v107
  %v819 = vunpack.c.l.b16 %v108
  %v820 = vunpack.c.h.b16 %v108
  %v821 = vunpack.c.l.b16 %v109
  %v822 = vunpack.c.h.b16 %v109
  %v823 = vunpack.c.l.b16 %v110
  %v824 = vunpack.c.h.b16 %v110
  %v825 = vunpack.c.l.b16 %v111
  %v826 = vunpack.c.h.b16 %v111
  %v827 = vunpack.c.l.b16 %v112
  %v828 = vunpack.c.h.b16 %v112
  %v829 = vunpack.c.l.b16 %v113
  %v830 = vunpack.c.h.b16 %v113
  %v831 = vunpack.c.l.b16 %v114
  %v832 = vunpack.c.h.b16 %v114
  %v833 = vunpack.c.l.b16 %v115
  %v834 = vunpack.c.h.b16 %v115
  %v835 = vunpack.c.l.b16 %v116
  %v836 = vunpack.c.h.b16 %v116
  %v837 = vunpack.c.l.b16 %v117
  %v838 = vunpack.c.h.b16 %v117
  %v839 = vunpack.c.l.b16 %v118
  %v840 = vunpack.c.h.b16 %v118
  %v841 = vunpack.c.l.b16 %v119
  %v842 = vunpack.c.h.b16 %v119
  %v843 = vunpack.c.l.b16 %v120
  %v844 = vunpack.c.h.b16 %v120
  %v845 = vunpack.c.l.b16 %v121
  %v846 = vunpack.c.h.b16 %v121
  %v847 = vunpack.c.l.b16 %v122
  %v848 = vunpack.c.h.b16 %v122
  %v849 = vunpack.c.l.b16 %v123
  %v850 = vunpack.c.h.b16 %v123
  %v851 = vunpack.c.l.b16 %v124
  %v852 = vunpack.c.h.b16 %v124
  %v853 = vunpack.c.l.b16 %v125
  %v854 = vunpack.c.h.b16 %v125
  %v855 = vunpack.c.l.b16 %v126
  %v856 = vunpack.c.h.b16 %v126
  %v857 = vunpack.c.l.b16 %v127
  %v858 = vunpack.c.h.b16 %v127
  %v859 = vunpack.c.l.b16 %v128
  %v860 = vunpack.c.h.b16 %v128
  %v861 = vunpack.c.l.b16 %v129
  %v862 = vunpack.c.h.b16 %v129
  %v863 = vunpack.c.l.b16 %v130
  %v864 = vunpack.c.h.b16 %v130
  %v865 = vunpack.c.l.b16 %v131
  %v866 = vunpack.c.h.b16 %v131
  %v867 = vunpack.c.l.b16 %v132
  %v868 = vunpack.c.h.b16 %v132
  %v869 = vunpack.c.l.b16 %v133
  %v870 = vunpack.c.h.b16 %v133
  %v871 = vunpack.c.l.b16 %v134
  %v872 = vunpack.c.h.b16 %v134
  %v873 = vunpack.c.l.b16 %v135
  %v874 = vunpack.c.h.b16 %v135
  %v875 = vunpack.c.l.b16 %v136
  %v876 = vunpack.c.h.b16 %v136
  %v877 = vunpack.c.l.b16 %v137
  %v878 = vunpack.c.h.b16 %v137
  %v879 = vunpack.c.l.b16 %v138
  %v880 = vunpack.c.h.b16 %v138
  %v881 = vunpack.c.l.b16 %v139
  %v882 = vunpack.c.h.b16 %v139
  %v883 = vunpack.c.l.b16 %v140
  %v884 = vunpack.c.h.b16 %v140
  %v885 = vunpack.c.l.b16 %v141
  %v886 = vunpack.c.h.b16 %v141
  %v887 = vunpack.c.l.b16 %v142
  %v888 = vunpack.c.h.b16 %v142
  %v889 = vunpack.c.l.b16 %v143
  %v890 = vunpack.c.h.b16 %v143
  %v891 = vunpack.c.l.b16 %v144
  %v892 = vunpack.c.h.b16 %v144
  %v893 = vunpack.c.l.b16 %v145
  %v894 = vunpack.c.h.b16 %v145
  %v895 = vunpack.c.l.b16 %v146
  %v896 = vunpack.c.h.b16 %v146
  %v897 = vunpack.c.l.b16 %v147
  %v898 = vunpack.c.h.b16 %v147
  %v899 = vunpack.c.l.b16 %v148
  %v900 = vunpack.c.h.b16 %v148
  %v901 = vunpack.c.l.b16 %v149
  %v902 = vunpack.c.h.b16 %v149
  %v903 = vunpack.c.l.b16 %v150
  %v904 = vunpack.c.h.b16 %v150
  %v905 = vunpack.c.l.b16 %v151
  %v906 = vunpack.c.h.b16 %v151
  %v907 = vunpack.c.l.b16 %v152
  %v908 = vunpack.c.h.b16 %v152
  %v909 = vunpack.c.l.b16 %v153
  %v910 = vunpack.c.h.b16 %v153
  %v911 = vunpack.c.l.b16 %v154
  %v912 = vunpack.c.h.b16 %v154
  %v913 = vunpack.c.l.b16 %v155
  %v914 = vunpack.c.h.b16 %v155
  %v915 = vunpack.c.l.b16 %v156
  %v916 = vunpack.c.h.b16 %v156
  %v917 = vunpack.c.l.b16 %v157
  %v918 = vunpack.c.h.b16 %v157
  %v919 = vunpack.c.l.b16 %v158
  %v920 = vunpack.c.h.b16 %v158
  %v921 = vunpack.c.l.b16 %v159
  %v922 = vunpack.c.h.b16 %v159
  %v923 = vunpack.c.l.b16 %v160
  %v924 = vunpack.c.h.b16 %v160
  %v925 = vunpack.c.l.b16 %v161
  %v926 = vunpack.c.h.b16 %v161
  %v927 = vunpack.c.l.b16 %v162
  %v928 = vunpack.c.h.b16 %v162
  %v929 = vunpack.c.l.b16 %v163
  %v930 = vunpack.c.h.b16 %v163
  %v931 = vunpack.c.l.b16 %v164
  %v932 = vunpack.c.h.b16 %v164
  %v933 = vunpack.c.l.b16 %v165
  %v934 = vunpack.c.h.b16 %v165
  %v935 = vunpack.c.l.b16 %v166
  %v936 = vunpack.c.h.b16 %v166
  %v937 = vunpack.c.l.b16 %v167
  %v938 = vunpack.c.h.b16 %v167
  %v939 = vunpack.c.l.b16 %v168
  %v940 = vunpack.c.h.b16 %v168
  %v941 = vunpack.c.l.b16 %v169
  %v942 = vunpack.c.h.b16 %v169
  %v943 = vunpack.c.l.b16 %v170
  %v944 = vunpack.c.h.b16 %v170
  %v945 = vunpack.c.l.b16 %v171
  %v946 = vunpack.c.h.b16 %v171
  %v947 = vunpack.c.l.b16 %v172
  %v948 = vunpack.c.h.b16 %v172
  %v949 = vunpack.c.l.b16 %v173
  %v950 = vunpack.c.h.b16 %v173
  %v951 = vunpack.c.l.b16 %v174
  %v952 = vunpack.c.h.b16 %v174
  %v953 = vunpack.c.l.b16 %v175
  %v954 = vunpack.c.h.b16 %v175
  %v955 = vunpack.c.l.b16 %v176
  %v956 = vunpack.c.h.b16 %v176
  %v957 = vunpack.c.l.b16 %v177
  %v958 = vunpack.c.h.b16 %v177
  %v959 = vunpack.c.l.b16 %v178
  %v960 = vunpack.c.h.b16 %v178
  %v961 = vunpack.c.l.b16 %v179
  %v962 = vunpack.c.h.b16 %v179
  %v963 = vunpack.c.l.b16 %v180
  %v964 = vunpack.c.h.b16 %v180
  %v965 = vunpack.c.l.b16 %v181
  %v966 = vunpack.c.h.b16 %v181
  %v967 = vunpack.c.l.b16 %v182
  %v968 = vunpack.c.h.b16 %v182
  %v969 = vunpack.c.l.b16 %v183
  %v970 = vunpack.c.h.b16 %v183
  %v971 = vunpack.c.l.b16 %v184
  %v972 = vunpack.c.h.b16 %v184
  %v973 = vunpack.c.l.b16 %v185
  %v974 = vunpack.c.h.b16 %v185
  %v975 = vunpack.c.l.b16 %v186
  %v976 = vunpack.c.h.b16 %v186
  %v977 = vunpack.c.l.b16 %v187
  %v978 = vunpack.c.h.b16 %v187
  %v979 = vunpack.c.l.b16 %v188
  %v980 = vunpack.c.h.b16 %v188
  %v981 = vunpack.c.l.b16 %v189
  %v982 = vunpack.c.h.b16 %v189
  %v983 = vunpack.c.l.b16 %v190
  %v984 = vunpack.c.h.b16 %v190
  %v985 = vunpack.c.l.b16 %v191
  %v986 = vunpack.c.h.b16 %v191
  %v987 = vunpack.c.l.b16 %v192
  %v988 = vunpack.c.h.b16 %v192
  %v989 = vunpack.c.l.b16 %v193
  %v990 = vunpack.c.h.b16 %v193
  %v991 = vunpack.c.l.b16 %v194
  %v992 = vunpack.c.h.b16 %v194
  %v993 = vunpack.c.l.b16 %v195
  %v994 = vunpack.c.h.b16 %v195
  %v995 = vunpack.c.l.b16 %v196
  %v996 = vunpack.c.h.b16 %v196
  %v997 = vunpack.c.l.b16 %v197
  %v998 = vunpack.c.h.b16 %v197
  %v999 = vunpack.c.l.b16 %v198
  %v1000 = vunpack.c.h.b16 %v198
  %v1001 = vunpack.c.l.b16 %v199
  %v1002 = vunpack.c.h.b16 %v199
  %v1003 = vunpack.c.l.b16 %v200
  %v1004 = vunpack.c.h.b16 %v200
  %v1005 = vunpack.c.l.b16 %v201
  %v1006 = vunpack.c.h.b16 %v201
  %v1007 = vunpack.c.l.b16 %v202
  %v1008 = vunpack.c.h.b16 %v202
  %v1009 = vunpack.c.l.b16 %v203
  %v1010 = vunpack.c.h.b16 %v203
  %v1011 = vunpack.c.l.b16 %v204
  %v1012 = vunpack.c.h.b16 %v204
  %v1013 = vunpack.c.l.b16 %v205
  %v1014 = vunpack.c.h.b16 %v205
  %v1015 = vunpack.c.l.b16 %v206
  %v1016 = vunpack.c.h.b16 %v206
  %v1017 = vunpack.c.l.b16 %v207
  %v1018 = vunpack.c.h.b16 %v207
  %v1019 = vunpack.c.l.b16 %v208
  %v1020 = vunpack.c.h.b16 %v208
  %v1021 = vunpack.c.l.b16 %v209
  %v1022 = vunpack.c.h.b16 %v209
  %v1023 = vunpack.c.l.b16 %v210
  %v1024 = vunpack.c.h.b16 %v210
  %v1025 = vunpack.c.l.b16 %v211
  %v1026 = vunpack.c.h.b16 %v211
  %v1027 = vunpack.c.l.b16 %v212
  %v1028 = vunpack.c.h.b16 %v212
  %v1029 = vunpack.c.l.b16 %v213
  %v1030 = vunpack.c.h.b16 %v213
  %v1031 = vunpack.c.l.b16 %v214
  %v1032 = vunpack.c.h.b16 %v214
  %v1033 = vunpack.c.l.b16 %v215
  %v1034 = vunpack.c.h.b16 %v215
  %v1035 = vunpack.c.l.b16 %v216
  %v1036 = vunpack.c.h.b16 %v216
  %v1037 = vunpack.c.l.b16 %v217
  %v1038 = vunpack.c.h.b16 %v217
  %v1039 = vunpack.c.l.b16 %v218
  %v1040 = vunpack.c.h.b16 %v218
  %v1041 = vunpack.c.l.b16 %v219
  %v1042 = vunpack.c.h.b16 %v219
  %v1043 = vunpack.c.l.b16 %v220
  %v1044 = vunpack.c.h.b16 %v220
  %v1045 = vunpack.c.l.b16 %v221
  %v1046 = vunpack.c.h.b16 %v221
  %v1047 = vunpack.c.l.b16 %v222
  %v1048 = vunpack.c.h.b16 %v222
  %v1049 = vunpack.c.l.b16 %v223
  %v1050 = vunpack.c.h.b16 %v223
  %v1051 = vunpack.c.l.b16 %v224
  %v1052 = vunpack.c.h.b16 %v224
  %v1053 = vunpack.c.l.b16 %v225
  %v1054 = vunpack.c.h.b16 %v225
  %v1055 = vunpack.c.l.b16 %v226
  %v1056 = vunpack.c.h.b16 %v226
  %v1057 = vunpack.c.l.b16 %v227
  %v1058 = vunpack.c.h.b16 %v227
  %v1059 = vunpack.c.l.b16 %v228
  %v1060 = vunpack.c.h.b16 %v228
  %v1061 = vunpack.c.l.b16 %v229
  %v1062 = vunpack.c.h.b16 %v229
  %v1063 = vunpack.c.l.b16 %v230
  %v1064 = vunpack.c.h.b16 %v230
  %v1065 = vunpack.c.l.b16 %v231
  %v1066 = vunpack.c.h.b16 %v231
  %v1067 = vunpack.c.l.b16 %v232
  %v1068 = vunpack.c.h.b16 %v232
  %v1069 = vunpack.c.l.b16 %v233
  %v1070 = vunpack.c.h.b16 %v233
  %v1071 = vunpack.c.l.b16 %v234
  %v1072 = vunpack.c.h.b16 %v234
  %v1073 = vunpack.c.l.b16 %v235
  %v1074 = vunpack.c.h.b16 %v235
  %v1075 = vunpack.c.l.b16 %v236
  %v1076 = vunpack.c.h.b16 %v236
  %v1077 = vunpack.c.l.b16 %v237
  %v1078 = vunpack.c.h.b16 %v237
  %v1079 = vunpack.c.l.b16 %v238
  %v1080 = vunpack.c.h.b16 %v238
  %v1081 = vunpack.c.l.b16 %v239
  %v1082 = vunpack.c.h.b16 %v239
  %v1083 = vunpack.c.l.b16 %v240
  %v1084 = vunpack.c.h.b16 %v240
  %v1085 = vunpack.c.l.b16 %v241
  %v1086 = vunpack.c.h.b16 %v241
  %v1087 = vunpack.c.l.b16 %v242
  %v1088 = vunpack.c.h.b16 %v242
  %v1089 = vunpack.c.l.b16 %v243
  %v1090 = vunpack.c.h.b16 %v243
  %v1091 = vunpack.c.l.b16 %v244
  %v1092 = vunpack.c.h.b16 %v244
  %v1093 = vunpack.c.l.b16 %v245
  %v1094 = vunpack.c.h.b16 %v245
  %v1095 = vunpack.c.l.b16 %v246
  %v1096 = vunpack.c.h.b16 %v246
  %v1097 = vunpack.c.l.b16 %v247
  %v1098 = vunpack.c.h.b16 %v247
  %v1099 = vunpack.c.l.b16 %v248
  %v1100 = vunpack.c.h.b16 %v248
  %v1101 = vunpack.c.l.b16 %v249
  %v1102 = vunpack.c.h.b16 %v249
  %v1103 = vunpack.c.l.b16 %v250
  %v1104 = vunpack.c.h.b16 %v250
  %v1105 = vunpack.c.l.b16 %v251
  %v1106 = vunpack.c.h.b16 %v251
  %v1107 = vunpack.c.l.b16 %v252
  %v1108 = vunpack.c.h.b16 %v252
  %v1109 = vunpack.c.l.b16 %v253
  %v1110 = vunpack.c.h.b16 %v253
  %v1111 = vunpack.c.l.b16 %v254
  %v1112 = vunpack.c.h.b16 %v254
  %v1113 = vunpack.c.l.b16 %v255
  %v1114 = vunpack.c.h.b16 %v255
  %v1115 = vunpack.c.l.b16 %v256
  %v1116 = vunpack.c.h.b16 %v256
  %v1117 = vunpack.c.l.b16 %v257
  %v1118 = vunpack.c.h.b16 %v257
  %v1119 = vunpack.c.l.b16 %v258
  %v1120 = vunpack.c.h.b16 %v258
  %v1121 = vunpack.c.l.b16 %v259
  %v1122 = vunpack.c.h.b16 %v259
  %v1123 = vunpack.c.l.b16 %v260
  %v1124 = vunpack.c.h.b16 %v260
  %v1125 = vunpack.c.l.b16 %v261
  %v1126 = vunpack.c.h.b16 %v261
  %v1127 = vunpack.c.l.b16 %v262
  %v1128 = vunpack.c.h.b16 %v262
  %v1129 = vunpack.c.l.b16 %v263
  %v1130 = vunpack.c.h.b16 %v263
  %v1131 = vunpack.c.l.b16 %v264
  %v1132 = vunpack.c.h.b16 %v264
  %v1133 = vunpack.c.l.b16 %v265
  %v1134 = vunpack.c.h.b16 %v265
  %v1135 = vunpack.c.l.b16 %v266
  %v1136 = vunpack.c.h.b16 %v266
  %v1137 = vunpack.c.l.b16 %v267
  %v1138 = vunpack.c.h.b16 %v267
  %v1139 = vunpack.c.l.b16 %v268
  %v1140 = vunpack.c.h.b16 %v268
  %v1141 = vunpack.c.l.b16 %v269
  %v1142 = vunpack.c.h.b16 %v269
  %v1143 = vunpack.c.l.b16 %v270
  %v1144 = vunpack.c.h.b16 %v270
  %v1145 = vunpack.c.l.b16 %v271
  %v1146 = vunpack.c.h.b16 %v271
  %v1147 = vunpack.c.l.b16 %v272
  %v1148 = vunpack.c.h.b16 %v272
  %v1149 = vunpack.c.l.b16 %v273
  %v1150 = vunpack.c.h.b16 %v273
  %v1151 = vunpack.c.l.b16 %v274
  %v1152 = vunpack.c.h.b16 %v274
  %v1153 = vunpack.c.l.b16 %v275
  %v1154 = vunpack.c.h.b16 %v275
  %v1155 = vunpack.c.l.b16 %v276
  %v1156 = vunpack.c.h.b16 %v276
  %v1157 = vunpack.c.l.b16 %v277
  %v1158 = vunpack.c.h.b16 %v277
  %v1159 = vunpack.c.l.b16 %v278
  %v1160 = vunpack.c.h.b16 %v278
  %v1161 = vunpack.c.l.b16 %v279
  %v1162 = vunpack.c.h.b16 %v279
  %v1163 = vunpack.c.l.b16 %v280
  %v1164 = vunpack.c.h.b16 %v280
  %v1165 = vunpack.c.l.b16 %v281
  %v1166 = vunpack.c.h.b16 %v281
  %v1167 = vunpack.c.l.b16 %v282
  %v1168 = vunpack.c.h.b16 %v282
  %v1169 = vunpack.c.l.b16 %v283
  %v1170 = vunpack.c.h.b16 %v283
  %v1171 = vunpack.c.l.b16 %v284
  %v1172 = vunpack.c.h.b16 %v284
  %v1173 = vunpack.c.l.b16 %v285
  %v1174 = vunpack.c.h.b16 %v285
  %v1175 = vunpack.c.l.b16 %v286
  %v1176 = vunpack.c.h.b16 %v286
  %v1177 = vunpack.c.l.b16 %v287
  %v1178 = vunpack.c.h.b16 %v287
  %v1179 = vunpack.c.l.b16 %v288
  %v1180 = vunpack.c.h.b16 %v288
  %v1181 = vunpack.c.l.b16 %v289
  %v1182 = vunpack.c.h.b16 %v289
  %v1183 = vunpack.c.l.b16 %v290
  %v1184 = vunpack.c.h.b16 %v290
  %v1185 = vunpack.c.l.b16 %v291
  %v1186 = vunpack.c.h.b16 %v291
  %v1187 = vunpack.c.l.b16 %v292
  %v1188 = vunpack.c.h.b16 %v292
  %v1189 = vunpack.c.l.b16 %v293
  %v1190 = vunpack.c.h.b16 %v293
  %v1191 = vunpack.c.l.b16 %v294
  %v1192 = vunpack.c.h.b16 %v294
  %v1193 = vunpack.c.l.b16 %v295
  %v1194 = vunpack.c.h.b16 %v295
  %v1195 = vunpack.c.l.b16 %v296
  %v1196 = vunpack.c.h.b16 %v296
  %v1197 = vunpack.c.l.b16 %v297
  %v1198 = vunpack.c.h.b16 %v297
  %v1199 = vunpack.c.l.b16 %v298
  %v1200 = vunpack.c.h.b16 %v298
  %v1201 = vunpack.c.l.b16 %v299
  %v1202 = vunpack.c.h.b16 %v299
  %v1203 = vunpack.c.l.b16 %v300
  %v1204 = vunpack.c.h.b16 %v300
  %v1205 = vunpack.c.l.b16 %v301
  %v1206 = vunpack.c.h.b16 %v301
  %v1207 = vunpack.c.l.b16 %v302
  %v1208 = vunpack.c.h.b16 %v302
  %v1209 = vunpack.c.l.b16 %v303
  %v1210 = vunpack.c.h.b16 %v303
  %v1211 = vunpack.c.l.b16 %v304
  %v1212 = vunpack.c.h.b16 %v304
  %v1213 = vunpack.c.l.b16 %v305
  %v1214 = vunpack.c.h.b16 %v305
  %v1215 = vunpack.c.l.b16 %v306
  %v1216 = vunpack.c.h.b16 %v306
  %v1217 = vunpack.c.l.b16 %v307
  %v1218 = vunpack.c.h.b16 %v307
  %v1219 = vunpack.c.l.b16 %v308
  %v1220 = vunpack.c.h.b16 %v308
  %v1221 = vunpack.c.l.b16 %v309
  %v1222 = vunpack.c.h.b16 %v309
  %v1223 = vunpack.c.l.b16 %v310
  %v1224 = vunpack.c.h.b16 %v310
  %v1225 = vunpack.c.l.b16 %v311
  %v1226 = vunpack.c.h.b16 %v311
  %v1227 = vunpack.c.l.b16 %v312
  %v1228 = vunpack.c.h.b16 %v312
  %v1229 = vunpack.c.l.b16 %v313
  %v1230 = vunpack.c.h.b16 %v313
  %v1231 = vunpack.c.l.b16 %v314
  %v1232 = vunpack.c.h.b16 %v314
  %v1233 = vunpack.c.l.b16 %v315
  %v1234 = vunpack.c.h.b16 %v315
  %v1235 = vunpack.c.l.b16 %v316
  %v1236 = vunpack.c.h.b16 %v316
  %v1237 = vunpack.c.l.b16 %v317
  %v1238 = vunpack.c.h.b16 %v317
  %v1239 = vunpack.c.l.b16 %v318
  %v1240 = vunpack.c.h.b16 %v318
  %v1241 = vunpack.c.l.b16 %v319
  %v1242 = vunpack.c.h.b16 %v319
  %v1243 = vunpack.c.l.b16 %v320
  %v1244 = vunpack.c.h.b16 %v320
  %v1245 = vunpack.c.l.b16 %v321
  %v1246 = vunpack.c.h.b16 %v321
  %v1247 = vunpack.c.l.b16 %v322
  %v1248 = vunpack.c.h.b16 %v322
  %v1249 = vunpack.c.l.b16 %v323
  %v1250 = vunpack.c.h.b16 %v323
  %v1251 = vunpack.c.l.b16 %v324
  %v1252 = vunpack.c.h.b16 %v324
  %v1253 = vunpack.c.l.b16 %v325
  %v1254 = vunpack.c.h.b16 %v325
  %v1255 = vunpack.c.l.b16 %v326
  %v1256 = vunpack.c.h.b16 %v326
  %v1257 = vunpack.c.l.b16 %v327
  %v1258 = vunpack.c.h.b16 %v327
  %v1259 = vunpack.c.l.b16 %v328
  %v1260 = vunpack.c.h.b16 %v328
  %v1261 = vunpack.c.l.b16 %v329
  %v1262 = vunpack.c.h.b16 %v329
  %v1263 = vunpack.c.l.b16 %v330
  %v1264 = vunpack.c.h.b16 %v330
  %v1265 = vunpack.c.l.b16 %v331
  %v1266 = vunpack.c.h.b16 %v331
  %v1267 = vunpack.c.l.b16 %v332
  %v1268 = vunpack.c.h.b16 %v332
  %v1269 = vunpack.c.l.b16 %v333
  %v1270 = vunpack.c.h.b16 %v333
  %v1271 = vunpack.c.l.b16 %v334
  %v1272 = vunpack.c.h.b16 %v334
  %v1273 = vunpack.c.l.b16 %v335
  %v1274 = vunpack.c.h.b16 %v335
  %v1275 = vunpack.c.l.b16 %v336
  %v1276 = vunpack.c.h.b16 %v336
  %v1277 = vunpack.c.l.b16 %v337
  %v1278 = vunpack.c.h.b16 %v337
  %v1279 = vunpack.c.l.b16 %v338
  %v1280 = vunpack.c.h.b16 %v338
  %v1281 = vunpack.c.l.b16 %v339
  %v1282 = vunpack.c.h.b16 %v339
  %v1283 = vunpack.c.l.b16 %v340
  %v1284 = vunpack.c.h.b16 %v340
  %v1285 = vunpack.c.l.b16 %v341
  %v1286 = vunpack.c.h.b16 %v341
  %v1287 = vunpack.c.l.b16 %v342
  %v1288 = vunpack.c.h.b16 %v342
  %v1289 = vunpack.c.l.b16 %v343
  %v1290 = vunpack.c.h.b16 %v343
  %v1291 = vunpack.c.l.b16 %v344
  %v1292 = vunpack.c.h.b16 %v344
  %v1293 = vunpack.c.l.b16 %v345
  %v1294 = vunpack.c.h.b16 %v345
  %v1295 = vunpack.c.l.b16 %v346
  %v1296 = vunpack.c.h.b16 %v346
  %v1297 = vunpack.c.l.b16 %v347
  %v1298 = vunpack.c.h.b16 %v347
  %v1299 = vunpack.c.l.b16 %v348
  %v1300 = vunpack.c.h.b16 %v348
  %v1301 = vunpack.c.l.b16 %v349
  %v1302 = vunpack.c.h.b16 %v349
  %v1303 = vunpack.c.l.b16 %v350
  %v1304 = vunpack.c.h.b16 %v350
  %v1305 = vunpack.c.l.b16 %v351
  %v1306 = vunpack.c.h.b16 %v351
  %v1307 = vunpack.c.l.b16 %v352
  %v1308 = vunpack.c.h.b16 %v352
  %v1309 = vunpack.c.l.b16 %v353
  %v1310 = vunpack.c.h.b16 %v353
  %v1311 = vunpack.c.l.b16 %v354
  %v1312 = vunpack.c.h.b16 %v354
  %v1313 = vunpack.c.l.b16 %v355
  %v1314 = vunpack.c.h.b16 %v355
  %v1315 = vunpack.c.l.b16 %v356
  %v1316 = vunpack.c.h.b16 %v356
  %v1317 = vunpack.c.l.b16 %v357
  %v1318 = vunpack.c.h.b16 %v357
  %v1319 = vunpack.c.l.b16 %v358
  %v1320 = vunpack.c.h.b16 %v358
  %v1321 = vunpack.c.l.b16 %v359
  %v1322 = vunpack.c.h.b16 %v359
  %v1323 = vunpack.c.l.b16 %v360
  %v1324 = vunpack.c.h.b16 %v360
  %v1325 = vunpack.c.l.b16 %v361
  %v1326 = vunpack.c.h.b16 %v361
  %v1327 = vunpack.c.l.b16 %v362
  %v1328 = vunpack.c.h.b16 %v362
  %v1329 = vunpack.c.l.b16 %v363
  %v1330 = vunpack.c.h.b16 %v363
  %v1331 = vunpack.c.l.b16 %v364
  %v1332 = vunpack.c.h.b16 %v364
  %v1333 = vunpack.c.l.b16 %v365
  %v1334 = vunpack.c.h.b16 %v365
  %v1335 = vunpack.c.l.b16 %v366
  %v1336 = vunpack.c.h.b16 %v366
  %v1337 = vunpack.c.l.b16 %v367
  %v1338 = vunpack.c.h.b16 %v367
  %v1339 = vunpack.c.l.b16 %v368
  %v1340 = vunpack.c.h.b16 %v368
  %v1341 = vunpack.c.l.b16 %v369
  %v1342 = vunpack.c.h.b16 %v369
  %v1343 = vunpack.c.l.b16 %v370
  %v1344 = vunpack.c.h.b16 %v370
  %v1345 = vunpack.c.l.b16 %v371
  %v1346 = vunpack.c.h.b16 %v371
  %v1347 = vunpack.c.l.b16 %v372
  %v1348 = vunpack.c.h.b16 %v372
  %v1349 = vunpack.c.l.b16 %v373
  %v1350 = vunpack.c.h.b16 %v373
  %v1351 = vunpack.c.l.b16 %v374
  %v1352 = vunpack.c.h.b16 %v374
  %v1353 = vunpack.c.l.b16 %v375
  %v1354 = vunpack.c.h.b16 %v375
  %v1355 = vunpack.c.l.b16 %v376
  %v1356 = vunpack.c.h.b16 %v376
  %v1357 = vunpack.c.l.b16 %v377
  %v1358 = vunpack.c.h.b16 %v377
  %v1359 = vunpack.c.l.b16 %v378
  %v1360 = vunpack.c.h.b16 %v378
  %v1361 = vpack.c.b16 %v725, %v721
  %v1362 = vpack.c.b16 %v726, %v722
  %v1363 = vpack.c.b16 %v727, %v723
  %v1364 = vpack.c.b16 %v728, %v724
  %v1365 = vpack.c.b16 %v733, %v729
  %v1366 = vpack.c.b16 %v734, %v730
  %v1367 = vpack.c.b16 %v735, %v731
  %v1368 = vpack.c.b16 %v736, %v732
  %v1369 = vpack.c.b16 %v741, %v737
  %v1370 = vpack.c.b16 %v742, %v738
  %v1371 = vpack.c.b16 %v743, %v739
  %v1372 = vpack.c.b16 %v744, %v740
  %v1373 = vpack.c.b16 %v749, %v745
  %v1374 = vpack.c.b16 %v750, %v746
  %v1375 = vpack.c.b16 %v751, %v747
  %v1376 = vpack.c.b16 %v752, %v748
  %v1377 = vpack.c.b16 %v757, %v753
  %v1378 = vpack.c.b16 %v758, %v754
  %v1379 = vpack.c.b16 %v759, %v755
  %v1380 = vpack.c.b16 %v760, %v756
  %v1381 = vpack.c.b16 %v765, %v761
  %v1382 = vpack.c.b16 %v766, %v762
  %v1383 = vpack.c.b16 %v767, %v763
  %v1384 = vpack.c.b16 %v768, %v764
  %v1385 = vpack.c.b16 %v773, %v769
  %v1386 = vpack.c.b16 %v774, %v770
  %v1387 = vpack.c.b16 %v775, %v771
  %v1388 = vpack.c.b16 %v776, %v772
  %v1389 = vpack.c.b16 %v781, %v777
  %v1390 = vpack.c.b16 %v782, %v778
  %v1391 = vpack.c.b16 %v783, %v779
  %v1392 = vpack.c.b16 %v784, %v780
  %v1393 = vpack.c.b16 %v789, %v785
  %v1394 = vpack.c.b16 %v790, %v786
  %v1395 = vpack.c.b16 %v791, %v787
  %v1396 = vpack.c.b16 %v792, %v788
  %v1397 = vpack.c.b16 %v797, %v793
  %v1398 = vpack.c.b16 %v798, %v794
  %v1399 = vpack.c.b16 %v799, %v795
  %v1400 = vpack.c.b16 %v800, %v796
  %v1401 = vpack.c.b16 %v805, %v801
  %v1402 = vpack.c.b16 %v806, %v802
  %v1403 = vpack.c.b16 %v807, %v803
  %v1404 = vpack.c.b16 %v808, %v804
  %v1405 = vpack.c.b16 %v813, %v809
  %v1406 = vpack.c.b16 %v814, %v810
  %v1407 = vpack.c.b16 %v815, %v811
  %v1408 = vpack.c.b16 %v816, %v812
  %v1409 = vpack.c.b16 %v821, %v817
  %v1410 = vpack.c.b16 %v822, %v818
  %v1411 = vpack.c.b16 %v823, %v819
  %v1412 = vpack.c.b16 %v824, %v820
  %v1413 = vpack.c.b16 %v829, %v825
  %v1414 = vpack.c.b16 %v830, %v826
  %v1415 = vpack.c.b16 %v831, %v827
  %v1416 = vpack.c.b16 %v832, %v828
  %v1417 = vpack.c.b16 %v837, %v833
  %v1418 = vpack.c.b16 %v838, %v834
  %v1419 = vpack.c.b16 %v839, %v835
  %v1420 = vpack.c.b16 %v840, %v836
  %v1421 = vpack.c.b16 %v845, %v841
  %v1422 = vpack.c.b16 %v846, %v842
  %v1423 = vpack.c.b16 %v847, %v843
  %v1424 = vpack.c.b16 %v848, %v844
  %v1425 = vpack.c.b16 %v853, %v849
  %v1426 = vpack.c.b16 %v854, %v850
  %v1427 = vpack.c.b16 %v855, %v851
  %v1428 = vpack.c.b16 %v856, %v852
  %v1429 = vpack.c.b16 %v861, %v857
  %v1430 = vpack.c.b16 %v862, %v858
  %v1431 = vpack.c.b16 %v863, %v859
  %v1432 = vpack.c.b16 %v864, %v860
  %v1433 = vpack.c.b16 %v869, %v865
  %v1434 = vpack.c.b16 %v870, %v866
  %v1435 = vpack.c.b16 %v871, %v867
  %v1436 = vpack.c.b16 %v872, %v868
  %v1437 = vpack.c.b16 %v877, %v873
  %v1438 = vpack.c.b16 %v878, %v874
  %v1439 = vpack.c.b16 %v879, %v875
  %v1440 = vpack.c.b16 %v880, %v876
  %v1441 = vpack.c.b16 %v885, %v881
  %v1442 = vpack.c.b16 %v886, %v882
  %v1443 = vpack.c.b16 %v887, %v883
  %v1444 = vpack.c.b16 %v888, %v884
  %v1445 = vpack.c.b16 %v893, %v889
  %v1446 = vpack.c.b16 %v894, %v890
  %v1447 = vpack.c.b16 %v895, %v891
  %v1448 = vpack.c.b16 %v896, %v892
  %v1449 = vpack.c.b16 %v901, %v897
  %v1450 = vpack.c.b16 %v902, %v898
  %v1451 = vpack.c.b16 %v903, %v899
  %v1452 = vpack.c.b16 %v904, %v900
  %v1453 = vpack.c.b16 %v909, %v905
  %v1454 = vpack.c.b16 %v910, %v906
  %v1455 = vpack.c.b16 %v911, %v907
  %v1456 = vpack.c.b16 %v912, %v908
  %v1457 = vpack.c.b16 %v917, %v913
  %v1458 = vpack.c.b16 %v918, %v914
  %v1459 = vpack.c.b16 %v919, %v915
  %v1460 = vpack.c.b16 %v920, %v916
  %v1461 = vpack.c.b16 %v925, %v921
  %v1462 = vpack.c.b16 %v926, %v922
  %v1463 = vpack.c.b16 %v927, %v923
  %v1464 = vpack.c.b16 %v928, %v924
  %v1465 = vpack.c.b16 %v933, %v929
  %v1466 = vpack.c.b16 %v934, %v930
  %v1467 = vpack.c.b16 %v935, %v931
  %v1468 = vpack.c.b16 %v936, %v932
  %v1469 = vpack.c.b16 %v941, %v937
  %v1470 = vpack.c.b16 %v942, %v938
  %v1471 = vpack.c.b16 %v943, %v939
  %v1472 = vpack.c.b16 %v944, %v940
  %v1473 = vpack.c.b16 %v949, %v945
  %v1474 = vpack.c.b16 %v950, %v946
  %v1475 = vpack.c.b16 %v951, %v947
  %v1476 = vpack.c.b16 %v952, %v948
  %v1477 = vpack.c.b16 %v957, %v953
  %v1478 = vpack.c.b16 %v958, %v954
  %v1479 = vpack.c.b16 %v959, %v955
  %v1480 = vpack.c.b16 %v960, %v956
  %v1481 = vpack.c.b16 %v965, %v961
  %v1482 = vpack.c.b16 %v966, %v962
  %v1483 = vpack.c.b16 %v967, %v963
  %v1484 = vpack.c.b16 %v968, %v964
  %v1485 = vpack.c.b16 %v973, %v969
  %v1486 = vpack.c.b16 %v974, %v970
  %v1487 = vpack.c.b16 %v975, %v971
  %v1488 = vpack.c.b16 %v976, %v972
  %v1489 = vpack.c.b16 %v981, %v977
  %v1490 = vpack.c.b16 %v982, %v978
  %v1491 = vpack.c.b16 %v983, %v979
  %v1492 = vpack.c.b16 %v984, %v980
  %v1493 = vpack.c.b16 %v989, %v985
  %v1494 = vpack.c.b16 %v990, %v986
  %v1495 = vpack.c.b16 %v991, %v987
  %v1496 = vpack.c.b16 %v992, %v988
  %v1497 = vpack.c.b16 %v997, %v993
  %v1498 = vpack.c.b16 %v998, %v994
  %v1499 = vpack.c.b16 %v999, %v995
  %v1500 = vpack.c.b16 %v1000, %v996
  %v1501 = vpack.c.b16 %v1005, %v1001
  %v1502 = vpack.c.b16 %v1006, %v1002
  %v1503 = vpack.c.b16 %v1007, %v1003
  %v1504 = vpack.c.b16 %v1008, %v1004
  %v1505 = vpack.c.b16 %v1013, %v1009
  %v1506 = vpack.c.b16 %v1014, %v1010
  %v1507 = vpack.c.b16 %v1015, %v1011
  %v1508 = vpack.c.b16 %v1016, %v1012
  %v1509 = vpack.c.b16 %v1021, %v1017
  %v1510 = vpack.c.b16 %v1022, %v1018
  %v1511 = vpack.c.b16 %v1023, %v1019
  %v1512 = vpack.c.b16 %v1024, %v1020
  %v1513 = vpack.c.b16 %v1029, %v1025
  %v1514 = vpack.c.b16 %v1030, %v1026
  %v1515 = vpack.c.b16 %v1031, %v1027
  %v1516 = vpack.c.b16 %v1032, %v1028
  %v1517 = vpack.c.b16 %v1037, %v1033
  %v1518 = vpack.c.b16 %v1038, %v1034
  %v1519 = vpack.c.b16 %v1039, %v1035
  %v1520 = vpack.c.b16 %v1040, %v1036
  %v1521 = vpack.c.b16 %v1045, %v1041
  %v1522 = vpack.c.b16 %v1046, %v1042
  %v1523 = vpack.c.b16 %v1047, %v1043
  %v1524 = vpack.c.b16 %v1048, %v1044
  %v1525 = vpack.c.b16 %v1053, %v1049
  %v1526 = vpack.c.b16 %v1054, %v1050
  %v1527 = vpack.c.b16 %v1055, %v1051
  %v1528 = vpack.c.b16 %v1056, %v1052
  %v1529 = vpack.c.b16 %v1061, %v1057
  %v1530 = vpack.c.b16 %v1062, %v1058
  %v1531 = vpack.c.b16 %v1063, %v1059
  %v1532 = vpack.c.b16 %v1064, %v1060
  %v1533 = vpack.c.b16 %v1069, %v1065
  %v1534 = vpack.c.b16 %v1070, %v1066
  %v1535 = vpack.c.b16 %v1071, %v1067
  %v1536 = vpack.c.b16 %v1072, %v1068
  %v1537 = vpack.c.b16 %v1077, %v1073
  %v1538 = vpack.c.b16 %v1078, %v1074
  %v1539 = vpack.c.b16 %v1079, %v1075
  %v1540 = vpack.c.b16 %v1080, %v1076
  %v1541 = vpack.c.b16 %v1085, %v1081
  %v1542 = vpack.c.b16 %v1086, %v1082
  %v1543 = vpack.c.b16 %v1087, %v1083
  %v1544 = vpack.c.b16 %v1088, %v1084
  %v1545 = vpack.c.b16 %v1093, %v1089
  %v1546 = vpack.c.b16 %v1094, %v1090
  %v1547 = vpack.c.b16 %v1095, %v1091
  %v1548 = vpack.c.b16 %v1096, %v1092
  %v1549 = vpack.c.b16 %v1101, %v1097
  %v1550 = vpack.c.b16 %v1102, %v1098
  %v1551 = vpack.c.b16 %v1103, %v1099
  %v1552 = vpack.c.b16 %v1104, %v1100
  %v1553 = vpack.c.b16 %v1109, %v1105
  %v1554 = vpack.c.b16 %v1110, %v1106
  %v1555 = vpack.c.b16 %v1111, %v1107
  %v1556 = vpack.c.b16 %v1112, %v1108
  %v1557 = vpack.c.b16 %v1117, %v1113
  %v1558 = vpack.c.b16 %v1118, %v1114
  %v1559 = vpack.c.b16 %v1119, %v1115
  %v1560 = vpack.c.b16 %v1120, %v1116
  %v1561 = vpack.c.b16 %v1125, %v1121
  %v1562 = vpack.c.b16 %v1126, %v1122
  %v1563 = vpack.c.b16 %v1127, %v1123
  %v1564 = vpack.c.b16 %v1128, %v1124
  %v1565 = vpack.c.b16 %v1133, %v1129
  %v1566 = vpack.c.b16 %v1134, %v1130
  %v1567 = vpack.c.b16 %v1135, %v1131
  %v1568 = vpack.c.b16 %v1136, %v1132
  %v1569 = vpack.c.b16 %v1141, %v1137
  %v1570 = vpack.c.b16 %v1142, %v1138
  %v1571 = vpack.c.b16 %v1143, %v1139
  %v1572 = vpack.c.b16 %v1144, %v1140
  %v1573 = vpack.c.b16 %v1149, %v1145
  %v1574 = vpack.c.b16 %v1150, %v1146
  %v1575 = vpack.c.b16 %v1151, %v1147
  %v1576 = vpack.c.b16 %v1152, %v1148
  %v1577 = vpack.c.b16 %v1157, %v1153
  %v1578 = vpack.c.b16 %v1158, %v1154
  %v1579 = vpack.c.b16 %v1159, %v1155
  %v1580 = vpack.c.b16 %v1160, %v1156
  %v1581 = vpack.c.b16 %v1165, %v1161
  %v1582 = vpack.c.b16 %v1166, %v1162
  %v1583 = vpack.c.b16 %v1167, %v1163
  %v1584 = vpack.c.b16 %v1168, %v1164
  %v1585 = vpack.c.b16 %v1173, %v1169
  %v1586 = vpack.c.b16 %v1174, %v1170
  %v1587 = vpack.c.b16 %v1175, %v1171
  %v1588 = vpack.c.b16 %v1176, %v1172
  %v1589 = vpack.c.b16 %v1181, %v1177
  %v1590 = vpack.c.b16 %v1182, %v1178
  %v1591 = vpack.c.b16 %v1183, %v1179
  %v1592 = vpack.c.b16 %v1184, %v1180
  %v1593 = vpack.c.b16 %v1189, %v1185
  %v1594 = vpack.c.b16 %v1190, %v1186
  %v1595 = vpack.c.b16 %v1191, %v1187
  %v1596 = vpack.c.b16 %v1192, %v1188
  %v1597 = vpack.c.b16 %v1197, %v1193
  %v1598 = vpack.c.b16 %v1198, %v1194
  %v1599 = vpack.c.b16 %v1199, %v1195
  %v1600 = vpack.c.b16 %v1200, %v1196
  %v1601 = vpack.c.b16 %v1205, %v1201
  %v1602 = vpack.c.b16 %v1206, %v1202
  %v1603 = vpack.c.b16 %v1207, %v1203
  %v1604 = vpack.c.b16 %v1208, %v1204
  %v1605 = vpack.c.b16 %v1213, %v1209
  %v1606 = vpack.c.b16 %v1214, %v1210
  %v1607 = vpack.c.b16 %v1215, %v1211
  %v1608 = vpack.c.b16 %v1216, %v1212
  %v1609 = vpack.c.b16 %v1221, %v1217
  %v1610 = vpack.c.b16 %v1222, %v1218
  %v1611 = vpack.c.b16 %v1223, %v1219
  %v1612 = vpack.c.b16 %v1224, %v1220
  %v1613 = vpack.c.b16 %v1229, %v1225
  %v1614 = vpack.c.b16 %v1230, %v1226
  %v1615 = vpack.c.b16 %v1231, %v1227
  %v1616 = vpack.c.b16 %v1232, %v1228
  %v1617 = vpack.c.b16 %v1237, %v1233
  %v1618 = vpack.c.b16 %v1238, %v1234
  %v1619 = vpack.c.b16 %v1239, %v1235
  %v1620 = vpack.c.b16 %v1240, %v1236
  %v1621 = vpack.c.b16 %v1245, %v1241
  %v1622 = vpack.c.b16 %v1246, %v1242
  %v1623 = vpack.c.b16 %v1247, %v1243
  %v1624 = vpack.c.b16 %v1248, %v1244
  %v1625 = vpack.c.b16 %v1253, %v1249
  %v1626 = vpack.c.b16 %v1254, %v1250
  %v1627 = vpack.c.b16 %v1255, %v1251
  %v1628 = vpack.c.b16 %v1256, %v1252
  %v1629 = vpack.c.b16 %v1261, %v1257
  %v1630 = vpack.c.b16 %v1262, %v1258
  %v1631 = vpack.c.b16 %v1263, %v1259
  %v1632 = vpack.c.b16 %v1264, %v1260
  %v1633 = vpack.c.b16 %v1269, %v1265
  %v1634 = vpack.c.b16 %v1270, %v1266
  %v1635 = vpack.c.b16 %v1271, %v1267
  %v1636 = vpack.c.b16 %v1272, %v1268
  %v1637 = vpack.c.b16 %v1277, %v1273
  %v1638 = vpack.c.b16 %v1278, %v1274
  %v1639 = vpack.c.b16 %v1279, %v1275
  %v1640 = vpack.c.b16 %v1280, %v1276
  %v1641 = vpack.c.b16 %v1285, %v1281
  %v1642 = vpack.c.b16 %v1286, %v1282
  %v1643 = vpack.c.b16 %v1287, %v1283
  %v1644 = vpack.c.b16 %v1288, %v1284
  %v1645 = vpack.c.b16 %v1293, %v1289
  %v1646 = vpack.c.b16 %v1294, %v1290
  %v1647 = vpack.c.b16 %v1295, %v1291
  %v1648 = vpack.c.b16 %v1296, %v1292
  %v1649 = vpack.c.b16 %v1301, %v1297
  %v1650 = vpack.c.b16 %v1302, %v1298
  %v1651 = vpack.c.b16 %v1303, %v1299
  %v1652 = vpack.c.b16 %v1304, %v1300
  %v1653 = vpack.c.b16 %v1309, %v1305
  %v1654 = vpack.c.b16 %v1310, %v1306
  %v1655 = vpack.c.b16 %v1311, %v1307
  %v1656 = vpack.c.b16 %v1312, %v1308
  %v1657 = vpack.c.b16 %v1317, %v1313
  %v1658 = vpack.c.b16 %v1318, %v1314
  %v1659 = vpack.c.b16 %v1319, %v1315
  %v1660 = vpack.c.b16 %v1320, %v1316
  %v1661 = vpack.c.b16 %v1325, %v1321
  %v1662 = vpack.c.b16 %v1326, %v1322
  %v1663 = vpack.c.b16 %v1327, %v1323
  %v1664 = vpack.c.b16 %v1328, %v1324
  %v1665 = vpack.c.b16 %v1333, %v1329
  %v1666 = vpack.c.b16 %v1334, %v1330
  %v1667 = vpack.c.b16 %v1335, %v1331
  %v1668 = vpack.c.b16 %v1336, %v1332
  %v1669 = vpack.c.b16 %v1341, %v1337
  %v1670 = vpack.c.b16 %v1342, %v1338
  %v1671 = vpack.c.b16 %v1343, %v1339
  %v1672 = vpack.c.b16 %v1344, %v1340
  %v1673 = vpack.c.b16 %v1349, %v1345
  %v1674 = vpack.c.b16 %v1350, %v1346
  %v1675 = vpack.c.b16 %v1351, %v1347
  %v1676 = vpack.c.b16 %v1352, %v1348
  %v1677 = vpack.c.b16 %v1357, %v1353
  %v1678 = vpack.c.b16 %v1358, %v1354
  %v1679 = vpack.c.b16 %v1359, %v1355
  %v1680 = vpack.c.b16 %v1360, %v1356
  %2001 = vmatprep.subr.bf16.mxu0 %v1362
  %2002 = vmatpush1.bf16.msra.mxu0 %v1361
  %2003 = vmatprep.subr.bf16.mxu0 %v1366
  %2004 = vmatpush1.bf16.msra.mxu0 %v1365
  %2005 = vmatprep.subr.bf16.mxu0 %v1370
  %2006 = vmatpush1.bf16.msra.mxu0 %v1369
  %2007 = vmatprep.subr.bf16.mxu0 %v1374
  %2008 = vmatpush1.bf16.msra.mxu0 %v1373
  %2009 = vmatprep.subr.bf16.mxu0 %v1378
  %2010 = vmatpush1.bf16.msra.mxu0 %v1377
  %2011 = vmatprep.subr.bf16.mxu0 %v1382
  %2012 = vmatpush1.bf16.msra.mxu0 %v1381
  %2013 = vmatprep.subr.bf16.mxu0 %v1386
  %2014 = vmatpush1.bf16.msra.mxu0 %v1385
  %2015 = vmatprep.subr.bf16.mxu0 %v1390
  %2016 = vmatpush1.bf16.msra.mxu0 %v1389
  %2017 = vmatprep.subr.bf16.mxu0 %v1394
  %2018 = vmatpush1.bf16.msra.mxu0 %v1393
  %2019 = vmatprep.subr.bf16.mxu0 %v1398
  %2020 = vmatpush1.bf16.msra.mxu0 %v1397
  %2021 = vmatprep.subr.bf16.mxu0 %v1402
  %2022 = vmatpush1.bf16.msra.mxu0 %v1401
  %2023 = vmatprep.subr.bf16.mxu0 %v1406
  %2024 = vmatpush1.bf16.msra.mxu0 %v1405
  %2025 = vmatprep.subr.bf16.mxu0 %v1410
  %2026 = vmatpush1.bf16.msra.mxu0 %v1409
  %2027 = vmatprep.subr.bf16.mxu0 %v1414
  %2028 = vmatpush1.bf16.msra.mxu0 %v1413
  %2029 = vmatprep.subr.bf16.mxu0 %v1418
  %2030 = vmatpush1.bf16.msra.mxu0 %v1417
  %2031 = vmatprep.subr.bf16.mxu0 %v1422
  %2032 = vmatpush1.bf16.msra.mxu0 %v1421
  %2033 = vmatprep.mubr.bf16.mxu0 %v50
  %2034 = vmatmul.mubr.bf16.gmra.mrb[0].mxu0 %v49
  %v2035 = vpop.f32.mrb[0].mxu0
  %v2036 = vadd.f32 %v384, %v2035
  %v2037 = vpop.f32.mrb[0].mxu0
  %v2038 = vadd.f32 %v388, %v2037
  %v2039 = vpop.f32.mrb[0].mxu0
  %v2040 = vpop.f32.mrb[0].mxu0
  %2041 = vdwg.mxu0
  %2042 = vmatprep.subr.bf16.mxu0 %v1426
  %2043 = vmatpush1.bf16.msra.mxu0 %v1425
  %2044 = vmatprep.subr.bf16.mxu0 %v1430
  %2045 = vmatpush1.bf16.msra.mxu0 %v1429
  %2046 = vmatprep.subr.bf16.mxu0 %v1434
  %2047 = vmatpush1.bf16.msra.mxu0 %v1433
  %2048 = vmatprep.subr.bf16.mxu0 %v1438
  %2049 = vmatpush1.bf16.msra.mxu0 %v1437
  %2050 = vmatprep.subr.bf16.mxu0 %v1442
  %2051 = vmatpush1.bf16.msra.mxu0 %v1441
  %2052 = vmatprep.subr.bf16.mxu0 %v1446
  %2053 = vmatpush1.bf16.msra.mxu0 %v1445
  %2054 = vmatprep.subr.bf16.mxu0 %v1450
  %2055 = vmatpush1.bf16.msra.mxu0 %v1449
  %2056 = vmatprep.subr.bf16.mxu0 %v1454
  %2057 = vmatpush1.bf16.msra.mxu0 %v1453
  %2058 = vmatprep.subr.bf16.mxu0 %v1458
  %2059 = vmatpush1.bf16.msra.mxu0 %v1457
  %2060 = vmatprep.subr.bf16.mxu0 %v1462
  %2061 = vmatpush1.bf16.msra.mxu0 %v1461
  %2062 = vmatprep.subr.bf16.mxu0 %v1466
  %2063 = vmatpush1.bf16.msra.mxu0 %v1465
  %2064 = vmatprep.subr.bf16.mxu0 %v1470
  %2065 = vmatpush1.bf16.msra.mxu0 %v1469
  %2066 = vmatprep.subr.bf16.mxu0 %v1474
  %2067 = vmatpush1.bf16.msra.mxu0 %v1473
  %2068 = vmatprep.subr.bf16.mxu0 %v1478
  %2069 = vmatpush1.bf16.msra.mxu0 %v1477
  %2070 = vmatprep.subr.bf16.mxu0 %v1482
  %2071 = vmatpush1.bf16.msra.mxu0 %v1481
  %2072 = vmatprep.subr.bf16.mxu0 %v1486
  %2073 = vmatpush1.bf16.msra.mxu0 %v1485
  %2074 = vmatprep.mubr.bf16.mxu0 %v52
  %2075 = vmatmul.mubr.bf16.gmra.mrb[0].mxu0 %v51
  %v2076 = vpop.f32.mrb[0].mxu0
  %v2077 = vadd.f32 %v2036, %v2076
  %v2078 = vpop.f32.mrb[0].mxu0
  %v2079 = vadd.f32 %v2038, %v2078
  %v2080 = vpop.f32.mrb[0].mxu0
  %v2081 = vpop.f32.mrb[0].mxu0
  %2082 = vdwg.mxu0
  %2083 = vmatprep.subr.bf16.mxu0 %v1490
  %2084 = vmatpush1.bf16.msra.mxu0 %v1489
  %2085 = vmatprep.subr.bf16.mxu0 %v1494
  %2086 = vmatpush1.bf16.msra.mxu0 %v1493
  %2087 = vmatprep.subr.bf16.mxu0 %v1498
  %2088 = vmatpush1.bf16.msra.mxu0 %v1497
  %2089 = vmatprep.subr.bf16.mxu0 %v1502
  %2090 = vmatpush1.bf16.msra.mxu0 %v1501
  %2091 = vmatprep.subr.bf16.mxu0 %v1506
  %2092 = vmatpush1.bf16.msra.mxu0 %v1505
  %2093 = vmatprep.subr.bf16.mxu0 %v1510
  %2094 = vmatpush1.bf16.msra.mxu0 %v1509
  %2095 = vmatprep.subr.bf16.mxu0 %v1514
  %2096 = vmatpush1.bf16.msra.mxu0 %v1513
  %2097 = vmatprep.subr.bf16.mxu0 %v1518
  %2098 = vmatpush1.bf16.msra.mxu0 %v1517
  %2099 = vmatprep.subr.bf16.mxu0 %v1522
  %2100 = vmatpush1.bf16.msra.mxu0 %v1521
  %2101 = vmatprep.subr.bf16.mxu0 %v1526
  %2102 = vmatpush1.bf16.msra.mxu0 %v1525
  %2103 = vmatprep.subr.bf16.mxu0 %v1530
  %2104 = vmatpush1.bf16.msra.mxu0 %v1529
  %2105 = vmatprep.subr.bf16.mxu0 %v1534
  %2106 = vmatpush1.bf16.msra.mxu0 %v1533
  %2107 = vmatprep.subr.bf16.mxu0 %v1538
  %2108 = vmatpush1.bf16.msra.mxu0 %v1537
  %2109 = vmatprep.subr.bf16.mxu0 %v1542
  %2110 = vmatpush1.bf16.msra.mxu0 %v1541
  %2111 = vmatprep.subr.bf16.mxu0 %v1546
  %2112 = vmatpush1.bf16.msra.mxu0 %v1545
  %2113 = vmatprep.subr.bf16.mxu0 %v1550
  %2114 = vmatpush1.bf16.msra.mxu0 %v1549
  %2115 = vmatprep.mubr.bf16.mxu0 %v54
  %2116 = vmatmul.mubr.bf16.gmra.mrb[0].mxu0 %v53
  %v2117 = vpop.f32.mrb[0].mxu0
  %v2118 = vadd.f32 %v2077, %v2117
  %v2119 = vpop.f32.mrb[0].mxu0
  %v2120 = vadd.f32 %v2079, %v2119
  %v2121 = vpop.f32.mrb[0].mxu0
  %v2122 = vpop.f32.mrb[0].mxu0
  %2123 = vdwg.mxu0
  %2124 = vmatprep.subr.bf16.mxu0 %v1554
  %2125 = vmatpush1.bf16.msra.mxu0 %v1553
  %2126 = vmatprep.subr.bf16.mxu0 %v1558
  %2127 = vmatpush1.bf16.msra.mxu0 %v1557
  %2128 = vmatprep.subr.bf16.mxu0 %v1562
  %2129 = vmatpush1.bf16.msra.mxu0 %v1561
  %2130 = vmatprep.subr.bf16.mxu0 %v1566
  %2131 = vmatpush1.bf16.msra.mxu0 %v1565
  %2132 = vmatprep.subr.bf16.mxu0 %v1570
  %2133 = vmatpush1.bf16.msra.mxu0 %v1569
  %2134 = vmatprep.subr.bf16.mxu0 %v1574
  %2135 = vmatpush1.bf16.msra.mxu0 %v1573
  %2136 = vmatprep.subr.bf16.mxu0 %v1578
  %2137 = vmatpush1.bf16.msra.mxu0 %v1577
  %2138 = vmatprep.subr.bf16.mxu0 %v1582
  %2139 = vmatpush1.bf16.msra.mxu0 %v1581
  %2140 = vmatprep.subr.bf16.mxu0 %v1586
  %2141 = vmatpush1.bf16.msra.mxu0 %v1585
  %2142 = vmatprep.subr.bf16.mxu0 %v1590
  %2143 = vmatpush1.bf16.msra.mxu0 %v1589
  %2144 = vmatprep.subr.bf16.mxu0 %v1594
  %2145 = vmatpush1.bf16.msra.mxu0 %v1593
  %2146 = vmatprep.subr.bf16.mxu0 %v1598
  %2147 = vmatpush1.bf16.msra.mxu0 %v1597
  %2148 = vmatprep.subr.bf16.mxu0 %v1602
  %2149 = vmatpush1.bf16.msra.mxu0 %v1601
  %2150 = vmatprep.subr.bf16.mxu0 %v1606
  %2151 = vmatpush1.bf16.msra.mxu0 %v1605
  %2152 = vmatprep.subr.bf16.mxu0 %v1610
  %2153 = vmatpush1.bf16.msra.mxu0 %v1609
  %2154 = vmatprep.subr.bf16.mxu0 %v1614
  %2155 = vmatpush1.bf16.msra.mxu0 %v1613
  %2156 = vmatprep.mubr.bf16.mxu0 %v56
  %2157 = vmatmul.mubr.bf16.gmra.mrb[0].mxu0 %v55
  %v2158 = vpop.f32.mrb[0].mxu0
  %v2159 = vadd.f32 %v2118, %v2158
  %v2160 = vpop.f32.mrb[0].mxu0
  %v2161 = vadd.f32 %v2120, %v2160
  %v2162 = vpop.f32.mrb[0].mxu0
  %v2163 = vpop.f32.mrb[0].mxu0
  %2164 = vdwg.mxu0
  %2165 = vmatprep.subr.bf16.mxu0 %v1618
  %2166 = vmatpush1.bf16.msra.mxu0 %v1617
  %2167 = vmatprep.subr.bf16.mxu0 %v1622
  %2168 = vmatpush1.bf16.msra.mxu0 %v1621
  %2169 = vmatprep.subr.bf16.mxu0 %v1626
  %2170 = vmatpush1.bf16.msra.mxu0 %v1625
  %2171 = vmatprep.subr.bf16.mxu0 %v1630
  %2172 = vmatpush1.bf16.msra.mxu0 %v1629
  %2173 = vmatprep.subr.bf16.mxu0 %v1634
  %2174 = vmatpush1.bf16.msra.mxu0 %v1633
  %2175 = vmatprep.subr.bf16.mxu0 %v1638
  %2176 = vmatpush1.bf16.msra.mxu0 %v1637
  %2177 = vmatprep.subr.bf16.mxu0 %v1642
  %2178 = vmatpush1.bf16.msra.mxu0 %v1641
  %2179 = vmatprep.subr.bf16.mxu0 %v1646
  %2180 = vmatpush1.bf16.msra.mxu0 %v1645
  %2181 = vmatprep.subr.bf16.mxu0 %v1650
  %2182 = vmatpush1.bf16.msra.mxu0 %v1649
  %2183 = vmatprep.subr.bf16.mxu0 %v1654
  %2184 = vmatpush1.bf16.msra.mxu0 %v1653
  %2185 = vmatprep.subr.bf16.mxu0 %v1658
  %2186 = vmatpush1.bf16.msra.mxu0 %v1657
  %2187 = vmatprep.subr.bf16.mxu0 %v1662
  %2188 = vmatpush1.bf16.msra.mxu0 %v1661
  %2189 = vmatprep.subr.bf16.mxu0 %v1666
  %2190 = vmatpush1.bf16.msra.mxu0 %v1665
  %2191 = vmatprep.subr.bf16.mxu0 %v1670
  %2192 = vmatpush1.bf16.msra.mxu0 %v1669
  %2193 = vmatprep.subr.bf16.mxu0 %v1674
  %2194 = vmatpush1.bf16.msra.mxu0 %v1673
  %2195 = vmatprep.subr.bf16.mxu0 %v1678
  %2196 = vmatpush1.bf16.msra.mxu0 %v1677
  %2197 = vmatprep.mubr.bf16.mxu0 %v58
  %2198 = vmatmul.mubr.bf16.gmra.mrb[0].mxu0 %v57
  %v2199 = vpop.f32.mrb[0].mxu0
  %v2200 = vadd.f32 %v2159, %v2199
  %v2201 = vpop.f32.mrb[0].mxu0
  %v2202 = vadd.f32 %v2161, %v2201
  %v2203 = vpop.f32.mrb[0].mxu0
  %v2204 = vpop.f32.mrb[0].mxu0
  %2205 = vdwg.mxu0
  %2206 = vmatprep.subr.bf16.mxu0 %v1364
  %2207 = vmatpush1.bf16.msra.mxu0 %v1363
  %2208 = vmatprep.subr.bf16.mxu0 %v1368
  %2209 = vmatpush1.bf16.msra.mxu0 %v1367
  %2210 = vmatprep.subr.bf16.mxu0 %v1372
  %2211 = vmatpush1.bf16.msra.mxu0 %v1371
  %2212 = vmatprep.subr.bf16.mxu0 %v1376
  %2213 = vmatpush1.bf16.msra.mxu0 %v1375
  %2214 = vmatprep.subr.bf16.mxu0 %v1380
  %2215 = vmatpush1.bf16.msra.mxu0 %v1379
  %2216 = vmatprep.subr.bf16.mxu0 %v1384
  %2217 = vmatpush1.bf16.msra.mxu0 %v1383
  %2218 = vmatprep.subr.bf16.mxu0 %v1388
  %2219 = vmatpush1.bf16.msra.mxu0 %v1387
  %2220 = vmatprep.subr.bf16.mxu0 %v1392
  %2221 = vmatpush1.bf16.msra.mxu0 %v1391
  %2222 = vmatprep.subr.bf16.mxu0 %v1396
  %2223 = vmatpush1.bf16.msra.mxu0 %v1395
  %2224 = vmatprep.subr.bf16.mxu0 %v1400
  %2225 = vmatpush1.bf16.msra.mxu0 %v1399
  %2226 = vmatprep.subr.bf16.mxu0 %v1404
  %2227 = vmatpush1.bf16.msra.mxu0 %v1403
  %2228 = vmatprep.subr.bf16.mxu0 %v1408
  %2229 = vmatpush1.bf16.msra.mxu0 %v1407
  %2230 = vmatprep.subr.bf16.mxu0 %v1412
  %2231 = vmatpush1.bf16.msra.mxu0 %v1411
  %2232 = vmatprep.subr.bf16.mxu0 %v1416
  %2233 = vmatpush1.bf16.msra.mxu0 %v1415
  %2234 = vmatprep.subr.bf16.mxu0 %v1420
  %2235 = vmatpush1.bf16.msra.mxu0 %v1419
  %2236 = vmatprep.subr.bf16.mxu0 %v1424
  %2237 = vmatpush1.bf16.msra.mxu0 %v1423
  %2238 = vmatprep.mubr.bf16.mxu0 %v50
  %2239 = vmatmul.mubr.bf16.gmra.mrb[0].mxu0 %v49
  %v2240 = vpop.f32.mrb[0].mxu0
  %v2241 = vadd.f32 %v392, %v2240
  %v2242 = vpop.f32.mrb[0].mxu0
  %v2243 = vadd.f32 %v396, %v2242
  %v2244 = vpop.f32.mrb[0].mxu0
  %v2245 = vpop.f32.mrb[0].mxu0
  %2246 = vdwg.mxu0
  %2247 = vmatprep.subr.bf16.mxu0 %v1428
  %2248 = vmatpush1.bf16.msra.mxu0 %v1427
  %2249 = vmatprep.subr.bf16.mxu0 %v1432
  %2250 = vmatpush1.bf16.msra.mxu0 %v1431
  %2251 = vmatprep.subr.bf16.mxu0 %v1436
  %2252 = vmatpush1.bf16.msra.mxu0 %v1435
  %2253 = vmatprep.subr.bf16.mxu0 %v1440
  %2254 = vmatpush1.bf16.msra.mxu0 %v1439
  %2255 = vmatprep.subr.bf16.mxu0 %v1444
  %2256 = vmatpush1.bf16.msra.mxu0 %v1443
  %2257 = vmatprep.subr.bf16.mxu0 %v1448
  %2258 = vmatpush1.bf16.msra.mxu0 %v1447
  %2259 = vmatprep.subr.bf16.mxu0 %v1452
  %2260 = vmatpush1.bf16.msra.mxu0 %v1451
  %2261 = vmatprep.subr.bf16.mxu0 %v1456
  %2262 = vmatpush1.bf16.msra.mxu0 %v1455
  %2263 = vmatprep.subr.bf16.mxu0 %v1460
  %2264 = vmatpush1.bf16.msra.mxu0 %v1459
  %2265 = vmatprep.subr.bf16.mxu0 %v1464
  %2266 = vmatpush1.bf16.msra.mxu0 %v1463
  %2267 = vmatprep.subr.bf16.mxu0 %v1468
  %2268 = vmatpush1.bf16.msra.mxu0 %v1467
  %2269 = vmatprep.subr.bf16.mxu0 %v1472
  %2270 = vmatpush1.bf16.msra.mxu0 %v1471
  %2271 = vmatprep.subr.bf16.mxu0 %v1476
  %2272 = vmatpush1.bf16.msra.mxu0 %v1475
  %2273 = vmatprep.subr.bf16.mxu0 %v1480
  %2274 = vmatpush1.bf16.msra.mxu0 %v1479
  %2275 = vmatprep.subr.bf16.mxu0 %v1484
  %2276 = vmatpush1.bf16.msra.mxu0 %v1483
  %2277 = vmatprep.subr.bf16.mxu0 %v1488
  %2278 = vmatpush1.bf16.msra.mxu0 %v1487
  %2279 = vmatprep.mubr.bf16.mxu0 %v52
  %2280 = vmatmul.mubr.bf16.gmra.mrb[0].mxu0 %v51
  %v2281 = vpop.f32.mrb[0].mxu0
  %v2282 = vadd.f32 %v2241, %v2281
  %v2283 = vpop.f32.mrb[0].mxu0
  %v2284 = vadd.f32 %v2243, %v2283
  %v2285 = vpop.f32.mrb[0].mxu0
  %v2286 = vpop.f32.mrb[0].mxu0
  %2287 = vdwg.mxu0
  %2288 = vmatprep.subr.bf16.mxu0 %v1492
  %2289 = vmatpush1.bf16.msra.mxu0 %v1491
  %2290 = vmatprep.subr.bf16.mxu0 %v1496
  %2291 = vmatpush1.bf16.msra.mxu0 %v1495
  %2292 = vmatprep.subr.bf16.mxu0 %v1500
  %2293 = vmatpush1.bf16.msra.mxu0 %v1499
  %2294 = vmatprep.subr.bf16.mxu0 %v1504
  %2295 = vmatpush1.bf16.msra.mxu0 %v1503
  %2296 = vmatprep.subr.bf16.mxu0 %v1508
  %2297 = vmatpush1.bf16.msra.mxu0 %v1507
  %2298 = vmatprep.subr.bf16.mxu0 %v1512
  %2299 = vmatpush1.bf16.msra.mxu0 %v1511
  %2300 = vmatprep.subr.bf16.mxu0 %v1516
  %2301 = vmatpush1.bf16.msra.mxu0 %v1515
  %2302 = vmatprep.subr.bf16.mxu0 %v1520
  %2303 = vmatpush1.bf16.msra.mxu0 %v1519
  %2304 = vmatprep.subr.bf16.mxu0 %v1524
  %2305 = vmatpush1.bf16.msra.mxu0 %v1523
  %2306 = vmatprep.subr.bf16.mxu0 %v1528
  %2307 = vmatpush1.bf16.msra.mxu0 %v1527
  %2308 = vmatprep.subr.bf16.mxu0 %v1532
  %2309 = vmatpush1.bf16.msra.mxu0 %v1531
  %2310 = vmatprep.subr.bf16.mxu0 %v1536
  %2311 = vmatpush1.bf16.msra.mxu0 %v1535
  %2312 = vmatprep.subr.bf16.mxu0 %v1540
  %2313 = vmatpush1.bf16.msra.mxu0 %v1539
  %2314 = vmatprep.subr.bf16.mxu0 %v1544
  %2315 = vmatpush1.bf16.msra.mxu0 %v1543
  %2316 = vmatprep.subr.bf16.mxu0 %v1548
  %2317 = vmatpush1.bf16.msra.mxu0 %v1547
  %2318 = vmatprep.subr.bf16.mxu0 %v1552
  %2319 = vmatpush1.bf16.msra.mxu0 %v1551
  %2320 = vmatprep.mubr.bf16.mxu0 %v54
  %2321 = vmatmul.mubr.bf16.gmra.mrb[0].mxu0 %v53
  %v2322 = vpop.f32.mrb[0].mxu0
  %v2323 = vadd.f32 %v2282, %v2322
  %v2324 = vpop.f32.mrb[0].mxu0
  %v2325 = vadd.f32 %v2284, %v2324
  %v2326 = vpop.f32.mrb[0].mxu0
  %v2327 = vpop.f32.mrb[0].mxu0
  %2328 = vdwg.mxu0
  %2329 = vmatprep.subr.bf16.mxu0 %v1556
  %2330 = vmatpush1.bf16.msra.mxu0 %v1555
  %2331 = vmatprep.subr.bf16.mxu0 %v1560
  %2332 = vmatpush1.bf16.msra.mxu0 %v1559
  %2333 = vmatprep.subr.bf16.mxu0 %v1564
  %2334 = vmatpush1.bf16.msra.mxu0 %v1563
  %2335 = vmatprep.subr.bf16.mxu0 %v1568
  %2336 = vmatpush1.bf16.msra.mxu0 %v1567
  %2337 = vmatprep.subr.bf16.mxu0 %v1572
  %2338 = vmatpush1.bf16.msra.mxu0 %v1571
  %2339 = vmatprep.subr.bf16.mxu0 %v1576
  %2340 = vmatpush1.bf16.msra.mxu0 %v1575
  %2341 = vmatprep.subr.bf16.mxu0 %v1580
  %2342 = vmatpush1.bf16.msra.mxu0 %v1579
  %2343 = vmatprep.subr.bf16.mxu0 %v1584
  %2344 = vmatpush1.bf16.msra.mxu0 %v1583
  %2345 = vmatprep.subr.bf16.mxu0 %v1588
  %2346 = vmatpush1.bf16.msra.mxu0 %v1587
  %2347 = vmatprep.subr.bf16.mxu0 %v1592
  %2348 = vmatpush1.bf16.msra.mxu0 %v1591
  %2349 = vmatprep.subr.bf16.mxu0 %v1596
  %2350 = vmatpush1.bf16.msra.mxu0 %v1595
  %2351 = vmatprep.subr.bf16.mxu0 %v1600
  %2352 = vmatpush1.bf16.msra.mxu0 %v1599
  %2353 = vmatprep.subr.bf16.mxu0 %v1604
  %2354 = vmatpush1.bf16.msra.mxu0 %v1603
  %2355 = vmatprep.subr.bf16.mxu0 %v1608
  %2356 = vmatpush1.bf16.msra.mxu0 %v1607
  %2357 = vmatprep.subr.bf16.mxu0 %v1612
  %2358 = vmatpush1.bf16.msra.mxu0 %v1611
  %2359 = vmatprep.subr.bf16.mxu0 %v1616
  %2360 = vmatpush1.bf16.msra.mxu0 %v1615
  %2361 = vmatprep.mubr.bf16.mxu0 %v56
  %2362 = vmatmul.mubr.bf16.gmra.mrb[0].mxu0 %v55
  %v2363 = vpop.f32.mrb[0].mxu0
  %v2364 = vadd.f32 %v2323, %v2363
  %v2365 = vpop.f32.mrb[0].mxu0
  %v2366 = vadd.f32 %v2325, %v2365
  %v2367 = vpop.f32.mrb[0].mxu0
  %v2368 = vpop.f32.mrb[0].mxu0
  %2369 = vdwg.mxu0
  %2370 = vmatprep.subr.bf16.mxu0 %v1620
  %2371 = vmatpush1.bf16.msra.mxu0 %v1619
  %2372 = vmatprep.subr.bf16.mxu0 %v1624
  %2373 = vmatpush1.bf16.msra.mxu0 %v1623
  %2374 = vmatprep.subr.bf16.mxu0 %v1628
  %2375 = vmatpush1.bf16.msra.mxu0 %v1627
  %2376 = vmatprep.subr.bf16.mxu0 %v1632
  %2377 = vmatpush1.bf16.msra.mxu0 %v1631
  %2378 = vmatprep.subr.bf16.mxu0 %v1636
  %2379 = vmatpush1.bf16.msra.mxu0 %v1635
  %2380 = vmatprep.subr.bf16.mxu0 %v1640
  %2381 = vmatpush1.bf16.msra.mxu0 %v1639
  %2382 = vmatprep.subr.bf16.mxu0 %v1644
  %2383 = vmatpush1.bf16.msra.mxu0 %v1643
  %2384 = vmatprep.subr.bf16.mxu0 %v1648
  %2385 = vmatpush1.bf16.msra.mxu0 %v1647
  %2386 = vmatprep.subr.bf16.mxu0 %v1652
  %2387 = vmatpush1.bf16.msra.mxu0 %v1651
  %2388 = vmatprep.subr.bf16.mxu0 %v1656
  %2389 = vmatpush1.bf16.msra.mxu0 %v1655
  %2390 = vmatprep.subr.bf16.mxu0 %v1660
  %2391 = vmatpush1.bf16.msra.mxu0 %v1659
  %2392 = vmatprep.subr.bf16.mxu0 %v1664
  %2393 = vmatpush1.bf16.msra.mxu0 %v1663
  %2394 = vmatprep.subr.bf16.mxu0 %v1668
  %2395 = vmatpush1.bf16.msra.mxu0 %v1667
  %2396 = vmatprep.subr.bf16.mxu0 %v1672
  %2397 = vmatpush1.bf16.msra.mxu0 %v1671
  %2398 = vmatprep.subr.bf16.mxu0 %v1676
  %2399 = vmatpush1.bf16.msra.mxu0 %v1675
  %2400 = vmatprep.subr.bf16.mxu0 %v1680
  %2401 = vmatpush1.bf16.msra.mxu0 %v1679
  %2402 = vmatprep.mubr.bf16.mxu0 %v58
  %2403 = vmatmul.mubr.bf16.gmra.mrb[0].mxu0 %v57
  %v2404 = vpop.f32.mrb[0].mxu0
  %v2405 = vadd.f32 %v2364, %v2404
  %v2406 = vpop.f32.mrb[0].mxu0
  %v2407 = vadd.f32 %v2366, %v2406
  %v2408 = vpop.f32.mrb[0].mxu0
  %v2409 = vpop.f32.mrb[0].mxu0
  %2410 = vdwg.mxu0
  %v2411 = vmax.f32 %v2200, 0.0
  %v2412 = vmax.f32 %v2202, 0.0
  %v2413 = vmax.f32 %v2405, 0.0
  %v2414 = vmax.f32 %v2407, 0.0
  %v2415 = vpack.c.bf16 %v2411, %v2411
  %v2416 = vpack.c.bf16 %v2412, %v2412
  %v2417 = vpack.c.bf16 %v2413, %v2413
  %v2418 = vpack.c.bf16 %v2414, %v2414
  %v2419 = vld [vmem:[%s3] sm:$0xf]
  %v2420 = vld [vmem:[%s3 + $0x4] sm:$0xf]
  %v2421 = vld [vmem:[%s3 + $0x8] sm:$0xf]
  %v2422 = vld [vmem:[%s3 + $0xc] sm:$0xf]
  %v2423 = vld [vmem:[%s3 + $0x10] sm:$0xf]
  %v2424 = vld [vmem:[%s3 + $0x14] sm:$0xf]
  %v2425 = vld [vmem:[%s3 + $0x18] sm:$0xf]
  %v2426 = vld [vmem:[%s3 + $0x1c] sm:$0xf]
  %v2427 = vld [vmem:[%s3 + $0x20] sm:$0xf]
  %v2428 = vld [vmem:[%s3 + $0x24] sm:$0xf]
  %v2429 = vld [vmem:[%s3 + $0x28] sm:$0xf]
  %v2430 = vld [vmem:[%s3 + $0x2c] sm:$0xf]
  %v2431 = vld [vmem:[%s3 + $0x30] sm:$0xf]
  %v2432 = vld [vmem:[%s3 + $0x34] sm:$0xf]
  %v2433 = vld [vmem:[%s3 + $0x38] sm:$0xf]
  %v2434 = vld [vmem:[%s3 + $0x3c] sm:$0xf]
  %v2435 = vld [vmem:[%s3 + $0x40] sm:$0xf]
  %v2436 = vld [vmem:[%s3 + $0x44] sm:$0xf]
  %v2437 = vld [vmem:[%s3 + $0x48] sm:$0xf]
  %v2438 = vld [vmem:[%s3 + $0x4c] sm:$0xf]
  %v2439 = vld [vmem:[%s3 + $0x50] sm:$0xf]
  %v2440 = vld [vmem:[%s3 + $0x54] sm:$0xf]
  %v2441 = vld [vmem:[%s3 + $0x58] sm:$0xf]
  %v2442 = vld [vmem:[%s3 + $0x5c] sm:$0xf]
  %v2443 = vld [vmem:[%s3 + $0x60] sm:$0xf]
  %v2444 = vld [vmem:[%s3 + $0x64] sm:$0xf]
  %v2445 = vld [vmem:[%s3 + $0x68] sm:$0xf]
  %v2446 = vld [vmem:[%s3 + $0x6c] sm:$0xf]
  %v2447 = vld [vmem:[%s3 + $0x70] sm:$0xf]
  %v2448 = vld [vmem:[%s3 + $0x74] sm:$0xf]
  %v2449 = vld [vmem:[%s3 + $0x78] sm:$0xf]
  %v2450 = vld [vmem:[%s3 + $0x7c] sm:$0xf]
  %v2451 = vld [vmem:[%s3 + $0x80] sm:$0xf]
  %v2452 = vld [vmem:[%s3 + $0x84] sm:$0xf]
  %v2453 = vld [vmem:[%s3 + $0x88] sm:$0xf]
  %v2454 = vld [vmem:[%s3 + $0x8c] sm:$0xf]
  %v2455 = vld [vmem:[%s3 + $0x90] sm:$0xf]
  %v2456 = vld [vmem:[%s3 + $0x94] sm:$0xf]
  %v2457 = vld [vmem:[%s3 + $0x98] sm:$0xf]
  %v2458 = vld [vmem:[%s3 + $0x9c] sm:$0xf]
  %v2459 = vld [vmem:[%s3 + $0xa0] sm:$0xf]
  %v2460 = vld [vmem:[%s3 + $0xa4] sm:$0xf]
  %v2461 = vld [vmem:[%s3 + $0xa8] sm:$0xf]
  %v2462 = vld [vmem:[%s3 + $0xac] sm:$0xf]
  %v2463 = vld [vmem:[%s3 + $0xb0] sm:$0xf]
  %v2464 = vld [vmem:[%s3 + $0xb4] sm:$0xf]
  %v2465 = vld [vmem:[%s3 + $0xb8] sm:$0xf]
  %v2466 = vld [vmem:[%s3 + $0xbc] sm:$0xf]
  %v2467 = vld [vmem:[%s3 + $0xc0] sm:$0xf]
  %v2468 = vld [vmem:[%s3 + $0xc4] sm:$0xf]
  %v2469 = vld [vmem:[%s3 + $0xc8] sm:$0xf]
  %v2470 = vld [vmem:[%s3 + $0xcc] sm:$0xf]
  %v2471 = vld [vmem:[%s3 + $0xd0] sm:$0xf]
  %v2472 = vld [vmem:[%s3 + $0xd4] sm:$0xf]
  %v2473 = vld [vmem:[%s3 + $0xd8] sm:$0xf]
  %v2474 = vld [vmem:[%s3 + $0xdc] sm:$0xf]
  %v2475 = vld [vmem:[%s3 + $0xe0] sm:$0xf]
  %v2476 = vld [vmem:[%s3 + $0xe4] sm:$0xf]
  %v2477 = vld [vmem:[%s3 + $0xe8] sm:$0xf]
  %v2478 = vld [vmem:[%s3 + $0xec] sm:$0xf]
  %v2479 = vld [vmem:[%s3 + $0xf0] sm:$0xf]
  %v2480 = vld [vmem:[%s3 + $0xf4] sm:$0xf]
  %v2481 = vld [vmem:[%s3 + $0xf8] sm:$0xf]
  %v2482 = vld [vmem:[%s3 + $0xfc] sm:$0xf]
  %v2483 = vld [vmem:[%s4] sm:$0x1]
  %v2485 = vlaneseq
  %v2486 = vshrl.u32 %v2485, 7
  %v2487 = vsub.s32 0, %v2486
  %v2488 = vrot.slane %v2483, %v2487
  %v2554 = vunpack.c.l.b16 %v2419
  %v2555 = vunpack.c.l.b16 %v2420
  %v2556 = vunpack.c.l.b16 %v2421
  %v2557 = vunpack.c.l.b16 %v2422
  %v2558 = vunpack.c.l.b16 %v2423
  %v2559 = vunpack.c.l.b16 %v2424
  %v2560 = vunpack.c.l.b16 %v2425
  %v2561 = vunpack.c.l.b16 %v2426
  %v2562 = vunpack.c.l.b16 %v2427
  %v2563 = vunpack.c.l.b16 %v2428
  %v2564 = vunpack.c.l.b16 %v2429
  %v2565 = vunpack.c.l.b16 %v2430
  %v2566 = vunpack.c.l.b16 %v2431
  %v2567 = vunpack.c.l.b16 %v2432
  %v2568 = vunpack.c.l.b16 %v2433
  %v2569 = vunpack.c.l.b16 %v2434
  %v2570 = vunpack.c.l.b16 %v2435
  %v2571 = vunpack.c.l.b16 %v2436
  %v2572 = vunpack.c.l.b16 %v2437
  %v2573 = vunpack.c.l.b16 %v2438
  %v2574 = vunpack.c.l.b16 %v2439
  %v2575 = vunpack.c.l.b16 %v2440
  %v2576 = vunpack.c.l.b16 %v2441
  %v2577 = vunpack.c.l.b16 %v2442
  %v2578 = vunpack.c.l.b16 %v2443
  %v2579 = vunpack.c.l.b16 %v2444
  %v2580 = vunpack.c.l.b16 %v2445
  %v2581 = vunpack.c.l.b16 %v2446
  %v2582 = vunpack.c.l.b16 %v2447
  %v2583 = vunpack.c.l.b16 %v2448
  %v2584 = vunpack.c.l.b16 %v2449
  %v2585 = vunpack.c.l.b16 %v2450
  %v2586 = vunpack.c.l.b16 %v2451
  %v2587 = vunpack.c.l.b16 %v2452
  %v2588 = vunpack.c.l.b16 %v2453
  %v2589 = vunpack.c.l.b16 %v2454
  %v2590 = vunpack.c.l.b16 %v2455
  %v2591 = vunpack.c.l.b16 %v2456
  %v2592 = vunpack.c.l.b16 %v2457
  %v2593 = vunpack.c.l.b16 %v2458
  %v2594 = vunpack.c.l.b16 %v2459
  %v2595 = vunpack.c.l.b16 %v2460
  %v2596 = vunpack.c.l.b16 %v2461
  %v2597 = vunpack.c.l.b16 %v2462
  %v2598 = vunpack.c.l.b16 %v2463
  %v2599 = vunpack.c.l.b16 %v2464
  %v2600 = vunpack.c.l.b16 %v2465
  %v2601 = vunpack.c.l.b16 %v2466
  %v2602 = vunpack.c.l.b16 %v2467
  %v2603 = vunpack.c.l.b16 %v2468
  %v2604 = vunpack.c.l.b16 %v2469
  %v2605 = vunpack.c.l.b16 %v2470
  %v2606 = vunpack.c.l.b16 %v2471
  %v2607 = vunpack.c.l.b16 %v2472
  %v2608 = vunpack.c.l.b16 %v2473
  %v2609 = vunpack.c.l.b16 %v2474
  %v2610 = vunpack.c.l.b16 %v2475
  %v2611 = vunpack.c.l.b16 %v2476
  %v2612 = vunpack.c.l.b16 %v2477
  %v2613 = vunpack.c.l.b16 %v2478
  %v2614 = vunpack.c.l.b16 %v2479
  %v2615 = vunpack.c.l.b16 %v2480
  %v2616 = vunpack.c.l.b16 %v2481
  %v2617 = vunpack.c.l.b16 %v2482
  %v2618 = vpack.c.b16 %v2555, %v2554
  %v2619 = vpack.c.b16 %v2557, %v2556
  %v2620 = vpack.c.b16 %v2559, %v2558
  %v2621 = vpack.c.b16 %v2561, %v2560
  %v2622 = vpack.c.b16 %v2563, %v2562
  %v2623 = vpack.c.b16 %v2565, %v2564
  %v2624 = vpack.c.b16 %v2567, %v2566
  %v2625 = vpack.c.b16 %v2569, %v2568
  %v2626 = vpack.c.b16 %v2571, %v2570
  %v2627 = vpack.c.b16 %v2573, %v2572
  %v2628 = vpack.c.b16 %v2575, %v2574
  %v2629 = vpack.c.b16 %v2577, %v2576
  %v2630 = vpack.c.b16 %v2579, %v2578
  %v2631 = vpack.c.b16 %v2581, %v2580
  %v2632 = vpack.c.b16 %v2583, %v2582
  %v2633 = vpack.c.b16 %v2585, %v2584
  %v2634 = vpack.c.b16 %v2587, %v2586
  %v2635 = vpack.c.b16 %v2589, %v2588
  %v2636 = vpack.c.b16 %v2591, %v2590
  %v2637 = vpack.c.b16 %v2593, %v2592
  %v2638 = vpack.c.b16 %v2595, %v2594
  %v2639 = vpack.c.b16 %v2597, %v2596
  %v2640 = vpack.c.b16 %v2599, %v2598
  %v2641 = vpack.c.b16 %v2601, %v2600
  %v2642 = vpack.c.b16 %v2603, %v2602
  %v2643 = vpack.c.b16 %v2605, %v2604
  %v2644 = vpack.c.b16 %v2607, %v2606
  %v2645 = vpack.c.b16 %v2609, %v2608
  %v2646 = vpack.c.b16 %v2611, %v2610
  %v2647 = vpack.c.b16 %v2613, %v2612
  %v2648 = vpack.c.b16 %v2615, %v2614
  %v2649 = vpack.c.b16 %v2617, %v2616
  %2682 = vmatprep.subr.bf16.mxu0 0
  %2683 = vmatpush1.bf16.msra.mxu0 %v2618
  %2684 = vmatprep.subr.bf16.mxu0 0
  %2685 = vmatpush1.bf16.msra.mxu0 %v2619
  %2686 = vmatprep.subr.bf16.mxu0 0
  %2687 = vmatpush1.bf16.msra.mxu0 %v2620
  %2688 = vmatprep.subr.bf16.mxu0 0
  %2689 = vmatpush1.bf16.msra.mxu0 %v2621
  %2690 = vmatprep.subr.bf16.mxu0 0
  %2691 = vmatpush1.bf16.msra.mxu0 %v2622
  %2692 = vmatprep.subr.bf16.mxu0 0
  %2693 = vmatpush1.bf16.msra.mxu0 %v2623
  %2694 = vmatprep.subr.bf16.mxu0 0
  %2695 = vmatpush1.bf16.msra.mxu0 %v2624
  %2696 = vmatprep.subr.bf16.mxu0 0
  %2697 = vmatpush1.bf16.msra.mxu0 %v2625
  %2698 = vmatprep.subr.bf16.mxu0 0
  %2699 = vmatpush1.bf16.msra.mxu0 %v2626
  %2700 = vmatprep.subr.bf16.mxu0 0
  %2701 = vmatpush1.bf16.msra.mxu0 %v2627
  %2702 = vmatprep.subr.bf16.mxu0 0
  %2703 = vmatpush1.bf16.msra.mxu0 %v2628
  %2704 = vmatprep.subr.bf16.mxu0 0
  %2705 = vmatpush1.bf16.msra.mxu0 %v2629
  %2706 = vmatprep.subr.bf16.mxu0 0
  %2707 = vmatpush1.bf16.msra.mxu0 %v2630
  %2708 = vmatprep.subr.bf16.mxu0 0
  %2709 = vmatpush1.bf16.msra.mxu0 %v2631
  %2710 = vmatprep.subr.bf16.mxu0 0
  %2711 = vmatpush1.bf16.msra.mxu0 %v2632
  %2712 = vmatprep.subr.bf16.mxu0 0
  %2713 = vmatpush1.bf16.msra.mxu0 %v2633
  %2714 = vmatprep.mubr.bf16.mxu0 %v2416
  %2715 = vmatmul.mubr.bf16.gmra.mrb[0].mxu0 %v2415
  %v2716 = vpop.f32.mrb[0].mxu0
  %v2717 = vadd.f32 %v2488, %v2716
  %v2718 = vpop.f32.mrb[0].mxu0
  %v2719 = vpop.f32.mrb[0].mxu0
  %v2720 = vpop.f32.mrb[0].mxu0
  %2721 = vdwg.mxu0
  %2722 = vmatprep.subr.bf16.mxu0 0
  %2723 = vmatpush1.bf16.msra.mxu0 %v2634
  %2724 = vmatprep.subr.bf16.mxu0 0
  %2725 = vmatpush1.bf16.msra.mxu0 %v2635
  %2726 = vmatprep.subr.bf16.mxu0 0
  %2727 = vmatpush1.bf16.msra.mxu0 %v2636
  %2728 = vmatprep.subr.bf16.mxu0 0
  %2729 = vmatpush1.bf16.msra.mxu0 %v2637
  %2730 = vmatprep.subr.bf16.mxu0 0
  %2731 = vmatpush1.bf16.msra.mxu0 %v2638
  %2732 = vmatprep.subr.bf16.mxu0 0
  %2733 = vmatpush1.bf16.msra.mxu0 %v2639
  %2734 = vmatprep.subr.bf16.mxu0 0
  %2735 = vmatpush1.bf16.msra.mxu0 %v2640
  %2736 = vmatprep.subr.bf16.mxu0 0
  %2737 = vmatpush1.bf16.msra.mxu0 %v2641
  %2738 = vmatprep.subr.bf16.mxu0 0
  %2739 = vmatpush1.bf16.msra.mxu0 %v2642
  %2740 = vmatprep.subr.bf16.mxu0 0
  %2741 = vmatpush1.bf16.msra.mxu0 %v2643
  %2742 = vmatprep.subr.bf16.mxu0 0
  %2743 = vmatpush1.bf16.msra.mxu0 %v2644
  %2744 = vmatprep.subr.bf16.mxu0 0
  %2745 = vmatpush1.bf16.msra.mxu0 %v2645
  %2746 = vmatprep.subr.bf16.mxu0 0
  %2747 = vmatpush1.bf16.msra.mxu0 %v2646
  %2748 = vmatprep.subr.bf16.mxu0 0
  %2749 = vmatpush1.bf16.msra.mxu0 %v2647
  %2750 = vmatprep.subr.bf16.mxu0 0
  %2751 = vmatpush1.bf16.msra.mxu0 %v2648
  %2752 = vmatprep.subr.bf16.mxu0 0
  %2753 = vmatpush1.bf16.msra.mxu0 %v2649
  %2754 = vmatprep.mubr.bf16.mxu0 %v2418
  %2755 = vmatmul.mubr.bf16.gmra.mrb[0].mxu0 %v2417
  %v2756 = vpop.f32.mrb[0].mxu0
  %v2757 = vadd.f32 %v2717, %v2756
  %v2758 = vpop.f32.mrb[0].mxu0
  %v2759 = vpop.f32.mrb[0].mxu0
  %v2760 = vpop.f32.mrb[0].mxu0
  %2761 = vdwg.mxu0
  %v2763 = vrot.slane %v2757, 2
  %v2765 = vmul.f32 %v2757, %v2763
  %v2766 = vld [vmem:[%s5] sm:$0x1]
  %v2768 = vlaneseq
  %v2769 = vshrl.u32 %v2768, 7
  %v2770 = vsub.s32 0, %v2769
  %v2771 = vrot.slane %v2766, %v2770
  %v2773 = vmul.f32 %v2765, %v2771
  %vm2774 = vcmask 1041408
  %v2775 = vsel %vm2774, %v2773, 0.0
  %2776 = vadd.xlane.f32.xlu0 %v2775
  %v2777 = vpop.xlane.xlu0 %2776
  %v2778 = vld [vmem:[#allocation2] sm:$0x1]
  %v2780 = vlaneseq
  %v2781 = vshrl.u32 %v2780, 7
  %v2782 = vsub.s32 0, %v2781
  %v2783 = vrot.slane %v2778, %v2782
  %v2785 = vadd.f32 %v2777, %v2783
  %v2786 = vxor.u32 %v2785, 2147483648
  %v2787 = vmul.f32 %v2786, 1.442695
  %v2788 = vpow.pop %v2787
  %v2789 = vadd.f32 %v2788, 1.0
  %v2790 = vrcp.pop %v2789
  %v2791 = vmul.f32 1.0, %v2790
  %vm2792 = vcmask 1024
  %2793 = vst.msk [vmem:[%s7] sm:$0x3] %vm2792, %v2791
  // Predicated region
  $region30: #{siamese_forward.3} parent=0 // pred_check
    _
  $region31: #{siamese_forward.3} parent=0 // pred_check_branch
    %2795 = sbr.rel (0) target = $region33
  $region32: #{siamese_forward.3} parent=0 // pred_region
    _
  $region33: #{siamese_forward.3} parent=0 // pred_fallthru
    _
  // Predicated region
  $region34: #{siamese_forward.3} parent=0 // pred_check
    _
  $region35: #{siamese_forward.3} parent=0 // pred_check_branch
    %2797 = sbr.rel (0) target = $region37
  $region36: #{siamese_forward.3} parent=0 // pred_region
    _
  $region37: #{siamese_forward.3} parent=0 // pred_fallthru
    _

</llo_original>
